<compile_context>
chip_gen: v5e
topology: v5e:2x2
jax: 0.10.0
libtpu: 0.0.40
codegen_flags: <defaults>
</compile_context>

<pallas_src>
import jax
import jax.numpy as jnp
from jax.experimental import pallas as pl
from jax.experimental.pallas import tpu as pltpu

# Original PyTorch layer dims: (in_features, out_features)
LAYER_DIMS = [(784, 520), (520, 320), (320, 240), (240, 120), (120, 10)]


def _round_up(x, m):
    return ((x + m - 1) // m) * m


# Lane-dense (multiple-of-128) layer widths.
PADDED_OUT = [_round_up(o, 128) for _, o in LAYER_DIMS]   # [640, 384, 256, 128, 128]
PADDED_IN = [LAYER_DIMS[0][0]] + PADDED_OUT[:-1]          # [784, 640, 384, 256, 128]

TM_MAX = 512  # batch-tile upper bound (perf review: sweep 256-1024; 512 chosen)


def _mlp_kernel(x_ref,
                w1_ref, b1_ref,
                w2_ref, b2_ref,
                w3_ref, b3_ref,
                w4_ref, b4_ref,
                w5_ref, b5_ref,
                o_ref):
    """Fused 5-layer MLP: bf16 MXU matmuls, f32 accumulate/bias/ReLU."""
    h = x_ref[...]  # bf16 (TM, 784)

    h = jnp.dot(h, w1_ref[...], preferred_element_type=jnp.float32) + b1_ref[...]
    h = jnp.maximum(h, 0.0).astype(jnp.bfloat16)

    h = jnp.dot(h, w2_ref[...], preferred_element_type=jnp.float32) + b2_ref[...]
    h = jnp.maximum(h, 0.0).astype(jnp.bfloat16)

    h = jnp.dot(h, w3_ref[...], preferred_element_type=jnp.float32) + b3_ref[...]
    h = jnp.maximum(h, 0.0).astype(jnp.bfloat16)

    h = jnp.dot(h, w4_ref[...], preferred_element_type=jnp.float32) + b4_ref[...]
    h = jnp.maximum(h, 0.0).astype(jnp.bfloat16)

    h = jnp.dot(h, w5_ref[...], preferred_element_type=jnp.float32) + b5_ref[...]
    o_ref[...] = h.astype(o_ref.dtype)  # bf16 store, lane-dense 128-wide tile


def init_params(key):
    """PyTorch-style uniform init; weights stored transposed (in, out), f32."""
    params = []
    for (fan_in, fan_out) in LAYER_DIMS:
        key, kw, kb = jax.random.split(key, 3)
        bound = 1.0 / jnp.sqrt(fan_in)
        w = jax.random.uniform(kw, (fan_in, fan_out), jnp.float32, -bound, bound)
        b = jax.random.uniform(kb, (fan_out,), jnp.float32, -bound, bound)
        params.append((w, b))
    return params


def _pad_params(params):
    """Zero-pad weights/biases to lane-dense shapes; cast weights to bf16."""
    padded = []
    for li, (w, b) in enumerate(params):
        in_p, out_p = PADDED_IN[li], PADDED_OUT[li]
        fan_in, fan_out = w.shape
        wp = jnp.zeros((in_p, out_p), jnp.float32).at[:fan_in, :fan_out].set(w)
        bp = jnp.zeros((1, out_p), jnp.float32).at[0, :fan_out].set(b)
        padded.append((wp.astype(jnp.bfloat16), bp))  # biases kept f32
    return padded


def _choose_tile(n):
    """Pick batch tile TM and padded batch n_pad.

    * Large batches (>= 2*TM_MAX): TM = TM_MAX (overhead amortized, MXU full).
    * Medium batches [256, 2*TM_MAX): split into exactly 2 grid steps so both
      v7x TensorCores get work under the "parallel" batch axis.
    * Tiny batches: single tile, padded only to a sublane multiple (8).
    """
    n8 = _round_up(max(n, 8), 8)
    if n8 >= 2 * TM_MAX:
        tm = TM_MAX
    elif n8 >= 256:
        tm = _round_up((n8 + 1) // 2, 8)
    else:
        tm = n8
    n_pad = _round_up(n8, tm)
    return tm, n_pad


def net_forward(x_nchw, params):
    """Forward pass of `Net`.

    x_nchw: (N, 1, 28, 28) float32 (any NCHW whose C*H*W == 784).
    Returns: (N, 10) float32 logits.
    """
    n = x_nchw.shape[0]
    x = x_nchw.reshape(n, 784).astype(jnp.bfloat16)  # == torch .view(-1, 784)

    tm, n_pad = _choose_tile(n)
    if n_pad != n:
        x = jnp.pad(x, ((0, n_pad - n), (0, 0)))

    padded = _pad_params(params)
    flat_params = []
    for w, b in padded:
        flat_params.extend([w, b])

    # x tile moves with the grid; weights/biases have constant index_maps so
    # they stay resident in VMEM across all grid steps.
    in_specs = [pl.BlockSpec((tm, LAYER_DIMS[0][0]), lambda i: (i, 0))]
    for li in range(len(LAYER_DIMS)):
        in_specs.append(
            pl.BlockSpec((PADDED_IN[li], PADDED_OUT[li]), lambda i: (0, 0)))
        in_specs.append(
            pl.BlockSpec((1, PADDED_OUT[li]), lambda i: (0, 0)))

    grid = (pl.cdiv(n_pad, tm),)

    out = pl.pallas_call(
        _mlp_kernel,
        out_shape=jax.ShapeDtypeStruct((n_pad, PADDED_OUT[-1]), jnp.bfloat16),
        grid_spec=pltpu.PrefetchScalarGridSpec(
            num_scalar_prefetch=0,
            grid=grid,
            in_specs=in_specs,
            out_specs=pl.BlockSpec((tm, PADDED_OUT[-1]), lambda i: (i, 0)),
        ),
        compiler_params=pltpu.CompilerParams(
            dimension_semantics=("parallel",),   # megacore sharding on v7x
            vmem_limit_bytes=32 << 20,           # <= v7x-safe 48 MiB cap
        ),
    )(x, *flat_params)

    return out[:n, :LAYER_DIMS[-1][1]].astype(jnp.float32)


if __name__ == "__main__":
    key = jax.random.PRNGKey(0)
    key, k_small, k_big = jax.random.split(key, 3)

    params = init_params(key)

    def ref_forward(x_nchw):
        # Reference forward in plain JAX with the same bf16-weight / f32-accum
        # arithmetic the kernel uses.
        nb = x_nchw.shape[0]
        h = x_nchw.reshape(nb, 784).astype(jnp.bfloat16)
        out = None
        for i, (w, b) in enumerate(params):
            z = jnp.dot(h, w.astype(jnp.bfloat16),
                        preferred_element_type=jnp.float32) + b
            if i < len(params) - 1:
                h = jnp.maximum(z, 0.0).astype(jnp.bfloat16)
            else:
                out = z
        return out

    # --- Test 1: tiny batch (single grid step) ------------------------------
    batch_small = 8
    x_small = jax.random.normal(k_small, (batch_small, 1, 28, 28), jnp.float32)
    logits_small = net_forward(x_small, params)
    jax.block_until_ready(logits_small)
    assert logits_small.shape == (batch_small, 10)
    ref_small = ref_forward(x_small)
    assert jnp.allclose(logits_small, ref_small, atol=2e-2, rtol=2e-2), (
        float(jnp.max(jnp.abs(logits_small - ref_small))))

    # --- Test 2: batch > 2*TM_MAX (multi-step grid, batch padding, megacore) -
    batch_big = 1100
    x_big = jax.random.normal(k_big, (batch_big, 1, 28, 28), jnp.float32)
    logits_big = net_forward(x_big, params)
    jax.block_until_ready(logits_big)
    assert logits_big.shape == (batch_big, 10)
    ref_big = ref_forward(x_big)
    assert jnp.allclose(logits_big, ref_big, atol=2e-2, rtol=2e-2), (
        float(jnp.max(jnp.abs(logits_big - ref_big))))

    print("KERNEL_OK")
</pallas_src>

<mosaic_0001>
module attributes {stable_mosaic.version = 11 : i64} {
  func.func @_mlp_kernel(%arg0: i32, %arg1: memref<8x784xbf16, #tpu.memory_space<vmem>>, %arg2: memref<784x640xbf16, #tpu.memory_space<vmem>>, %arg3: memref<1x640xf32, #tpu.memory_space<vmem>>, %arg4: memref<640x384xbf16, #tpu.memory_space<vmem>>, %arg5: memref<1x384xf32, #tpu.memory_space<vmem>>, %arg6: memref<384x256xbf16, #tpu.memory_space<vmem>>, %arg7: memref<1x256xf32, #tpu.memory_space<vmem>>, %arg8: memref<256x128xbf16, #tpu.memory_space<vmem>>, %arg9: memref<1x128xf32, #tpu.memory_space<vmem>>, %arg10: memref<128x128xbf16, #tpu.memory_space<vmem>>, %arg11: memref<1x128xf32, #tpu.memory_space<vmem>>, %arg12: memref<8x128xbf16, #tpu.memory_space<vmem>>) attributes {dimension_semantics = [#tpu.dimension_semantics<parallel>], iteration_bounds = array<i64: 1>, scalar_prefetch = 0 : i64, scratch_operands = 0 : i64, tpu.core_type = #tpu.core_type<tc>, window_params = [{transform_indices = @transform_0, window_bounds = array<i64: 8, 784>}, {pipeline_mode = #tpu.pipeline_mode<synchronous>, transform_indices = @transform_1, window_bounds = array<i64: 784, 640>}, {pipeline_mode = #tpu.pipeline_mode<synchronous>, transform_indices = @transform_2, window_bounds = array<i64: 1, 640>}, {pipeline_mode = #tpu.pipeline_mode<synchronous>, transform_indices = @transform_3, window_bounds = array<i64: 640, 384>}, {pipeline_mode = #tpu.pipeline_mode<synchronous>, transform_indices = @transform_4, window_bounds = array<i64: 1, 384>}, {pipeline_mode = #tpu.pipeline_mode<synchronous>, transform_indices = @transform_5, window_bounds = array<i64: 384, 256>}, {pipeline_mode = #tpu.pipeline_mode<synchronous>, transform_indices = @transform_6, window_bounds = array<i64: 1, 256>}, {pipeline_mode = #tpu.pipeline_mode<synchronous>, transform_indices = @transform_7, window_bounds = array<i64: 256, 128>}, {pipeline_mode = #tpu.pipeline_mode<synchronous>, transform_indices = @transform_8, window_bounds = array<i64: 1, 128>}, {pipeline_mode = #tpu.pipeline_mode<synchronous>, transform_indices = @transform_9, window_bounds = array<i64: 128, 128>}, {pipeline_mode = #tpu.pipeline_mode<synchronous>, transform_indices = @transform_10, window_bounds = array<i64: 1, 128>}, {transform_indices = @transform_11, window_bounds = array<i64: 8, 128>}]} {
    %c0 = arith.constant 0 : index
    %c0_0 = arith.constant 0 : index
    %0 = vector.load %arg1[%c0, %c0_0] : memref<8x784xbf16, #tpu.memory_space<vmem>>, vector<8x784xbf16>
    %c0_1 = arith.constant 0 : index
    %c0_2 = arith.constant 0 : index
    %1 = vector.load %arg2[%c0_1, %c0_2] : memref<784x640xbf16, #tpu.memory_space<vmem>>, vector<784x640xbf16>
    %cst = arith.constant dense<0.000000e+00> : vector<8x640xf32>
    %2 = tpu.matmul %0, %1, %cst {dimension_numbers = #tpu.dot_dimension_numbers<[1], [0], [0], [1], [0, 0, 1, 1], [], []>} : vector<8x784xbf16>, vector<784x640xbf16>, vector<8x640xf32> -> vector<8x640xf32>
    %c0_3 = arith.constant 0 : index
    %c0_4 = arith.constant 0 : index
    %3 = vector.load %arg3[%c0_3, %c0_4] : memref<1x640xf32, #tpu.memory_space<vmem>>, vector<1x640xf32>
    %4 = vector.broadcast %3 : vector<1x640xf32> to vector<8x640xf32>
    %5 = arith.addf %2, %4 : vector<8x640xf32>
    %cst_5 = arith.constant 0.000000e+00 : f32
    %6 = vector.broadcast %cst_5 : f32 to vector<8x640xf32>
    %7 = arith.maximumf %5, %6 : vector<8x640xf32>
    %8 = arith.truncf %7 : vector<8x640xf32> to vector<8x640xbf16>
    %c0_6 = arith.constant 0 : index
    %c0_7 = arith.constant 0 : index
    %9 = vector.load %arg4[%c0_6, %c0_7] : memref<640x384xbf16, #tpu.memory_space<vmem>>, vector<640x384xbf16>
    %cst_8 = arith.constant dense<0.000000e+00> : vector<8x384xf32>
    %10 = tpu.matmul %8, %9, %cst_8 {dimension_numbers = #tpu.dot_dimension_numbers<[1], [0], [0], [1], [0, 0, 1, 1], [], []>} : vector<8x640xbf16>, vector<640x384xbf16>, vector<8x384xf32> -> vector<8x384xf32>
    %c0_9 = arith.constant 0 : index
    %c0_10 = arith.constant 0 : index
    %11 = vector.load %arg5[%c0_9, %c0_10] : memref<1x384xf32, #tpu.memory_space<vmem>>, vector<1x384xf32>
    %12 = vector.broadcast %11 : vector<1x384xf32> to vector<8x384xf32>
    %13 = arith.addf %10, %12 : vector<8x384xf32>
    %cst_11 = arith.constant 0.000000e+00 : f32
    %14 = vector.broadcast %cst_11 : f32 to vector<8x384xf32>
    %15 = arith.maximumf %13, %14 : vector<8x384xf32>
    %16 = arith.truncf %15 : vector<8x384xf32> to vector<8x384xbf16>
    %c0_12 = arith.constant 0 : index
    %c0_13 = arith.constant 0 : index
    %17 = vector.load %arg6[%c0_12, %c0_13] : memref<384x256xbf16, #tpu.memory_space<vmem>>, vector<384x256xbf16>
    %cst_14 = arith.constant dense<0.000000e+00> : vector<8x256xf32>
    %18 = tpu.matmul %16, %17, %cst_14 {dimension_numbers = #tpu.dot_dimension_numbers<[1], [0], [0], [1], [0, 0, 1, 1], [], []>} : vector<8x384xbf16>, vector<384x256xbf16>, vector<8x256xf32> -> vector<8x256xf32>
    %c0_15 = arith.constant 0 : index
    %c0_16 = arith.constant 0 : index
    %19 = vector.load %arg7[%c0_15, %c0_16] : memref<1x256xf32, #tpu.memory_space<vmem>>, vector<1x256xf32>
    %20 = vector.broadcast %19 : vector<1x256xf32> to vector<8x256xf32>
    %21 = arith.addf %18, %20 : vector<8x256xf32>
    %cst_17 = arith.constant 0.000000e+00 : f32
    %22 = vector.broadcast %cst_17 : f32 to vector<8x256xf32>
    %23 = arith.maximumf %21, %22 : vector<8x256xf32>
    %24 = arith.truncf %23 : vector<8x256xf32> to vector<8x256xbf16>
    %c0_18 = arith.constant 0 : index
    %c0_19 = arith.constant 0 : index
    %25 = vector.load %arg8[%c0_18, %c0_19] : memref<256x128xbf16, #tpu.memory_space<vmem>>, vector<256x128xbf16>
    %cst_20 = arith.constant dense<0.000000e+00> : vector<8x128xf32>
    %26 = tpu.matmul %24, %25, %cst_20 {dimension_numbers = #tpu.dot_dimension_numbers<[1], [0], [0], [1], [0, 0, 1, 1], [], []>} : vector<8x256xbf16>, vector<256x128xbf16>, vector<8x128xf32> -> vector<8x128xf32>
    %c0_21 = arith.constant 0 : index
    %c0_22 = arith.constant 0 : index
    %27 = vector.load %arg9[%c0_21, %c0_22] : memref<1x128xf32, #tpu.memory_space<vmem>>, vector<1x128xf32>
    %28 = vector.broadcast %27 : vector<1x128xf32> to vector<8x128xf32>
    %29 = arith.addf %26, %28 : vector<8x128xf32>
    %cst_23 = arith.constant 0.000000e+00 : f32
    %30 = vector.broadcast %cst_23 : f32 to vector<8x128xf32>
    %31 = arith.maximumf %29, %30 : vector<8x128xf32>
    %32 = arith.truncf %31 : vector<8x128xf32> to vector<8x128xbf16>
    %c0_24 = arith.constant 0 : index
    %c0_25 = arith.constant 0 : index
    %33 = vector.load %arg10[%c0_24, %c0_25] : memref<128x128xbf16, #tpu.memory_space<vmem>>, vector<128x128xbf16>
    %cst_26 = arith.constant dense<0.000000e+00> : vector<8x128xf32>
    %34 = tpu.matmul %32, %33, %cst_26 {dimension_numbers = #tpu.dot_dimension_numbers<[1], [0], [0], [1], [0, 0, 1, 1], [], []>} : vector<8x128xbf16>, vector<128x128xbf16>, vector<8x128xf32> -> vector<8x128xf32>
    %c0_27 = arith.constant 0 : index
    %c0_28 = arith.constant 0 : index
    %35 = vector.load %arg11[%c0_27, %c0_28] : memref<1x128xf32, #tpu.memory_space<vmem>>, vector<1x128xf32>
    %36 = vector.broadcast %35 : vector<1x128xf32> to vector<8x128xf32>
    %37 = arith.addf %34, %36 : vector<8x128xf32>
    %38 = arith.truncf %37 : vector<8x128xf32> to vector<8x128xbf16>
    %c0_29 = arith.constant 0 : index
    %c0_30 = arith.constant 0 : index
    %39 = vector.load %arg12[%c0_29, %c0_30] : memref<8x128xbf16, #tpu.memory_space<vmem>>, vector<8x128xbf16>
    tpu.vector_store %arg12[%c0_29, %c0_30], %38 {strides = array<i32>} : memref<8x128xbf16, #tpu.memory_space<vmem>>, vector<8x128xbf16>,
    return
  }
  func.func @transform_0(%arg0: i32) -> (i32, i32) {
    %c0_i32 = arith.constant 0 : i32
    %c0_i32_0 = arith.constant 0 : i32
    return %arg0, %c0_i32 : i32, i32
  }
  func.func @transform_1(%arg0: i32) -> (i32, i32) {
    %c0_i32 = arith.constant 0 : i32
    %c0_i32_0 = arith.constant 0 : i32
    %c0_i32_1 = arith.constant 0 : i32
    return %c0_i32, %c0_i32_0 : i32, i32
  }
  func.func @transform_2(%arg0: i32) -> (i32, i32) {
    %c0_i32 = arith.constant 0 : i32
    %c0_i32_0 = arith.constant 0 : i32
    %c0_i32_1 = arith.constant 0 : i32
    return %c0_i32, %c0_i32_0 : i32, i32
  }
  func.func @transform_3(%arg0: i32) -> (i32, i32) {
    %c0_i32 = arith.constant 0 : i32
    %c0_i32_0 = arith.constant 0 : i32
    %c0_i32_1 = arith.constant 0 : i32
    return %c0_i32, %c0_i32_0 : i32, i32
  }
  func.func @transform_4(%arg0: i32) -> (i32, i32) {
    %c0_i32 = arith.constant 0 : i32
    %c0_i32_0 = arith.constant 0 : i32
    %c0_i32_1 = arith.constant 0 : i32
    return %c0_i32, %c0_i32_0 : i32, i32
  }
  func.func @transform_5(%arg0: i32) -> (i32, i32) {
    %c0_i32 = arith.constant 0 : i32
    %c0_i32_0 = arith.constant 0 : i32
    %c0_i32_1 = arith.constant 0 : i32
    return %c0_i32, %c0_i32_0 : i32, i32
  }
  func.func @transform_6(%arg0: i32) -> (i32, i32) {
    %c0_i32 = arith.constant 0 : i32
    %c0_i32_0 = arith.constant 0 : i32
    %c0_i32_1 = arith.constant 0 : i32
    return %c0_i32, %c0_i32_0 : i32, i32
  }
  func.func @transform_7(%arg0: i32) -> (i32, i32) {
    %c0_i32 = arith.constant 0 : i32
    %c0_i32_0 = arith.constant 0 : i32
    %c0_i32_1 = arith.constant 0 : i32
    return %c0_i32, %c0_i32_0 : i32, i32
  }
  func.func @transform_8(%arg0: i32) -> (i32, i32) {
    %c0_i32 = arith.constant 0 : i32
    %c0_i32_0 = arith.constant 0 : i32
    %c0_i32_1 = arith.constant 0 : i32
    return %c0_i32, %c0_i32_0 : i32, i32
  }
  func.func @transform_9(%arg0: i32) -> (i32, i32) {
    %c0_i32 = arith.constant 0 : i32
    %c0_i32_0 = arith.constant 0 : i32
    %c0_i32_1 = arith.constant 0 : i32
    return %c0_i32, %c0_i32_0 : i32, i32
  }
  func.func @transform_10(%arg0: i32) -> (i32, i32) {
    %c0_i32 = arith.constant 0 : i32
    %c0_i32_0 = arith.constant 0 : i32
    %c0_i32_1 = arith.constant 0 : i32
    return %c0_i32, %c0_i32_0 : i32, i32
  }
  func.func @transform_11(%arg0: i32) -> (i32, i32) {
    %c0_i32 = arith.constant 0 : i32
    %c0_i32_0 = arith.constant 0 : i32
    return %arg0, %c0_i32 : i32, i32
  }
}

</mosaic_0001>

<llo_original>
// kernel: tpu_custom_call.1
$region0: #{tpu_custom_call.1}
  #allocation0 [shape = 'u32[]', space=smem, size = 0x4, offset = 0x4, fixed_abs, tag = 'smem constant byte address 0x4 - core index']
  #allocation1 [shape = 'u32[72,128]{1,0:T(1,128)}', space=vmem, size = 0x9000, scoped, tag = 'internal scratch']
  %s0 = inlined_call_operand.hbm [shape: bf16[8,784], index: 0, kind: input, shape index: {}]
  %s1 = inlined_call_operand.hbm [shape: bf16[784,640], index: 1, kind: input, shape index: {}]
  %s2 = inlined_call_operand.hbm [shape: f32[1,640], index: 2, kind: input, shape index: {}]
  %s3 = inlined_call_operand.hbm [shape: bf16[640,384], index: 3, kind: input, shape index: {}]
  %s4 = inlined_call_operand.vmem [shape: f32[1,384], index: 4, kind: input, shape index: {}]
  %s5 = inlined_call_operand.hbm [shape: bf16[384,256], index: 5, kind: input, shape index: {}]
  %s6 = inlined_call_operand.vmem [shape: f32[1,256], index: 6, kind: input, shape index: {}]
  %s7 = inlined_call_operand.hbm [shape: bf16[256,128], index: 7, kind: input, shape index: {}]
  %s8 = inlined_call_operand.vmem [shape: f32[1,128], index: 8, kind: input, shape index: {}]
  %s9 = inlined_call_operand.hbm [shape: bf16[128,128], index: 9, kind: input, shape index: {}]
  %s10 = inlined_call_operand.vmem [shape: f32[1,128], index: 10, kind: input, shape index: {}]
  %s11 = inlined_call_operand.hbm [shape: bf16[8,128], index: 11, kind: output, shape index: {}]
  %s12 = sld [smem:[#allocation0]]
  $region82: #{tpu_custom_call.1} parent=0
    _
  %s14 = ssub.s32 1, %s12
  %s15 = scalar_select 0, %s14, %s12
  $region1: #{tpu_custom_call.1} parent=0
    #allocation2 [shape = 'u8[14336]{0}', space=vmem, size = 0x3800, scoped, tag = 'input window, operand 0, single buffered']
    #allocation3 [shape = 's32[1]{0}', space=sflag, size = 0x4, scoped, tag = 'scoped memory for tpu_custom_call.1']
    #allocation4 [shape = 's32[1]{0}', space=sflag, size = 0x4, scoped, tag = 'scoped memory for tpu_custom_call.1']
    #allocation5 [shape = 'u8[1003520]{0}', space=vmem, size = 0xf5000, scoped, tag = 'input window, operand 1, single buffered']
    #allocation6 [shape = 's32[1]{0}', space=sflag, size = 0x4, scoped, tag = 'scoped memory for tpu_custom_call.1']
    #allocation7 [shape = 'u8[2560]{0}', space=vmem, size = 0xc00, scoped, tag = 'input window, operand 2, single buffered']
    #allocation8 [shape = 'u8[491520]{0}', space=vmem, size = 0x78000, scoped, tag = 'input window, operand 3, single buffered']
    #allocation9 [shape = 's32[1]{0}', space=sflag, size = 0x4, scoped, tag = 'scoped memory for tpu_custom_call.1']
    #allocation10 [shape = 'u8[196608]{0}', space=vmem, size = 0x30000, scoped, tag = 'input window, operand 5, single buffered']
    #allocation11 [shape = 'u8[65536]{0}', space=vmem, size = 0x10000, scoped, tag = 'input window, operand 7, single buffered']
    #allocation12 [shape = 's32[1]{0}', space=sflag, size = 0x4, scoped, tag = 'scoped memory for tpu_custom_call.1']
    #allocation13 [shape = 'u8[32768]{0}', space=vmem, size = 0x8000, scoped, tag = 'input window, operand 9, single buffered']
    #allocation14 [shape = 'u8[2048]{0}', space=vmem, size = 0x800, scoped, tag = 'output window, operand 0, single buffered']
    %16 = vsyncpa [#allocation3], 0
    %17 = vsyncpa [#allocation6], 0
    %18 = vsyncpa [#allocation9], 0
    %19 = vsyncpa [#allocation12], 0
    %20 = vsyncpa [#allocation4], 0
    // Predicated region
    $region2: #{tpu_custom_call.1} parent=1 // pred_check
      _
    $region3: #{tpu_custom_call.1} parent=1 // pred_check_branch
      %22 = sbr.rel (0) target = $region5
    $region4: #{tpu_custom_call.1} parent=1 // pred_region
      %24 = vsyncadd [#allocation3], 0
      %s26 = sshll.u32 %s0, 4
      %s27 = int_to_ptr.hbm [resolvable:$true] %s26
      %s28 = sshll.u32 [#allocation2], 4
      %s29 = int_to_ptr.vmem [resolvable:$true] %s28
      %31 = dma.hbm_to_vmem [thread:$0]  %s27, 448, %s29, [#allocation3]
    $region5: #{tpu_custom_call.1} parent=1 // pred_fallthru
      _
    // Predicated region
    $region6: #{tpu_custom_call.1} parent=1 // pred_check
      _
    $region7: #{tpu_custom_call.1} parent=1 // pred_check_branch
      %33 = sbr.rel (0) target = $region9
    $region8: #{tpu_custom_call.1} parent=1 // pred_region
      %35 = vsyncadd [#allocation6], 0
      %s36 = sshll.u32 %s1, 4
      %s37 = int_to_ptr.hbm [resolvable:$true] %s36
      %s38 = sshll.u32 [#allocation5], 4
      %s39 = int_to_ptr.vmem [resolvable:$true] %s38
      %44 = dma.hbm_to_vmem [thread:$0]  %s37, 31360, %s39, [#allocation6], 320, 320, 20
    $region9: #{tpu_custom_call.1} parent=1 // pred_fallthru
      _
    // Predicated region
    $region10: #{tpu_custom_call.1} parent=1 // pred_check
      _
    $region11: #{tpu_custom_call.1} parent=1 // pred_check_branch
      %46 = sbr.rel (0) target = $region13
    $region12: #{tpu_custom_call.1} parent=1 // pred_region
      %48 = vsyncadd [#allocation6], 0
      %s50 = sshll.u32 %s2, 4
      %s51 = int_to_ptr.hbm [resolvable:$true] %s50
      %s52 = sshll.u32 [#allocation7], 4
      %s53 = int_to_ptr.vmem [resolvable:$true] %s52
      %55 = dma.hbm_to_vmem [thread:$0]  %s51, 80, %s53, [#allocation6]
    $region13: #{tpu_custom_call.1} parent=1 // pred_fallthru
      _
    // Predicated region
    $region14: #{tpu_custom_call.1} parent=1 // pred_check
      _
    $region15: #{tpu_custom_call.1} parent=1 // pred_check_branch
      %57 = sbr.rel (0) target = $region17
    $region16: #{tpu_custom_call.1} parent=1 // pred_region
      %59 = vsyncadd [#allocation9], 0
      %s60 = sshll.u32 %s3, 4
      %s61 = int_to_ptr.hbm [resolvable:$true] %s60
      %s62 = sshll.u32 [#allocation8], 4
      %s63 = int_to_ptr.vmem [resolvable:$true] %s62
      %68 = dma.hbm_to_vmem [thread:$0]  %s61, 15360, %s63, [#allocation9], 192, 192, 12
    $region17: #{tpu_custom_call.1} parent=1 // pred_fallthru
      _
    // Predicated region
    $region18: #{tpu_custom_call.1} parent=1 // pred_check
      _
    $region19: #{tpu_custom_call.1} parent=1 // pred_check_branch
      %70 = sbr.rel (0) target = $region21
    $region20: #{tpu_custom_call.1} parent=1 // pred_region
      _
    $region21: #{tpu_custom_call.1} parent=1 // pred_fallthru
      _
    // Predicated region
    $region22: #{tpu_custom_call.1} parent=1 // pred_check
      _
    $region23: #{tpu_custom_call.1} parent=1 // pred_check_branch
      %72 = sbr.rel (0) target = $region25
    $region24: #{tpu_custom_call.1} parent=1 // pred_region
      %74 = vsyncadd [#allocation9], 0
      %s75 = sshll.u32 %s5, 4
      %s76 = int_to_ptr.hbm [resolvable:$true] %s75
      %s77 = sshll.u32 [#allocation10], 4
      %s78 = int_to_ptr.vmem [resolvable:$true] %s77
      %83 = dma.hbm_to_vmem [thread:$0]  %s76, 6144, %s78, [#allocation9], 128, 128, 8
    $region25: #{tpu_custom_call.1} parent=1 // pred_fallthru
      _
    // Predicated region
    $region26: #{tpu_custom_call.1} parent=1 // pred_check
      _
    $region27: #{tpu_custom_call.1} parent=1 // pred_check_branch
      %85 = sbr.rel (0) target = $region29
    $region28: #{tpu_custom_call.1} parent=1 // pred_region
      _
    $region29: #{tpu_custom_call.1} parent=1 // pred_fallthru
      _
    // Predicated region
    $region30: #{tpu_custom_call.1} parent=1 // pred_check
      _
    $region31: #{tpu_custom_call.1} parent=1 // pred_check_branch
      %87 = sbr.rel (0) target = $region33
    $region32: #{tpu_custom_call.1} parent=1 // pred_region
      %89 = vsyncadd [#allocation12], 0
      %s90 = sshll.u32 %s7, 4
      %s91 = int_to_ptr.hbm [resolvable:$true] %s90
      %s92 = sshll.u32 [#allocation11], 4
      %s93 = int_to_ptr.vmem [resolvable:$true] %s92
      %98 = dma.hbm_to_vmem [thread:$0]  %s91, 2048, %s93, [#allocation12], 64, 64, 4
    $region33: #{tpu_custom_call.1} parent=1 // pred_fallthru
      _
    // Predicated region
    $region34: #{tpu_custom_call.1} parent=1 // pred_check
      _
    $region35: #{tpu_custom_call.1} parent=1 // pred_check_branch
      %100 = sbr.rel (0) target = $region37
    $region36: #{tpu_custom_call.1} parent=1 // pred_region
      _
    $region37: #{tpu_custom_call.1} parent=1 // pred_fallthru
      _
    // Predicated region
    $region38: #{tpu_custom_call.1} parent=1 // pred_check
      _
    $region39: #{tpu_custom_call.1} parent=1 // pred_check_branch
      %102 = sbr.rel (0) target = $region41
    $region40: #{tpu_custom_call.1} parent=1 // pred_region
      %104 = vsyncadd [#allocation12], 0
      %s105 = sshll.u32 %s9, 4
      %s106 = int_to_ptr.hbm [resolvable:$true] %s105
      %s107 = sshll.u32 [#allocation13], 4
      %s108 = int_to_ptr.vmem [resolvable:$true] %s107
      %113 = dma.hbm_to_vmem [thread:$0]  %s106, 1024, %s108, [#allocation12], 64, 64, 4
    $region41: #{tpu_custom_call.1} parent=1 // pred_fallthru
      _
    // Predicated region
    $region42: #{tpu_custom_call.1} parent=1 // pred_check
      _
    $region43: #{tpu_custom_call.1} parent=1 // pred_check_branch
      %115 = sbr.rel (0) target = $region45
    $region44: #{tpu_custom_call.1} parent=1 // pred_region
      _
    $region45: #{tpu_custom_call.1} parent=1 // pred_fallthru
      _
    // Predicated region
    $region46: #{tpu_custom_call.1} parent=1 // pred_check
      _
    $region47: #{tpu_custom_call.1} parent=1 // pred_check_branch
      %117 = sbr.rel (0) target = $region49
    $region48: #{tpu_custom_call.1} parent=1 // pred_region
      %119 = dma.done [#allocation3], 448
    $region49: #{tpu_custom_call.1} parent=1 // pred_fallthru
      _
    // Predicated region
    $region50: #{tpu_custom_call.1} parent=1 // pred_check
      _
    $region51: #{tpu_custom_call.1} parent=1 // pred_check_branch
      %121 = sbr.rel (0) target = $region53
    $region52: #{tpu_custom_call.1} parent=1 // pred_region
      %123 = dma.done [#allocation6], 31360
    $region53: #{tpu_custom_call.1} parent=1 // pred_fallthru
      _
    // Predicated region
    $region54: #{tpu_custom_call.1} parent=1 // pred_check
      _
    $region55: #{tpu_custom_call.1} parent=1 // pred_check_branch
      %125 = sbr.rel (0) target = $region57
    $region56: #{tpu_custom_call.1} parent=1 // pred_region
      %127 = dma.done [#allocation6], 80
    $region57: #{tpu_custom_call.1} parent=1 // pred_fallthru
      _
    // Predicated region
    $region58: #{tpu_custom_call.1} parent=1 // pred_check
      _
    $region59: #{tpu_custom_call.1} parent=1 // pred_check_branch
      %129 = sbr.rel (0) target = $region61
    $region60: #{tpu_custom_call.1} parent=1 // pred_region
      %131 = dma.done [#allocation9], 15360
    $region61: #{tpu_custom_call.1} parent=1 // pred_fallthru
      _
    // Predicated region
    $region62: #{tpu_custom_call.1} parent=1 // pred_check
      _
    $region63: #{tpu_custom_call.1} parent=1 // pred_check_branch
      %133 = sbr.rel (0) target = $region65
    $region64: #{tpu_custom_call.1} parent=1 // pred_region
      %135 = dma.done [#allocation9], 6144
    $region65: #{tpu_custom_call.1} parent=1 // pred_fallthru
      _
    // Predicated region
    $region66: #{tpu_custom_call.1} parent=1 // pred_check
      _
    $region67: #{tpu_custom_call.1} parent=1 // pred_check_branch
      %137 = sbr.rel (0) target = $region69
    $region68: #{tpu_custom_call.1} parent=1 // pred_region
      %139 = dma.done [#allocation12], 2048
    $region69: #{tpu_custom_call.1} parent=1 // pred_fallthru
      _
    // Predicated region
    $region70: #{tpu_custom_call.1} parent=1 // pred_check
      _
    $region71: #{tpu_custom_call.1} parent=1 // pred_check_branch
      %141 = sbr.rel (0) target = $region73
    $region72: #{tpu_custom_call.1} parent=1 // pred_region
      %143 = dma.done [#allocation12], 1024
    $region73: #{tpu_custom_call.1} parent=1 // pred_fallthru
      _
    %v145 = vld [vmem:[#allocation2] sm:$0xff]
    %v146 = vld [vmem:[#allocation2 + $0x8] sm:$0xff]
    %v147 = vld [vmem:[#allocation2 + $0x10] sm:$0xff]
    %v148 = vld [vmem:[#allocation2 + $0x18] sm:$0xf]
    %v149 = vld [vmem:[#allocation5] sm:$0xff]
    %v150 = vld [vmem:[#allocation5 + $0x8] sm:$0xff]
    %v151 = vld [vmem:[#allocation5 + $0x10] sm:$0xf]
    %v152 = vld [vmem:[#allocation5 + $0x14] sm:$0xff]
    %v153 = vld [vmem:[#allocation5 + $0x1c] sm:$0xff]
    %v154 = vld [vmem:[#allocation5 + $0x24] sm:$0xf]
    %v155 = vld [vmem:[#allocation5 + $0x28] sm:$0xff]
    %v156 = vld [vmem:[#allocation5 + $0x30] sm:$0xff]
    %v157 = vld [vmem:[#allocation5 + $0x38] sm:$0xf]
    %v158 = vld [vmem:[#allocation5 + $0x3c] sm:$0xff]
    %v159 = vld [vmem:[#allocation5 + $0x44] sm:$0xff]
    %v160 = vld [vmem:[#allocation5 + $0x4c] sm:$0xf]
    %v161 = vld [vmem:[#allocation5 + $0x50] sm:$0xff]
    %v162 = vld [vmem:[#allocation5 + $0x58] sm:$0xff]
    %v163 = vld [vmem:[#allocation5 + $0x60] sm:$0xf]
    %v164 = vld [vmem:[#allocation5 + $0x64] sm:$0xff]
    %v165 = vld [vmem:[#allocation5 + $0x6c] sm:$0xff]
    %v166 = vld [vmem:[#allocation5 + $0x74] sm:$0xf]
    %v167 = vld [vmem:[#allocation5 + $0x78] sm:$0xff]
    %v168 = vld [vmem:[#allocation5 + $0x80] sm:$0xff]
    %v169 = vld [vmem:[#allocation5 + $0x88] sm:$0xf]
    %v170 = vld [vmem:[#allocation5 + $0x8c] sm:$0xff]
    %v171 = vld [vmem:[#allocation5 + $0x94] sm:$0xff]
    %v172 = vld [vmem:[#allocation5 + $0x9c] sm:$0xf]
    %v173 = vld [vmem:[#allocation5 + $0xa0] sm:$0xff]
    %v174 = vld [vmem:[#allocation5 + $0xa8] sm:$0xff]
    %v175 = vld [vmem:[#allocation5 + $0xb0] sm:$0xf]
    %v176 = vld [vmem:[#allocation5 + $0xb4] sm:$0xff]
    %v177 = vld [vmem:[#allocation5 + $0xbc] sm:$0xff]
    %v178 = vld [vmem:[#allocation5 + $0xc4] sm:$0xf]
    %v179 = vld [vmem:[#allocation5 + $0xc8] sm:$0xff]
    %v180 = vld [vmem:[#allocation5 + $0xd0] sm:$0xff]
    %v181 = vld [vmem:[#allocation5 + $0xd8] sm:$0xf]
    %v182 = vld [vmem:[#allocation5 + $0xdc] sm:$0xff]
    %v183 = vld [vmem:[#allocation5 + $0xe4] sm:$0xff]
    %v184 = vld [vmem:[#allocation5 + $0xec] sm:$0xf]
    %v185 = vld [vmem:[#allocation5 + $0xf0] sm:$0xff]
    %v186 = vld [vmem:[#allocation5 + $0xf8] sm:$0xff]
    %v187 = vld [vmem:[#allocation5 + $0x100] sm:$0xf]
    %v188 = vld [vmem:[#allocation5 + $0x104] sm:$0xff]
    %v189 = vld [vmem:[#allocation5 + $0x10c] sm:$0xff]
    %v190 = vld [vmem:[#allocation5 + $0x114] sm:$0xf]
    %v191 = vld [vmem:[#allocation5 + $0x118] sm:$0xff]
    %v192 = vld [vmem:[#allocation5 + $0x120] sm:$0xff]
    %v193 = vld [vmem:[#allocation5 + $0x128] sm:$0xf]
    %v194 = vld [vmem:[#allocation5 + $0x12c] sm:$0xff]
    %v195 = vld [vmem:[#allocation5 + $0x134] sm:$0xff]
    %v196 = vld [vmem:[#allocation5 + $0x13c] sm:$0xf]
    %v197 = vld [vmem:[#allocation5 + $0x140] sm:$0xff]
    %v198 = vld [vmem:[#allocation5 + $0x148] sm:$0xff]
    %v199 = vld [vmem:[#allocation5 + $0x150] sm:$0xf]
    %v200 = vld [vmem:[#allocation5 + $0x154] sm:$0xff]
    %v201 = vld [vmem:[#allocation5 + $0x15c] sm:$0xff]
    %v202 = vld [vmem:[#allocation5 + $0x164] sm:$0xf]
    %v203 = vld [vmem:[#allocation5 + $0x168] sm:$0xff]
    %v204 = vld [vmem:[#allocation5 + $0x170] sm:$0xff]
    %v205 = vld [vmem:[#allocation5 + $0x178] sm:$0xf]
    %v206 = vld [vmem:[#allocation5 + $0x17c] sm:$0xff]
    %v207 = vld [vmem:[#allocation5 + $0x184] sm:$0xff]
    %v208 = vld [vmem:[#allocation5 + $0x18c] sm:$0xf]
    %v209 = vld [vmem:[#allocation5 + $0x190] sm:$0xff]
    %v210 = vld [vmem:[#allocation5 + $0x198] sm:$0xff]
    %v211 = vld [vmem:[#allocation5 + $0x1a0] sm:$0xf]
    %v212 = vld [vmem:[#allocation5 + $0x1a4] sm:$0xff]
    %v213 = vld [vmem:[#allocation5 + $0x1ac] sm:$0xff]
    %v214 = vld [vmem:[#allocation5 + $0x1b4] sm:$0xf]
    %v215 = vld [vmem:[#allocation5 + $0x1b8] sm:$0xff]
    %v216 = vld [vmem:[#allocation5 + $0x1c0] sm:$0xff]
    %v217 = vld [vmem:[#allocation5 + $0x1c8] sm:$0xf]
    %v218 = vld [vmem:[#allocation5 + $0x1cc] sm:$0xff]
    %v219 = vld [vmem:[#allocation5 + $0x1d4] sm:$0xff]
    %v220 = vld [vmem:[#allocation5 + $0x1dc] sm:$0xf]
    %v221 = vld [vmem:[#allocation5 + $0x1e0] sm:$0xff]
    %v222 = vld [vmem:[#allocation5 + $0x1e8] sm:$0xff]
    %v223 = vld [vmem:[#allocation5 + $0x1f0] sm:$0xf]
    %v224 = vld [vmem:[#allocation5 + $0x1f4] sm:$0xff]
    %v225 = vld [vmem:[#allocation5 + $0x1fc] sm:$0xff]
    %v226 = vld [vmem:[#allocation5 + $0x204] sm:$0xf]
    %v227 = vld [vmem:[#allocation5 + $0x208] sm:$0xff]
    %v228 = vld [vmem:[#allocation5 + $0x210] sm:$0xff]
    %v229 = vld [vmem:[#allocation5 + $0x218] sm:$0xf]
    %v230 = vld [vmem:[#allocation5 + $0x21c] sm:$0xff]
    %v231 = vld [vmem:[#allocation5 + $0x224] sm:$0xff]
    %v232 = vld [vmem:[#allocation5 + $0x22c] sm:$0xf]
    %v233 = vld [vmem:[#allocation5 + $0x230] sm:$0xff]
    %v234 = vld [vmem:[#allocation5 + $0x238] sm:$0xff]
    %v235 = vld [vmem:[#allocation5 + $0x240] sm:$0xf]
    %v236 = vld [vmem:[#allocation5 + $0x244] sm:$0xff]
    %v237 = vld [vmem:[#allocation5 + $0x24c] sm:$0xff]
    %v238 = vld [vmem:[#allocation5 + $0x254] sm:$0xf]
    %v239 = vld [vmem:[#allocation5 + $0x258] sm:$0xff]
    %v240 = vld [vmem:[#allocation5 + $0x260] sm:$0xff]
    %v241 = vld [vmem:[#allocation5 + $0x268] sm:$0xf]
    %v242 = vld [vmem:[#allocation5 + $0x26c] sm:$0xff]
    %v243 = vld [vmem:[#allocation5 + $0x274] sm:$0xff]
    %v244 = vld [vmem:[#allocation5 + $0x27c] sm:$0xf]
    %v245 = vld [vmem:[#allocation5 + $0x280] sm:$0xff]
    %v246 = vld [vmem:[#allocation5 + $0x288] sm:$0xff]
    %v247 = vld [vmem:[#allocation5 + $0x290] sm:$0xf]
    %v248 = vld [vmem:[#allocation5 + $0x294] sm:$0xff]
    %v249 = vld [vmem:[#allocation5 + $0x29c] sm:$0xff]
    %v250 = vld [vmem:[#allocation5 + $0x2a4] sm:$0xf]
    %v251 = vld [vmem:[#allocation5 + $0x2a8] sm:$0xff]
    %v252 = vld [vmem:[#allocation5 + $0x2b0] sm:$0xff]
    %v253 = vld [vmem:[#allocation5 + $0x2b8] sm:$0xf]
    %v254 = vld [vmem:[#allocation5 + $0x2bc] sm:$0xff]
    %v255 = vld [vmem:[#allocation5 + $0x2c4] sm:$0xff]
    %v256 = vld [vmem:[#allocation5 + $0x2cc] sm:$0xf]
    %v257 = vld [vmem:[#allocation5 + $0x2d0] sm:$0xff]
    %v258 = vld [vmem:[#allocation5 + $0x2d8] sm:$0xff]
    %v259 = vld [vmem:[#allocation5 + $0x2e0] sm:$0xf]
    %v260 = vld [vmem:[#allocation5 + $0x2e4] sm:$0xff]
    %v261 = vld [vmem:[#allocation5 + $0x2ec] sm:$0xff]
    %v262 = vld [vmem:[#allocation5 + $0x2f4] sm:$0xf]
    %v263 = vld [vmem:[#allocation5 + $0x2f8] sm:$0xff]
    %v264 = vld [vmem:[#allocation5 + $0x300] sm:$0xff]
    %v265 = vld [vmem:[#allocation5 + $0x308] sm:$0xf]
    %v266 = vld [vmem:[#allocation5 + $0x30c] sm:$0xff]
    %v267 = vld [vmem:[#allocation5 + $0x314] sm:$0xff]
    %v268 = vld [vmem:[#allocation5 + $0x31c] sm:$0xf]
    %v269 = vld [vmem:[#allocation5 + $0x320] sm:$0xff]
    %v270 = vld [vmem:[#allocation5 + $0x328] sm:$0xff]
    %v271 = vld [vmem:[#allocation5 + $0x330] sm:$0xf]
    %v272 = vld [vmem:[#allocation5 + $0x334] sm:$0xff]
    %v273 = vld [vmem:[#allocation5 + $0x33c] sm:$0xff]
    %v274 = vld [vmem:[#allocation5 + $0x344] sm:$0xf]
    %v275 = vld [vmem:[#allocation5 + $0x348] sm:$0xff]
    %v276 = vld [vmem:[#allocation5 + $0x350] sm:$0xff]
    %v277 = vld [vmem:[#allocation5 + $0x358] sm:$0xf]
    %v278 = vld [vmem:[#allocation5 + $0x35c] sm:$0xff]
    %v279 = vld [vmem:[#allocation5 + $0x364] sm:$0xff]
    %v280 = vld [vmem:[#allocation5 + $0x36c] sm:$0xf]
    %v281 = vld [vmem:[#allocation5 + $0x370] sm:$0xff]
    %v282 = vld [vmem:[#allocation5 + $0x378] sm:$0xff]
    %v283 = vld [vmem:[#allocation5 + $0x380] sm:$0xf]
    %v284 = vld [vmem:[#allocation5 + $0x384] sm:$0xff]
    %v285 = vld [vmem:[#allocation5 + $0x38c] sm:$0xff]
    %v286 = vld [vmem:[#allocation5 + $0x394] sm:$0xf]
    %v287 = vld [vmem:[#allocation5 + $0x398] sm:$0xff]
    %v288 = vld [vmem:[#allocation5 + $0x3a0] sm:$0xff]
    %v289 = vld [vmem:[#allocation5 + $0x3a8] sm:$0xf]
    %v290 = vld [vmem:[#allocation5 + $0x3ac] sm:$0xff]
    %v291 = vld [vmem:[#allocation5 + $0x3b4] sm:$0xff]
    %v292 = vld [vmem:[#allocation5 + $0x3bc] sm:$0xf]
    %v293 = vld [vmem:[#allocation5 + $0x3c0] sm:$0xff]
    %v294 = vld [vmem:[#allocation5 + $0x3c8] sm:$0xff]
    %v295 = vld [vmem:[#allocation5 + $0x3d0] sm:$0xf]
    %v296 = vld [vmem:[#allocation5 + $0x3d4] sm:$0xff]
    %v297 = vld [vmem:[#allocation5 + $0x3dc] sm:$0xff]
    %v298 = vld [vmem:[#allocation5 + $0x3e4] sm:$0xf]
    %v299 = vld [vmem:[#allocation5 + $0x3e8] sm:$0xff]
    %v300 = vld [vmem:[#allocation5 + $0x3f0] sm:$0xff]
    %v301 = vld [vmem:[#allocation5 + $0x3f8] sm:$0xf]
    %v302 = vld [vmem:[#allocation5 + $0x3fc] sm:$0xff]
    %v303 = vld [vmem:[#allocation5 + $0x404] sm:$0xff]
    %v304 = vld [vmem:[#allocation5 + $0x40c] sm:$0xf]
    %v305 = vld [vmem:[#allocation5 + $0x410] sm:$0xff]
    %v306 = vld [vmem:[#allocation5 + $0x418] sm:$0xff]
    %v307 = vld [vmem:[#allocation5 + $0x420] sm:$0xf]
    %v308 = vld [vmem:[#allocation5 + $0x424] sm:$0xff]
    %v309 = vld [vmem:[#allocation5 + $0x42c] sm:$0xff]
    %v310 = vld [vmem:[#allocation5 + $0x434] sm:$0xf]
    %v311 = vld [vmem:[#allocation5 + $0x438] sm:$0xff]
    %v312 = vld [vmem:[#allocation5 + $0x440] sm:$0xff]
    %v313 = vld [vmem:[#allocation5 + $0x448] sm:$0xf]
    %v314 = vld [vmem:[#allocation5 + $0x44c] sm:$0xff]
    %v315 = vld [vmem:[#allocation5 + $0x454] sm:$0xff]
    %v316 = vld [vmem:[#allocation5 + $0x45c] sm:$0xf]
    %v317 = vld [vmem:[#allocation5 + $0x460] sm:$0xff]
    %v318 = vld [vmem:[#allocation5 + $0x468] sm:$0xff]
    %v319 = vld [vmem:[#allocation5 + $0x470] sm:$0xf]
    %v320 = vld [vmem:[#allocation5 + $0x474] sm:$0xff]
    %v321 = vld [vmem:[#allocation5 + $0x47c] sm:$0xff]
    %v322 = vld [vmem:[#allocation5 + $0x484] sm:$0xf]
    %v323 = vld [vmem:[#allocation5 + $0x488] sm:$0xff]
    %v324 = vld [vmem:[#allocation5 + $0x490] sm:$0xff]
    %v325 = vld [vmem:[#allocation5 + $0x498] sm:$0xf]
    %v326 = vld [vmem:[#allocation5 + $0x49c] sm:$0xff]
    %v327 = vld [vmem:[#allocation5 + $0x4a4] sm:$0xff]
    %v328 = vld [vmem:[#allocation5 + $0x4ac] sm:$0xf]
    %v329 = vld [vmem:[#allocation5 + $0x4b0] sm:$0xff]
    %v330 = vld [vmem:[#allocation5 + $0x4b8] sm:$0xff]
    %v331 = vld [vmem:[#allocation5 + $0x4c0] sm:$0xf]
    %v332 = vld [vmem:[#allocation5 + $0x4c4] sm:$0xff]
    %v333 = vld [vmem:[#allocation5 + $0x4cc] sm:$0xff]
    %v334 = vld [vmem:[#allocation5 + $0x4d4] sm:$0xf]
    %v335 = vld [vmem:[#allocation5 + $0x4d8] sm:$0xff]
    %v336 = vld [vmem:[#allocation5 + $0x4e0] sm:$0xff]
    %v337 = vld [vmem:[#allocation5 + $0x4e8] sm:$0xf]
    %v338 = vld [vmem:[#allocation5 + $0x4ec] sm:$0xff]
    %v339 = vld [vmem:[#allocation5 + $0x4f4] sm:$0xff]
    %v340 = vld [vmem:[#allocation5 + $0x4fc] sm:$0xf]
    %v341 = vld [vmem:[#allocation5 + $0x500] sm:$0xff]
    %v342 = vld [vmem:[#allocation5 + $0x508] sm:$0xff]
    %v343 = vld [vmem:[#allocation5 + $0x510] sm:$0xf]
    %v344 = vld [vmem:[#allocation5 + $0x514] sm:$0xff]
    %v345 = vld [vmem:[#allocation5 + $0x51c] sm:$0xff]
    %v346 = vld [vmem:[#allocation5 + $0x524] sm:$0xf]
    %v347 = vld [vmem:[#allocation5 + $0x528] sm:$0xff]
    %v348 = vld [vmem:[#allocation5 + $0x530] sm:$0xff]
    %v349 = vld [vmem:[#allocation5 + $0x538] sm:$0xf]
    %v350 = vld [vmem:[#allocation5 + $0x53c] sm:$0xff]
    %v351 = vld [vmem:[#allocation5 + $0x544] sm:$0xff]
    %v352 = vld [vmem:[#allocation5 + $0x54c] sm:$0xf]
    %v353 = vld [vmem:[#allocation5 + $0x550] sm:$0xff]
    %v354 = vld [vmem:[#allocation5 + $0x558] sm:$0xff]
    %v355 = vld [vmem:[#allocation5 + $0x560] sm:$0xf]
    %v356 = vld [vmem:[#allocation5 + $0x564] sm:$0xff]
    %v357 = vld [vmem:[#allocation5 + $0x56c] sm:$0xff]
    %v358 = vld [vmem:[#allocation5 + $0x574] sm:$0xf]
    %v359 = vld [vmem:[#allocation5 + $0x578] sm:$0xff]
    %v360 = vld [vmem:[#allocation5 + $0x580] sm:$0xff]
    %v361 = vld [vmem:[#allocation5 + $0x588] sm:$0xf]
    %v362 = vld [vmem:[#allocation5 + $0x58c] sm:$0xff]
    %v363 = vld [vmem:[#allocation5 + $0x594] sm:$0xff]
    %v364 = vld [vmem:[#allocation5 + $0x59c] sm:$0xf]
    %v365 = vld [vmem:[#allocation5 + $0x5a0] sm:$0xff]
    %v366 = vld [vmem:[#allocation5 + $0x5a8] sm:$0xff]
    %v367 = vld [vmem:[#allocation5 + $0x5b0] sm:$0xf]
    %v368 = vld [vmem:[#allocation5 + $0x5b4] sm:$0xff]
    %v369 = vld [vmem:[#allocation5 + $0x5bc] sm:$0xff]
    %v370 = vld [vmem:[#allocation5 + $0x5c4] sm:$0xf]
    %v371 = vld [vmem:[#allocation5 + $0x5c8] sm:$0xff]
    %v372 = vld [vmem:[#allocation5 + $0x5d0] sm:$0xff]
    %v373 = vld [vmem:[#allocation5 + $0x5d8] sm:$0xf]
    %v374 = vld [vmem:[#allocation5 + $0x5dc] sm:$0xff]
    %v375 = vld [vmem:[#allocation5 + $0x5e4] sm:$0xff]
    %v376 = vld [vmem:[#allocation5 + $0x5ec] sm:$0xf]
    %v377 = vld [vmem:[#allocation5 + $0x5f0] sm:$0xff]
    %v378 = vld [vmem:[#allocation5 + $0x5f8] sm:$0xff]
    %v379 = vld [vmem:[#allocation5 + $0x600] sm:$0xf]
    %v380 = vld [vmem:[#allocation5 + $0x604] sm:$0xff]
    %v381 = vld [vmem:[#allocation5 + $0x60c] sm:$0xff]
    %v382 = vld [vmem:[#allocation5 + $0x614] sm:$0xf]
    %v383 = vld [vmem:[#allocation5 + $0x618] sm:$0xff]
    %v384 = vld [vmem:[#allocation5 + $0x620] sm:$0xff]
    %v385 = vld [vmem:[#allocation5 + $0x628] sm:$0xf]
    %v386 = vld [vmem:[#allocation5 + $0x62c] sm:$0xff]
    %v387 = vld [vmem:[#allocation5 + $0x634] sm:$0xff]
    %v388 = vld [vmem:[#allocation5 + $0x63c] sm:$0xf]
    %v389 = vld [vmem:[#allocation5 + $0x640] sm:$0xff]
    %v390 = vld [vmem:[#allocation5 + $0x648] sm:$0xff]
    %v391 = vld [vmem:[#allocation5 + $0x650] sm:$0xf]
    %v392 = vld [vmem:[#allocation5 + $0x654] sm:$0xff]
    %v393 = vld [vmem:[#allocation5 + $0x65c] sm:$0xff]
    %v394 = vld [vmem:[#allocation5 + $0x664] sm:$0xf]
    %v395 = vld [vmem:[#allocation5 + $0x668] sm:$0xff]
    %v396 = vld [vmem:[#allocation5 + $0x670] sm:$0xff]
    %v397 = vld [vmem:[#allocation5 + $0x678] sm:$0xf]
    %v398 = vld [vmem:[#allocation5 + $0x67c] sm:$0xff]
    %v399 = vld [vmem:[#allocation5 + $0x684] sm:$0xff]
    %v400 = vld [vmem:[#allocation5 + $0x68c] sm:$0xf]
    %v401 = vld [vmem:[#allocation5 + $0x690] sm:$0xff]
    %v402 = vld [vmem:[#allocation5 + $0x698] sm:$0xff]
    %v403 = vld [vmem:[#allocation5 + $0x6a0] sm:$0xf]
    %v404 = vld [vmem:[#allocation5 + $0x6a4] sm:$0xff]
    %v405 = vld [vmem:[#allocation5 + $0x6ac] sm:$0xff]
    %v406 = vld [vmem:[#allocation5 + $0x6b4] sm:$0xf]
    %v407 = vld [vmem:[#allocation5 + $0x6b8] sm:$0xff]
    %v408 = vld [vmem:[#allocation5 + $0x6c0] sm:$0xff]
    %v409 = vld [vmem:[#allocation5 + $0x6c8] sm:$0xf]
    %v410 = vld [vmem:[#allocation5 + $0x6cc] sm:$0xff]
    %v411 = vld [vmem:[#allocation5 + $0x6d4] sm:$0xff]
    %v412 = vld [vmem:[#allocation5 + $0x6dc] sm:$0xf]
    %v413 = vld [vmem:[#allocation5 + $0x6e0] sm:$0xff]
    %v414 = vld [vmem:[#allocation5 + $0x6e8] sm:$0xff]
    %v415 = vld [vmem:[#allocation5 + $0x6f0] sm:$0xf]
    %v416 = vld [vmem:[#allocation5 + $0x6f4] sm:$0xff]
    %v417 = vld [vmem:[#allocation5 + $0x6fc] sm:$0xff]
    %v418 = vld [vmem:[#allocation5 + $0x704] sm:$0xf]
    %v419 = vld [vmem:[#allocation5 + $0x708] sm:$0xff]
    %v420 = vld [vmem:[#allocation5 + $0x710] sm:$0xff]
    %v421 = vld [vmem:[#allocation5 + $0x718] sm:$0xf]
    %v422 = vld [vmem:[#allocation5 + $0x71c] sm:$0xff]
    %v423 = vld [vmem:[#allocation5 + $0x724] sm:$0xff]
    %v424 = vld [vmem:[#allocation5 + $0x72c] sm:$0xf]
    %v425 = vld [vmem:[#allocation5 + $0x730] sm:$0xff]
    %v426 = vld [vmem:[#allocation5 + $0x738] sm:$0xff]
    %v427 = vld [vmem:[#allocation5 + $0x740] sm:$0xf]
    %v428 = vld [vmem:[#allocation5 + $0x744] sm:$0xff]
    %v429 = vld [vmem:[#allocation5 + $0x74c] sm:$0xff]
    %v430 = vld [vmem:[#allocation5 + $0x754] sm:$0xf]
    %v431 = vld [vmem:[#allocation5 + $0x758] sm:$0xff]
    %v432 = vld [vmem:[#allocation5 + $0x760] sm:$0xff]
    %v433 = vld [vmem:[#allocation5 + $0x768] sm:$0xf]
    %v434 = vld [vmem:[#allocation5 + $0x76c] sm:$0xff]
    %v435 = vld [vmem:[#allocation5 + $0x774] sm:$0xff]
    %v436 = vld [vmem:[#allocation5 + $0x77c] sm:$0xf]
    %v437 = vld [vmem:[#allocation5 + $0x780] sm:$0xff]
    %v438 = vld [vmem:[#allocation5 + $0x788] sm:$0xff]
    %v439 = vld [vmem:[#allocation5 + $0x790] sm:$0xf]
    %v440 = vld [vmem:[#allocation5 + $0x794] sm:$0xff]
    %v441 = vld [vmem:[#allocation5 + $0x79c] sm:$0xff]
    %v442 = vld [vmem:[#allocation5 + $0x7a4] sm:$0xf]
    %v443 = vld [vmem:[#allocation7] sm:$0x1f]
    %v445 = vperm.slane %v443, 0
    %v446 = vperm.slane %v443, 1
    %v447 = vperm.slane %v443, 2
    %v448 = vperm.slane %v443, 3
    %v449 = vperm.slane %v443, 4
    %v459 = vunpack.c.l.b16 %v145
    %v460 = vunpack.c.h.b16 %v145
    %v461 = vunpack.c.l.b16 %v146
    %v462 = vunpack.c.h.b16 %v146
    %v463 = vunpack.c.l.b16 %v147
    %v464 = vunpack.c.h.b16 %v147
    %v465 = vunpack.c.l.b16 %v148
    %v466 = vpack.c.b16 %v459, %v459
    %v467 = vpack.c.b16 %v460, %v460
    %v468 = vpack.c.b16 %v461, %v461
    %v469 = vpack.c.b16 %v462, %v462
    %v470 = vpack.c.b16 %v463, %v463
    %v471 = vpack.c.b16 %v464, %v464
    %v472 = vpack.c.b16 %v465, %v465
    %v773 = vunpack.c.l.b16 %v149
    %v774 = vunpack.c.h.b16 %v149
    %v775 = vunpack.c.l.b16 %v150
    %v776 = vunpack.c.h.b16 %v150
    %v777 = vunpack.c.l.b16 %v151
    %v778 = vunpack.c.l.b16 %v152
    %v779 = vunpack.c.h.b16 %v152
    %v780 = vunpack.c.l.b16 %v153
    %v781 = vunpack.c.h.b16 %v153
    %v782 = vunpack.c.l.b16 %v154
    %v783 = vunpack.c.l.b16 %v155
    %v784 = vunpack.c.h.b16 %v155
    %v785 = vunpack.c.l.b16 %v156
    %v786 = vunpack.c.h.b16 %v156
    %v787 = vunpack.c.l.b16 %v157
    %v788 = vunpack.c.l.b16 %v158
    %v789 = vunpack.c.h.b16 %v158
    %v790 = vunpack.c.l.b16 %v159
    %v791 = vunpack.c.h.b16 %v159
    %v792 = vunpack.c.l.b16 %v160
    %v793 = vunpack.c.l.b16 %v161
    %v794 = vunpack.c.h.b16 %v161
    %v795 = vunpack.c.l.b16 %v162
    %v796 = vunpack.c.h.b16 %v162
    %v797 = vunpack.c.l.b16 %v163
    %v798 = vunpack.c.l.b16 %v164
    %v799 = vunpack.c.h.b16 %v164
    %v800 = vunpack.c.l.b16 %v165
    %v801 = vunpack.c.h.b16 %v165
    %v802 = vunpack.c.l.b16 %v166
    %v803 = vunpack.c.l.b16 %v167
    %v804 = vunpack.c.h.b16 %v167
    %v805 = vunpack.c.l.b16 %v168
    %v806 = vunpack.c.h.b16 %v168
    %v807 = vunpack.c.l.b16 %v169
    %v808 = vunpack.c.l.b16 %v170
    %v809 = vunpack.c.h.b16 %v170
    %v810 = vunpack.c.l.b16 %v171
    %v811 = vunpack.c.h.b16 %v171
    %v812 = vunpack.c.l.b16 %v172
    %v813 = vunpack.c.l.b16 %v173
    %v814 = vunpack.c.h.b16 %v173
    %v815 = vunpack.c.l.b16 %v174
    %v816 = vunpack.c.h.b16 %v174
    %v817 = vunpack.c.l.b16 %v175
    %v818 = vunpack.c.l.b16 %v176
    %v819 = vunpack.c.h.b16 %v176
    %v820 = vunpack.c.l.b16 %v177
    %v821 = vunpack.c.h.b16 %v177
    %v822 = vunpack.c.l.b16 %v178
    %v823 = vunpack.c.l.b16 %v179
    %v824 = vunpack.c.h.b16 %v179
    %v825 = vunpack.c.l.b16 %v180
    %v826 = vunpack.c.h.b16 %v180
    %v827 = vunpack.c.l.b16 %v181
    %v828 = vunpack.c.l.b16 %v182
    %v829 = vunpack.c.h.b16 %v182
    %v830 = vunpack.c.l.b16 %v183
    %v831 = vunpack.c.h.b16 %v183
    %v832 = vunpack.c.l.b16 %v184
    %v833 = vunpack.c.l.b16 %v185
    %v834 = vunpack.c.h.b16 %v185
    %v835 = vunpack.c.l.b16 %v186
    %v836 = vunpack.c.h.b16 %v186
    %v837 = vunpack.c.l.b16 %v187
    %v838 = vunpack.c.l.b16 %v188
    %v839 = vunpack.c.h.b16 %v188
    %v840 = vunpack.c.l.b16 %v189
    %v841 = vunpack.c.h.b16 %v189
    %v842 = vunpack.c.l.b16 %v190
    %v843 = vunpack.c.l.b16 %v191
    %v844 = vunpack.c.h.b16 %v191
    %v845 = vunpack.c.l.b16 %v192
    %v846 = vunpack.c.h.b16 %v192
    %v847 = vunpack.c.l.b16 %v193
    %v848 = vunpack.c.l.b16 %v194
    %v849 = vunpack.c.h.b16 %v194
    %v850 = vunpack.c.l.b16 %v195
    %v851 = vunpack.c.h.b16 %v195
    %v852 = vunpack.c.l.b16 %v196
    %v853 = vunpack.c.l.b16 %v197
    %v854 = vunpack.c.h.b16 %v197
    %v855 = vunpack.c.l.b16 %v198
    %v856 = vunpack.c.h.b16 %v198
    %v857 = vunpack.c.l.b16 %v199
    %v858 = vunpack.c.l.b16 %v200
    %v859 = vunpack.c.h.b16 %v200
    %v860 = vunpack.c.l.b16 %v201
    %v861 = vunpack.c.h.b16 %v201
    %v862 = vunpack.c.l.b16 %v202
    %v863 = vunpack.c.l.b16 %v203
    %v864 = vunpack.c.h.b16 %v203
    %v865 = vunpack.c.l.b16 %v204
    %v866 = vunpack.c.h.b16 %v204
    %v867 = vunpack.c.l.b16 %v205
    %v868 = vunpack.c.l.b16 %v206
    %v869 = vunpack.c.h.b16 %v206
    %v870 = vunpack.c.l.b16 %v207
    %v871 = vunpack.c.h.b16 %v207
    %v872 = vunpack.c.l.b16 %v208
    %v873 = vunpack.c.l.b16 %v209
    %v874 = vunpack.c.h.b16 %v209
    %v875 = vunpack.c.l.b16 %v210
    %v876 = vunpack.c.h.b16 %v210
    %v877 = vunpack.c.l.b16 %v211
    %v878 = vunpack.c.l.b16 %v212
    %v879 = vunpack.c.h.b16 %v212
    %v880 = vunpack.c.l.b16 %v213
    %v881 = vunpack.c.h.b16 %v213
    %v882 = vunpack.c.l.b16 %v214
    %v883 = vunpack.c.l.b16 %v215
    %v884 = vunpack.c.h.b16 %v215
    %v885 = vunpack.c.l.b16 %v216
    %v886 = vunpack.c.h.b16 %v216
    %v887 = vunpack.c.l.b16 %v217
    %v888 = vunpack.c.l.b16 %v218
    %v889 = vunpack.c.h.b16 %v218
    %v890 = vunpack.c.l.b16 %v219
    %v891 = vunpack.c.h.b16 %v219
    %v892 = vunpack.c.l.b16 %v220
    %v893 = vunpack.c.l.b16 %v221
    %v894 = vunpack.c.h.b16 %v221
    %v895 = vunpack.c.l.b16 %v222
    %v896 = vunpack.c.h.b16 %v222
    %v897 = vunpack.c.l.b16 %v223
    %v898 = vunpack.c.l.b16 %v224
    %v899 = vunpack.c.h.b16 %v224
    %v900 = vunpack.c.l.b16 %v225
    %v901 = vunpack.c.h.b16 %v225
    %v902 = vunpack.c.l.b16 %v226
    %v903 = vunpack.c.l.b16 %v227
    %v904 = vunpack.c.h.b16 %v227
    %v905 = vunpack.c.l.b16 %v228
    %v906 = vunpack.c.h.b16 %v228
    %v907 = vunpack.c.l.b16 %v229
    %v908 = vunpack.c.l.b16 %v230
    %v909 = vunpack.c.h.b16 %v230
    %v910 = vunpack.c.l.b16 %v231
    %v911 = vunpack.c.h.b16 %v231
    %v912 = vunpack.c.l.b16 %v232
    %v913 = vunpack.c.l.b16 %v233
    %v914 = vunpack.c.h.b16 %v233
    %v915 = vunpack.c.l.b16 %v234
    %v916 = vunpack.c.h.b16 %v234
    %v917 = vunpack.c.l.b16 %v235
    %v918 = vunpack.c.l.b16 %v236
    %v919 = vunpack.c.h.b16 %v236
    %v920 = vunpack.c.l.b16 %v237
    %v921 = vunpack.c.h.b16 %v237
    %v922 = vunpack.c.l.b16 %v238
    %v923 = vunpack.c.l.b16 %v239
    %v924 = vunpack.c.h.b16 %v239
    %v925 = vunpack.c.l.b16 %v240
    %v926 = vunpack.c.h.b16 %v240
    %v927 = vunpack.c.l.b16 %v241
    %v928 = vunpack.c.l.b16 %v242
    %v929 = vunpack.c.h.b16 %v242
    %v930 = vunpack.c.l.b16 %v243
    %v931 = vunpack.c.h.b16 %v243
    %v932 = vunpack.c.l.b16 %v244
    %v933 = vunpack.c.l.b16 %v245
    %v934 = vunpack.c.h.b16 %v245
    %v935 = vunpack.c.l.b16 %v246
    %v936 = vunpack.c.h.b16 %v246
    %v937 = vunpack.c.l.b16 %v247
    %v938 = vunpack.c.l.b16 %v248
    %v939 = vunpack.c.h.b16 %v248
    %v940 = vunpack.c.l.b16 %v249
    %v941 = vunpack.c.h.b16 %v249
    %v942 = vunpack.c.l.b16 %v250
    %v943 = vunpack.c.l.b16 %v251
    %v944 = vunpack.c.h.b16 %v251
    %v945 = vunpack.c.l.b16 %v252
    %v946 = vunpack.c.h.b16 %v252
    %v947 = vunpack.c.l.b16 %v253
    %v948 = vunpack.c.l.b16 %v254
    %v949 = vunpack.c.h.b16 %v254
    %v950 = vunpack.c.l.b16 %v255
    %v951 = vunpack.c.h.b16 %v255
    %v952 = vunpack.c.l.b16 %v256
    %v953 = vunpack.c.l.b16 %v257
    %v954 = vunpack.c.h.b16 %v257
    %v955 = vunpack.c.l.b16 %v258
    %v956 = vunpack.c.h.b16 %v258
    %v957 = vunpack.c.l.b16 %v259
    %v958 = vunpack.c.l.b16 %v260
    %v959 = vunpack.c.h.b16 %v260
    %v960 = vunpack.c.l.b16 %v261
    %v961 = vunpack.c.h.b16 %v261
    %v962 = vunpack.c.l.b16 %v262
    %v963 = vunpack.c.l.b16 %v263
    %v964 = vunpack.c.h.b16 %v263
    %v965 = vunpack.c.l.b16 %v264
    %v966 = vunpack.c.h.b16 %v264
    %v967 = vunpack.c.l.b16 %v265
    %v968 = vunpack.c.l.b16 %v266
    %v969 = vunpack.c.h.b16 %v266
    %v970 = vunpack.c.l.b16 %v267
    %v971 = vunpack.c.h.b16 %v267
    %v972 = vunpack.c.l.b16 %v268
    %v973 = vunpack.c.l.b16 %v269
    %v974 = vunpack.c.h.b16 %v269
    %v975 = vunpack.c.l.b16 %v270
    %v976 = vunpack.c.h.b16 %v270
    %v977 = vunpack.c.l.b16 %v271
    %v978 = vunpack.c.l.b16 %v272
    %v979 = vunpack.c.h.b16 %v272
    %v980 = vunpack.c.l.b16 %v273
    %v981 = vunpack.c.h.b16 %v273
    %v982 = vunpack.c.l.b16 %v274
    %v983 = vunpack.c.l.b16 %v275
    %v984 = vunpack.c.h.b16 %v275
    %v985 = vunpack.c.l.b16 %v276
    %v986 = vunpack.c.h.b16 %v276
    %v987 = vunpack.c.l.b16 %v277
    %v988 = vunpack.c.l.b16 %v278
    %v989 = vunpack.c.h.b16 %v278
    %v990 = vunpack.c.l.b16 %v279
    %v991 = vunpack.c.h.b16 %v279
    %v992 = vunpack.c.l.b16 %v280
    %v993 = vunpack.c.l.b16 %v281
    %v994 = vunpack.c.h.b16 %v281
    %v995 = vunpack.c.l.b16 %v282
    %v996 = vunpack.c.h.b16 %v282
    %v997 = vunpack.c.l.b16 %v283
    %v998 = vunpack.c.l.b16 %v284
    %v999 = vunpack.c.h.b16 %v284
    %v1000 = vunpack.c.l.b16 %v285
    %v1001 = vunpack.c.h.b16 %v285
    %v1002 = vunpack.c.l.b16 %v286
    %v1003 = vunpack.c.l.b16 %v287
    %v1004 = vunpack.c.h.b16 %v287
    %v1005 = vunpack.c.l.b16 %v288
    %v1006 = vunpack.c.h.b16 %v288
    %v1007 = vunpack.c.l.b16 %v289
    %v1008 = vunpack.c.l.b16 %v290
    %v1009 = vunpack.c.h.b16 %v290
    %v1010 = vunpack.c.l.b16 %v291
    %v1011 = vunpack.c.h.b16 %v291
    %v1012 = vunpack.c.l.b16 %v292
    %v1013 = vunpack.c.l.b16 %v293
    %v1014 = vunpack.c.h.b16 %v293
    %v1015 = vunpack.c.l.b16 %v294
    %v1016 = vunpack.c.h.b16 %v294
    %v1017 = vunpack.c.l.b16 %v295
    %v1018 = vunpack.c.l.b16 %v296
    %v1019 = vunpack.c.h.b16 %v296
    %v1020 = vunpack.c.l.b16 %v297
    %v1021 = vunpack.c.h.b16 %v297
    %v1022 = vunpack.c.l.b16 %v298
    %v1023 = vunpack.c.l.b16 %v299
    %v1024 = vunpack.c.h.b16 %v299
    %v1025 = vunpack.c.l.b16 %v300
    %v1026 = vunpack.c.h.b16 %v300
    %v1027 = vunpack.c.l.b16 %v301
    %v1028 = vunpack.c.l.b16 %v302
    %v1029 = vunpack.c.h.b16 %v302
    %v1030 = vunpack.c.l.b16 %v303
    %v1031 = vunpack.c.h.b16 %v303
    %v1032 = vunpack.c.l.b16 %v304
    %v1033 = vunpack.c.l.b16 %v305
    %v1034 = vunpack.c.h.b16 %v305
    %v1035 = vunpack.c.l.b16 %v306
    %v1036 = vunpack.c.h.b16 %v306
    %v1037 = vunpack.c.l.b16 %v307
    %v1038 = vunpack.c.l.b16 %v308
    %v1039 = vunpack.c.h.b16 %v308
    %v1040 = vunpack.c.l.b16 %v309
    %v1041 = vunpack.c.h.b16 %v309
    %v1042 = vunpack.c.l.b16 %v310
    %v1043 = vunpack.c.l.b16 %v311
    %v1044 = vunpack.c.h.b16 %v311
    %v1045 = vunpack.c.l.b16 %v312
    %v1046 = vunpack.c.h.b16 %v312
    %v1047 = vunpack.c.l.b16 %v313
    %v1048 = vunpack.c.l.b16 %v314
    %v1049 = vunpack.c.h.b16 %v314
    %v1050 = vunpack.c.l.b16 %v315
    %v1051 = vunpack.c.h.b16 %v315
    %v1052 = vunpack.c.l.b16 %v316
    %v1053 = vunpack.c.l.b16 %v317
    %v1054 = vunpack.c.h.b16 %v317
    %v1055 = vunpack.c.l.b16 %v318
    %v1056 = vunpack.c.h.b16 %v318
    %v1057 = vunpack.c.l.b16 %v319
    %v1058 = vunpack.c.l.b16 %v320
    %v1059 = vunpack.c.h.b16 %v320
    %v1060 = vunpack.c.l.b16 %v321
    %v1061 = vunpack.c.h.b16 %v321
    %v1062 = vunpack.c.l.b16 %v322
    %v1063 = vunpack.c.l.b16 %v323
    %v1064 = vunpack.c.h.b16 %v323
    %v1065 = vunpack.c.l.b16 %v324
    %v1066 = vunpack.c.h.b16 %v324
    %v1067 = vunpack.c.l.b16 %v325
    %v1068 = vunpack.c.l.b16 %v326
    %v1069 = vunpack.c.h.b16 %v326
    %v1070 = vunpack.c.l.b16 %v327
    %v1071 = vunpack.c.h.b16 %v327
    %v1072 = vunpack.c.l.b16 %v328
    %v1073 = vunpack.c.l.b16 %v329
    %v1074 = vunpack.c.h.b16 %v329
    %v1075 = vunpack.c.l.b16 %v330
    %v1076 = vunpack.c.h.b16 %v330
    %v1077 = vunpack.c.l.b16 %v331
    %v1078 = vunpack.c.l.b16 %v332
    %v1079 = vunpack.c.h.b16 %v332
    %v1080 = vunpack.c.l.b16 %v333
    %v1081 = vunpack.c.h.b16 %v333
    %v1082 = vunpack.c.l.b16 %v334
    %v1083 = vunpack.c.l.b16 %v335
    %v1084 = vunpack.c.h.b16 %v335
    %v1085 = vunpack.c.l.b16 %v336
    %v1086 = vunpack.c.h.b16 %v336
    %v1087 = vunpack.c.l.b16 %v337
    %v1088 = vunpack.c.l.b16 %v338
    %v1089 = vunpack.c.h.b16 %v338
    %v1090 = vunpack.c.l.b16 %v339
    %v1091 = vunpack.c.h.b16 %v339
    %v1092 = vunpack.c.l.b16 %v340
    %v1093 = vunpack.c.l.b16 %v341
    %v1094 = vunpack.c.h.b16 %v341
    %v1095 = vunpack.c.l.b16 %v342
    %v1096 = vunpack.c.h.b16 %v342
    %v1097 = vunpack.c.l.b16 %v343
    %v1098 = vunpack.c.l.b16 %v344
    %v1099 = vunpack.c.h.b16 %v344
    %v1100 = vunpack.c.l.b16 %v345
    %v1101 = vunpack.c.h.b16 %v345
    %v1102 = vunpack.c.l.b16 %v346
    %v1103 = vunpack.c.l.b16 %v347
    %v1104 = vunpack.c.h.b16 %v347
    %v1105 = vunpack.c.l.b16 %v348
    %v1106 = vunpack.c.h.b16 %v348
    %v1107 = vunpack.c.l.b16 %v349
    %v1108 = vunpack.c.l.b16 %v350
    %v1109 = vunpack.c.h.b16 %v350
    %v1110 = vunpack.c.l.b16 %v351
    %v1111 = vunpack.c.h.b16 %v351
    %v1112 = vunpack.c.l.b16 %v352
    %v1113 = vunpack.c.l.b16 %v353
    %v1114 = vunpack.c.h.b16 %v353
    %v1115 = vunpack.c.l.b16 %v354
    %v1116 = vunpack.c.h.b16 %v354
    %v1117 = vunpack.c.l.b16 %v355
    %v1118 = vunpack.c.l.b16 %v356
    %v1119 = vunpack.c.h.b16 %v356
    %v1120 = vunpack.c.l.b16 %v357
    %v1121 = vunpack.c.h.b16 %v357
    %v1122 = vunpack.c.l.b16 %v358
    %v1123 = vunpack.c.l.b16 %v359
    %v1124 = vunpack.c.h.b16 %v359
    %v1125 = vunpack.c.l.b16 %v360
    %v1126 = vunpack.c.h.b16 %v360
    %v1127 = vunpack.c.l.b16 %v361
    %v1128 = vunpack.c.l.b16 %v362
    %v1129 = vunpack.c.h.b16 %v362
    %v1130 = vunpack.c.l.b16 %v363
    %v1131 = vunpack.c.h.b16 %v363
    %v1132 = vunpack.c.l.b16 %v364
    %v1133 = vunpack.c.l.b16 %v365
    %v1134 = vunpack.c.h.b16 %v365
    %v1135 = vunpack.c.l.b16 %v366
    %v1136 = vunpack.c.h.b16 %v366
    %v1137 = vunpack.c.l.b16 %v367
    %v1138 = vunpack.c.l.b16 %v368
    %v1139 = vunpack.c.h.b16 %v368
    %v1140 = vunpack.c.l.b16 %v369
    %v1141 = vunpack.c.h.b16 %v369
    %v1142 = vunpack.c.l.b16 %v370
    %v1143 = vunpack.c.l.b16 %v371
    %v1144 = vunpack.c.h.b16 %v371
    %v1145 = vunpack.c.l.b16 %v372
    %v1146 = vunpack.c.h.b16 %v372
    %v1147 = vunpack.c.l.b16 %v373
    %v1148 = vunpack.c.l.b16 %v374
    %v1149 = vunpack.c.h.b16 %v374
    %v1150 = vunpack.c.l.b16 %v375
    %v1151 = vunpack.c.h.b16 %v375
    %v1152 = vunpack.c.l.b16 %v376
    %v1153 = vunpack.c.l.b16 %v377
    %v1154 = vunpack.c.h.b16 %v377
    %v1155 = vunpack.c.l.b16 %v378
    %v1156 = vunpack.c.h.b16 %v378
    %v1157 = vunpack.c.l.b16 %v379
    %v1158 = vunpack.c.l.b16 %v380
    %v1159 = vunpack.c.h.b16 %v380
    %v1160 = vunpack.c.l.b16 %v381
    %v1161 = vunpack.c.h.b16 %v381
    %v1162 = vunpack.c.l.b16 %v382
    %v1163 = vunpack.c.l.b16 %v383
    %v1164 = vunpack.c.h.b16 %v383
    %v1165 = vunpack.c.l.b16 %v384
    %v1166 = vunpack.c.h.b16 %v384
    %v1167 = vunpack.c.l.b16 %v385
    %v1168 = vunpack.c.l.b16 %v386
    %v1169 = vunpack.c.h.b16 %v386
    %v1170 = vunpack.c.l.b16 %v387
    %v1171 = vunpack.c.h.b16 %v387
    %v1172 = vunpack.c.l.b16 %v388
    %v1173 = vunpack.c.l.b16 %v389
    %v1174 = vunpack.c.h.b16 %v389
    %v1175 = vunpack.c.l.b16 %v390
    %v1176 = vunpack.c.h.b16 %v390
    %v1177 = vunpack.c.l.b16 %v391
    %v1178 = vunpack.c.l.b16 %v392
    %v1179 = vunpack.c.h.b16 %v392
    %v1180 = vunpack.c.l.b16 %v393
    %v1181 = vunpack.c.h.b16 %v393
    %v1182 = vunpack.c.l.b16 %v394
    %v1183 = vunpack.c.l.b16 %v395
    %v1184 = vunpack.c.h.b16 %v395
    %v1185 = vunpack.c.l.b16 %v396
    %v1186 = vunpack.c.h.b16 %v396
    %v1187 = vunpack.c.l.b16 %v397
    %v1188 = vunpack.c.l.b16 %v398
    %v1189 = vunpack.c.h.b16 %v398
    %v1190 = vunpack.c.l.b16 %v399
    %v1191 = vunpack.c.h.b16 %v399
    %v1192 = vunpack.c.l.b16 %v400
    %v1193 = vunpack.c.l.b16 %v401
    %v1194 = vunpack.c.h.b16 %v401
    %v1195 = vunpack.c.l.b16 %v402
    %v1196 = vunpack.c.h.b16 %v402
    %v1197 = vunpack.c.l.b16 %v403
    %v1198 = vunpack.c.l.b16 %v404
    %v1199 = vunpack.c.h.b16 %v404
    %v1200 = vunpack.c.l.b16 %v405
    %v1201 = vunpack.c.h.b16 %v405
    %v1202 = vunpack.c.l.b16 %v406
    %v1203 = vunpack.c.l.b16 %v407
    %v1204 = vunpack.c.h.b16 %v407
    %v1205 = vunpack.c.l.b16 %v408
    %v1206 = vunpack.c.h.b16 %v408
    %v1207 = vunpack.c.l.b16 %v409
    %v1208 = vunpack.c.l.b16 %v410
    %v1209 = vunpack.c.h.b16 %v410
    %v1210 = vunpack.c.l.b16 %v411
    %v1211 = vunpack.c.h.b16 %v411
    %v1212 = vunpack.c.l.b16 %v412
    %v1213 = vunpack.c.l.b16 %v413
    %v1214 = vunpack.c.h.b16 %v413
    %v1215 = vunpack.c.l.b16 %v414
    %v1216 = vunpack.c.h.b16 %v414
    %v1217 = vunpack.c.l.b16 %v415
    %v1218 = vunpack.c.l.b16 %v416
    %v1219 = vunpack.c.h.b16 %v416
    %v1220 = vunpack.c.l.b16 %v417
    %v1221 = vunpack.c.h.b16 %v417
    %v1222 = vunpack.c.l.b16 %v418
    %v1223 = vunpack.c.l.b16 %v419
    %v1224 = vunpack.c.h.b16 %v419
    %v1225 = vunpack.c.l.b16 %v420
    %v1226 = vunpack.c.h.b16 %v420
    %v1227 = vunpack.c.l.b16 %v421
    %v1228 = vunpack.c.l.b16 %v422
    %v1229 = vunpack.c.h.b16 %v422
    %v1230 = vunpack.c.l.b16 %v423
    %v1231 = vunpack.c.h.b16 %v423
    %v1232 = vunpack.c.l.b16 %v424
    %v1233 = vunpack.c.l.b16 %v425
    %v1234 = vunpack.c.h.b16 %v425
    %v1235 = vunpack.c.l.b16 %v426
    %v1236 = vunpack.c.h.b16 %v426
    %v1237 = vunpack.c.l.b16 %v427
    %v1238 = vunpack.c.l.b16 %v428
    %v1239 = vunpack.c.h.b16 %v428
    %v1240 = vunpack.c.l.b16 %v429
    %v1241 = vunpack.c.h.b16 %v429
    %v1242 = vunpack.c.l.b16 %v430
    %v1243 = vunpack.c.l.b16 %v431
    %v1244 = vunpack.c.h.b16 %v431
    %v1245 = vunpack.c.l.b16 %v432
    %v1246 = vunpack.c.h.b16 %v432
    %v1247 = vunpack.c.l.b16 %v433
    %v1248 = vunpack.c.l.b16 %v434
    %v1249 = vunpack.c.h.b16 %v434
    %v1250 = vunpack.c.l.b16 %v435
    %v1251 = vunpack.c.h.b16 %v435
    %v1252 = vunpack.c.l.b16 %v436
    %v1253 = vunpack.c.l.b16 %v437
    %v1254 = vunpack.c.h.b16 %v437
    %v1255 = vunpack.c.l.b16 %v438
    %v1256 = vunpack.c.h.b16 %v438
    %v1257 = vunpack.c.l.b16 %v439
    %v1258 = vunpack.c.l.b16 %v440
    %v1259 = vunpack.c.h.b16 %v440
    %v1260 = vunpack.c.l.b16 %v441
    %v1261 = vunpack.c.h.b16 %v441
    %v1262 = vunpack.c.l.b16 %v442
    %v1263 = vpack.c.b16 %v778, %v773
    %v1264 = vpack.c.b16 %v779, %v774
    %v1265 = vpack.c.b16 %v780, %v775
    %v1266 = vpack.c.b16 %v781, %v776
    %v1267 = vpack.c.b16 %v782, %v777
    %v1268 = vpack.c.b16 %v788, %v783
    %v1269 = vpack.c.b16 %v789, %v784
    %v1270 = vpack.c.b16 %v790, %v785
    %v1271 = vpack.c.b16 %v791, %v786
    %v1272 = vpack.c.b16 %v792, %v787
    %v1273 = vpack.c.b16 %v798, %v793
    %v1274 = vpack.c.b16 %v799, %v794
    %v1275 = vpack.c.b16 %v800, %v795
    %v1276 = vpack.c.b16 %v801, %v796
    %v1277 = vpack.c.b16 %v802, %v797
    %v1278 = vpack.c.b16 %v808, %v803
    %v1279 = vpack.c.b16 %v809, %v804
    %v1280 = vpack.c.b16 %v810, %v805
    %v1281 = vpack.c.b16 %v811, %v806
    %v1282 = vpack.c.b16 %v812, %v807
    %v1283 = vpack.c.b16 %v818, %v813
    %v1284 = vpack.c.b16 %v819, %v814
    %v1285 = vpack.c.b16 %v820, %v815
    %v1286 = vpack.c.b16 %v821, %v816
    %v1287 = vpack.c.b16 %v822, %v817
    %v1288 = vpack.c.b16 %v828, %v823
    %v1289 = vpack.c.b16 %v829, %v824
    %v1290 = vpack.c.b16 %v830, %v825
    %v1291 = vpack.c.b16 %v831, %v826
    %v1292 = vpack.c.b16 %v832, %v827
    %v1293 = vpack.c.b16 %v838, %v833
    %v1294 = vpack.c.b16 %v839, %v834
    %v1295 = vpack.c.b16 %v840, %v835
    %v1296 = vpack.c.b16 %v841, %v836
    %v1297 = vpack.c.b16 %v842, %v837
    %v1298 = vpack.c.b16 %v848, %v843
    %v1299 = vpack.c.b16 %v849, %v844
    %v1300 = vpack.c.b16 %v850, %v845
    %v1301 = vpack.c.b16 %v851, %v846
    %v1302 = vpack.c.b16 %v852, %v847
    %v1303 = vpack.c.b16 %v858, %v853
    %v1304 = vpack.c.b16 %v859, %v854
    %v1305 = vpack.c.b16 %v860, %v855
    %v1306 = vpack.c.b16 %v861, %v856
    %v1307 = vpack.c.b16 %v862, %v857
    %v1308 = vpack.c.b16 %v868, %v863
    %v1309 = vpack.c.b16 %v869, %v864
    %v1310 = vpack.c.b16 %v870, %v865
    %v1311 = vpack.c.b16 %v871, %v866
    %v1312 = vpack.c.b16 %v872, %v867
    %v1313 = vpack.c.b16 %v878, %v873
    %v1314 = vpack.c.b16 %v879, %v874
    %v1315 = vpack.c.b16 %v880, %v875
    %v1316 = vpack.c.b16 %v881, %v876
    %v1317 = vpack.c.b16 %v882, %v877
    %v1318 = vpack.c.b16 %v888, %v883
    %v1319 = vpack.c.b16 %v889, %v884
    %v1320 = vpack.c.b16 %v890, %v885
    %v1321 = vpack.c.b16 %v891, %v886
    %v1322 = vpack.c.b16 %v892, %v887
    %v1323 = vpack.c.b16 %v898, %v893
    %v1324 = vpack.c.b16 %v899, %v894
    %v1325 = vpack.c.b16 %v900, %v895
    %v1326 = vpack.c.b16 %v901, %v896
    %v1327 = vpack.c.b16 %v902, %v897
    %v1328 = vpack.c.b16 %v908, %v903
    %v1329 = vpack.c.b16 %v909, %v904
    %v1330 = vpack.c.b16 %v910, %v905
    %v1331 = vpack.c.b16 %v911, %v906
    %v1332 = vpack.c.b16 %v912, %v907
    %v1333 = vpack.c.b16 %v918, %v913
    %v1334 = vpack.c.b16 %v919, %v914
    %v1335 = vpack.c.b16 %v920, %v915
    %v1336 = vpack.c.b16 %v921, %v916
    %v1337 = vpack.c.b16 %v922, %v917
    %v1338 = vpack.c.b16 %v928, %v923
    %v1339 = vpack.c.b16 %v929, %v924
    %v1340 = vpack.c.b16 %v930, %v925
    %v1341 = vpack.c.b16 %v931, %v926
    %v1342 = vpack.c.b16 %v932, %v927
    %v1343 = vpack.c.b16 %v938, %v933
    %v1344 = vpack.c.b16 %v939, %v934
    %v1345 = vpack.c.b16 %v940, %v935
    %v1346 = vpack.c.b16 %v941, %v936
    %v1347 = vpack.c.b16 %v942, %v937
    %v1348 = vpack.c.b16 %v948, %v943
    %v1349 = vpack.c.b16 %v949, %v944
    %v1350 = vpack.c.b16 %v950, %v945
    %v1351 = vpack.c.b16 %v951, %v946
    %v1352 = vpack.c.b16 %v952, %v947
    %v1353 = vpack.c.b16 %v958, %v953
    %v1354 = vpack.c.b16 %v959, %v954
    %v1355 = vpack.c.b16 %v960, %v955
    %v1356 = vpack.c.b16 %v961, %v956
    %v1357 = vpack.c.b16 %v962, %v957
    %v1358 = vpack.c.b16 %v968, %v963
    %v1359 = vpack.c.b16 %v969, %v964
    %v1360 = vpack.c.b16 %v970, %v965
    %v1361 = vpack.c.b16 %v971, %v966
    %v1362 = vpack.c.b16 %v972, %v967
    %v1363 = vpack.c.b16 %v978, %v973
    %v1364 = vpack.c.b16 %v979, %v974
    %v1365 = vpack.c.b16 %v980, %v975
    %v1366 = vpack.c.b16 %v981, %v976
    %v1367 = vpack.c.b16 %v982, %v977
    %v1368 = vpack.c.b16 %v988, %v983
    %v1369 = vpack.c.b16 %v989, %v984
    %v1370 = vpack.c.b16 %v990, %v985
    %v1371 = vpack.c.b16 %v991, %v986
    %v1372 = vpack.c.b16 %v992, %v987
    %v1373 = vpack.c.b16 %v998, %v993
    %v1374 = vpack.c.b16 %v999, %v994
    %v1375 = vpack.c.b16 %v1000, %v995
    %v1376 = vpack.c.b16 %v1001, %v996
    %v1377 = vpack.c.b16 %v1002, %v997
    %v1378 = vpack.c.b16 %v1008, %v1003
    %v1379 = vpack.c.b16 %v1009, %v1004
    %v1380 = vpack.c.b16 %v1010, %v1005
    %v1381 = vpack.c.b16 %v1011, %v1006
    %v1382 = vpack.c.b16 %v1012, %v1007
    %v1383 = vpack.c.b16 %v1018, %v1013
    %v1384 = vpack.c.b16 %v1019, %v1014
    %v1385 = vpack.c.b16 %v1020, %v1015
    %v1386 = vpack.c.b16 %v1021, %v1016
    %v1387 = vpack.c.b16 %v1022, %v1017
    %v1388 = vpack.c.b16 %v1028, %v1023
    %v1389 = vpack.c.b16 %v1029, %v1024
    %v1390 = vpack.c.b16 %v1030, %v1025
    %v1391 = vpack.c.b16 %v1031, %v1026
    %v1392 = vpack.c.b16 %v1032, %v1027
    %v1393 = vpack.c.b16 %v1038, %v1033
    %v1394 = vpack.c.b16 %v1039, %v1034
    %v1395 = vpack.c.b16 %v1040, %v1035
    %v1396 = vpack.c.b16 %v1041, %v1036
    %v1397 = vpack.c.b16 %v1042, %v1037
    %v1398 = vpack.c.b16 %v1048, %v1043
    %v1399 = vpack.c.b16 %v1049, %v1044
    %v1400 = vpack.c.b16 %v1050, %v1045
    %v1401 = vpack.c.b16 %v1051, %v1046
    %v1402 = vpack.c.b16 %v1052, %v1047
    %v1403 = vpack.c.b16 %v1058, %v1053
    %v1404 = vpack.c.b16 %v1059, %v1054
    %v1405 = vpack.c.b16 %v1060, %v1055
    %v1406 = vpack.c.b16 %v1061, %v1056
    %v1407 = vpack.c.b16 %v1062, %v1057
    %v1408 = vpack.c.b16 %v1068, %v1063
    %v1409 = vpack.c.b16 %v1069, %v1064
    %v1410 = vpack.c.b16 %v1070, %v1065
    %v1411 = vpack.c.b16 %v1071, %v1066
    %v1412 = vpack.c.b16 %v1072, %v1067
    %v1413 = vpack.c.b16 %v1078, %v1073
    %v1414 = vpack.c.b16 %v1079, %v1074
    %v1415 = vpack.c.b16 %v1080, %v1075
    %v1416 = vpack.c.b16 %v1081, %v1076
    %v1417 = vpack.c.b16 %v1082, %v1077
    %v1418 = vpack.c.b16 %v1088, %v1083
    %v1419 = vpack.c.b16 %v1089, %v1084
    %v1420 = vpack.c.b16 %v1090, %v1085
    %v1421 = vpack.c.b16 %v1091, %v1086
    %v1422 = vpack.c.b16 %v1092, %v1087
    %v1423 = vpack.c.b16 %v1098, %v1093
    %v1424 = vpack.c.b16 %v1099, %v1094
    %v1425 = vpack.c.b16 %v1100, %v1095
    %v1426 = vpack.c.b16 %v1101, %v1096
    %v1427 = vpack.c.b16 %v1102, %v1097
    %v1428 = vpack.c.b16 %v1108, %v1103
    %v1429 = vpack.c.b16 %v1109, %v1104
    %v1430 = vpack.c.b16 %v1110, %v1105
    %v1431 = vpack.c.b16 %v1111, %v1106
    %v1432 = vpack.c.b16 %v1112, %v1107
    %v1433 = vpack.c.b16 %v1118, %v1113
    %v1434 = vpack.c.b16 %v1119, %v1114
    %v1435 = vpack.c.b16 %v1120, %v1115
    %v1436 = vpack.c.b16 %v1121, %v1116
    %v1437 = vpack.c.b16 %v1122, %v1117
    %v1438 = vpack.c.b16 %v1128, %v1123
    %v1439 = vpack.c.b16 %v1129, %v1124
    %v1440 = vpack.c.b16 %v1130, %v1125
    %v1441 = vpack.c.b16 %v1131, %v1126
    %v1442 = vpack.c.b16 %v1132, %v1127
    %v1443 = vpack.c.b16 %v1138, %v1133
    %v1444 = vpack.c.b16 %v1139, %v1134
    %v1445 = vpack.c.b16 %v1140, %v1135
    %v1446 = vpack.c.b16 %v1141, %v1136
    %v1447 = vpack.c.b16 %v1142, %v1137
    %v1448 = vpack.c.b16 %v1148, %v1143
    %v1449 = vpack.c.b16 %v1149, %v1144
    %v1450 = vpack.c.b16 %v1150, %v1145
    %v1451 = vpack.c.b16 %v1151, %v1146
    %v1452 = vpack.c.b16 %v1152, %v1147
    %v1453 = vpack.c.b16 %v1158, %v1153
    %v1454 = vpack.c.b16 %v1159, %v1154
    %v1455 = vpack.c.b16 %v1160, %v1155
    %v1456 = vpack.c.b16 %v1161, %v1156
    %v1457 = vpack.c.b16 %v1162, %v1157
    %v1458 = vpack.c.b16 %v1168, %v1163
    %v1459 = vpack.c.b16 %v1169, %v1164
    %v1460 = vpack.c.b16 %v1170, %v1165
    %v1461 = vpack.c.b16 %v1171, %v1166
    %v1462 = vpack.c.b16 %v1172, %v1167
    %v1463 = vpack.c.b16 %v1178, %v1173
    %v1464 = vpack.c.b16 %v1179, %v1174
    %v1465 = vpack.c.b16 %v1180, %v1175
    %v1466 = vpack.c.b16 %v1181, %v1176
    %v1467 = vpack.c.b16 %v1182, %v1177
    %v1468 = vpack.c.b16 %v1188, %v1183
    %v1469 = vpack.c.b16 %v1189, %v1184
    %v1470 = vpack.c.b16 %v1190, %v1185
    %v1471 = vpack.c.b16 %v1191, %v1186
    %v1472 = vpack.c.b16 %v1192, %v1187
    %v1473 = vpack.c.b16 %v1198, %v1193
    %v1474 = vpack.c.b16 %v1199, %v1194
    %v1475 = vpack.c.b16 %v1200, %v1195
    %v1476 = vpack.c.b16 %v1201, %v1196
    %v1477 = vpack.c.b16 %v1202, %v1197
    %v1478 = vpack.c.b16 %v1208, %v1203
    %v1479 = vpack.c.b16 %v1209, %v1204
    %v1480 = vpack.c.b16 %v1210, %v1205
    %v1481 = vpack.c.b16 %v1211, %v1206
    %v1482 = vpack.c.b16 %v1212, %v1207
    %v1483 = vpack.c.b16 %v1218, %v1213
    %v1484 = vpack.c.b16 %v1219, %v1214
    %v1485 = vpack.c.b16 %v1220, %v1215
    %v1486 = vpack.c.b16 %v1221, %v1216
    %v1487 = vpack.c.b16 %v1222, %v1217
    %v1488 = vpack.c.b16 %v1228, %v1223
    %v1489 = vpack.c.b16 %v1229, %v1224
    %v1490 = vpack.c.b16 %v1230, %v1225
    %v1491 = vpack.c.b16 %v1231, %v1226
    %v1492 = vpack.c.b16 %v1232, %v1227
    %v1493 = vpack.c.b16 %v1238, %v1233
    %v1494 = vpack.c.b16 %v1239, %v1234
    %v1495 = vpack.c.b16 %v1240, %v1235
    %v1496 = vpack.c.b16 %v1241, %v1236
    %v1497 = vpack.c.b16 %v1242, %v1237
    %v1498 = vpack.c.b16 %v1248, %v1243
    %v1499 = vpack.c.b16 %v1249, %v1244
    %v1500 = vpack.c.b16 %v1250, %v1245
    %v1501 = vpack.c.b16 %v1251, %v1246
    %v1502 = vpack.c.b16 %v1252, %v1247
    %v1503 = vpack.c.b16 %v1258, %v1253
    %v1504 = vpack.c.b16 %v1259, %v1254
    %v1505 = vpack.c.b16 %v1260, %v1255
    %v1506 = vpack.c.b16 %v1261, %v1256
    %v1507 = vpack.c.b16 %v1262, %v1257
    %vm1753 = vcmask 130048
    %v1755 = vsel %vm1753, %v472, 0
    %1757 = vmatpush.bf16.msra.mxu0 %v1298
    %1758 = vmatpush.bf16.msra.mxu0 %v1293
    %1759 = vmatpush.bf16.msra.mxu0 %v1288
    %1760 = vmatpush.bf16.msra.mxu0 %v1283
    %1761 = vmatpush.bf16.msra.mxu0 %v1278
    %1762 = vmatpush.bf16.msra.mxu0 %v1273
    %1763 = vmatpush.bf16.msra.mxu0 %v1268
    %1764 = vmatpush.bf16.msra.mxu0 %v1263
    %1765 = vmatmul.bf16.gmra.mxu0 %v466
    %v1766 = vpop.f32.mrf.mxu0
    %v1767 = vadd.f32 %v445, %v1766
    %v1768 = vpop.f32.mrf.mxu0
    %1769 = vdwg.mxu0
    %1770 = vmatpush.bf16.msra.mxu0 %v1338
    %1771 = vmatpush.bf16.msra.mxu0 %v1333
    %1772 = vmatpush.bf16.msra.mxu0 %v1328
    %1773 = vmatpush.bf16.msra.mxu0 %v1323
    %1774 = vmatpush.bf16.msra.mxu0 %v1318
    %1775 = vmatpush.bf16.msra.mxu0 %v1313
    %1776 = vmatpush.bf16.msra.mxu0 %v1308
    %1777 = vmatpush.bf16.msra.mxu0 %v1303
    %1778 = vmatmul.bf16.gmra.mxu0 %v467
    %v1779 = vpop.f32.mrf.mxu0
    %v1780 = vadd.f32 %v1767, %v1779
    %v1781 = vpop.f32.mrf.mxu0
    %1782 = vdwg.mxu0
    %1783 = vmatpush.bf16.msra.mxu0 %v1378
    %1784 = vmatpush.bf16.msra.mxu0 %v1373
    %1785 = vmatpush.bf16.msra.mxu0 %v1368
    %1786 = vmatpush.bf16.msra.mxu0 %v1363
    %1787 = vmatpush.bf16.msra.mxu0 %v1358
    %1788 = vmatpush.bf16.msra.mxu0 %v1353
    %1789 = vmatpush.bf16.msra.mxu0 %v1348
    %1790 = vmatpush.bf16.msra.mxu0 %v1343
    %1791 = vmatmul.bf16.gmra.mxu0 %v468
    %v1792 = vpop.f32.mrf.mxu0
    %v1793 = vadd.f32 %v1780, %v1792
    %v1794 = vpop.f32.mrf.mxu0
    %1795 = vdwg.mxu0
    %1796 = vmatpush.bf16.msra.mxu0 %v1418
    %1797 = vmatpush.bf16.msra.mxu0 %v1413
    %1798 = vmatpush.bf16.msra.mxu0 %v1408
    %1799 = vmatpush.bf16.msra.mxu0 %v1403
    %1800 = vmatpush.bf16.msra.mxu0 %v1398
    %1801 = vmatpush.bf16.msra.mxu0 %v1393
    %1802 = vmatpush.bf16.msra.mxu0 %v1388
    %1803 = vmatpush.bf16.msra.mxu0 %v1383
    %1804 = vmatmul.bf16.gmra.mxu0 %v469
    %v1805 = vpop.f32.mrf.mxu0
    %v1806 = vadd.f32 %v1793, %v1805
    %v1807 = vpop.f32.mrf.mxu0
    %1808 = vdwg.mxu0
    %1809 = vmatpush.bf16.msra.mxu0 %v1458
    %1810 = vmatpush.bf16.msra.mxu0 %v1453
    %1811 = vmatpush.bf16.msra.mxu0 %v1448
    %1812 = vmatpush.bf16.msra.mxu0 %v1443
    %1813 = vmatpush.bf16.msra.mxu0 %v1438
    %1814 = vmatpush.bf16.msra.mxu0 %v1433
    %1815 = vmatpush.bf16.msra.mxu0 %v1428
    %1816 = vmatpush.bf16.msra.mxu0 %v1423
    %1817 = vmatmul.bf16.gmra.mxu0 %v470
    %v1818 = vpop.f32.mrf.mxu0
    %v1819 = vadd.f32 %v1806, %v1818
    %v1820 = vpop.f32.mrf.mxu0
    %1821 = vdwg.mxu0
    %1822 = vmatpush.bf16.msra.mxu0 %v1498
    %1823 = vmatpush.bf16.msra.mxu0 %v1493
    %1824 = vmatpush.bf16.msra.mxu0 %v1488
    %1825 = vmatpush.bf16.msra.mxu0 %v1483
    %1826 = vmatpush.bf16.msra.mxu0 %v1478
    %1827 = vmatpush.bf16.msra.mxu0 %v1473
    %1828 = vmatpush.bf16.msra.mxu0 %v1468
    %1829 = vmatpush.bf16.msra.mxu0 %v1463
    %1830 = vmatmul.bf16.gmra.mxu0 %v471
    %v1831 = vpop.f32.mrf.mxu0
    %v1832 = vadd.f32 %v1819, %v1831
    %v1833 = vpop.f32.mrf.mxu0
    %1834 = vdwg.mxu0
    %1835 = vmatpush.bf16.msra.mxu0 0
    %1836 = vmatpush.bf16.msra.mxu0 0
    %1837 = vmatpush.bf16.msra.mxu0 0
    %1838 = vmatpush.bf16.msra.mxu0 0
    %1839 = vmatpush.bf16.msra.mxu0 0
    %1840 = vmatpush.bf16.msra.mxu0 0
    %1841 = vmatpush.bf16.msra.mxu0 0
    %1842 = vmatpush.bf16.msra.mxu0 %v1503
    %1843 = vmatmul.bf16.gmra.mxu0 %v1755
    %v1844 = vpop.f32.mrf.mxu0
    %v1845 = vadd.f32 %v1832, %v1844
    %v1846 = vpop.f32.mrf.mxu0
    %1847 = vdwg.mxu0
    %1848 = vmatpush.bf16.msra.mxu0 %v1299
    %1849 = vmatpush.bf16.msra.mxu0 %v1294
    %1850 = vmatpush.bf16.msra.mxu0 %v1289
    %1851 = vmatpush.bf16.msra.mxu0 %v1284
    %1852 = vmatpush.bf16.msra.mxu0 %v1279
    %1853 = vmatpush.bf16.msra.mxu0 %v1274
    %1854 = vmatpush.bf16.msra.mxu0 %v1269
    %1855 = vmatpush.bf16.msra.mxu0 %v1264
    %1856 = vmatmul.bf16.gmra.mxu0 %v466
    %v1857 = vpop.f32.mrf.mxu0
    %v1858 = vadd.f32 %v446, %v1857
    %v1859 = vpop.f32.mrf.mxu0
    %1860 = vdwg.mxu0
    %1861 = vmatpush.bf16.msra.mxu0 %v1339
    %1862 = vmatpush.bf16.msra.mxu0 %v1334
    %1863 = vmatpush.bf16.msra.mxu0 %v1329
    %1864 = vmatpush.bf16.msra.mxu0 %v1324
    %1865 = vmatpush.bf16.msra.mxu0 %v1319
    %1866 = vmatpush.bf16.msra.mxu0 %v1314
    %1867 = vmatpush.bf16.msra.mxu0 %v1309
    %1868 = vmatpush.bf16.msra.mxu0 %v1304
    %1869 = vmatmul.bf16.gmra.mxu0 %v467
    %v1870 = vpop.f32.mrf.mxu0
    %v1871 = vadd.f32 %v1858, %v1870
    %v1872 = vpop.f32.mrf.mxu0
    %1873 = vdwg.mxu0
    %1874 = vmatpush.bf16.msra.mxu0 %v1379
    %1875 = vmatpush.bf16.msra.mxu0 %v1374
    %1876 = vmatpush.bf16.msra.mxu0 %v1369
    %1877 = vmatpush.bf16.msra.mxu0 %v1364
    %1878 = vmatpush.bf16.msra.mxu0 %v1359
    %1879 = vmatpush.bf16.msra.mxu0 %v1354
    %1880 = vmatpush.bf16.msra.mxu0 %v1349
    %1881 = vmatpush.bf16.msra.mxu0 %v1344
    %1882 = vmatmul.bf16.gmra.mxu0 %v468
    %v1883 = vpop.f32.mrf.mxu0
    %v1884 = vadd.f32 %v1871, %v1883
    %v1885 = vpop.f32.mrf.mxu0
    %1886 = vdwg.mxu0
    %1887 = vmatpush.bf16.msra.mxu0 %v1419
    %1888 = vmatpush.bf16.msra.mxu0 %v1414
    %1889 = vmatpush.bf16.msra.mxu0 %v1409
    %1890 = vmatpush.bf16.msra.mxu0 %v1404
    %1891 = vmatpush.bf16.msra.mxu0 %v1399
    %1892 = vmatpush.bf16.msra.mxu0 %v1394
    %1893 = vmatpush.bf16.msra.mxu0 %v1389
    %1894 = vmatpush.bf16.msra.mxu0 %v1384
    %1895 = vmatmul.bf16.gmra.mxu0 %v469
    %v1896 = vpop.f32.mrf.mxu0
    %v1897 = vadd.f32 %v1884, %v1896
    %v1898 = vpop.f32.mrf.mxu0
    %1899 = vdwg.mxu0
    %1900 = vmatpush.bf16.msra.mxu0 %v1459
    %1901 = vmatpush.bf16.msra.mxu0 %v1454
    %1902 = vmatpush.bf16.msra.mxu0 %v1449
    %1903 = vmatpush.bf16.msra.mxu0 %v1444
    %1904 = vmatpush.bf16.msra.mxu0 %v1439
    %1905 = vmatpush.bf16.msra.mxu0 %v1434
    %1906 = vmatpush.bf16.msra.mxu0 %v1429
    %1907 = vmatpush.bf16.msra.mxu0 %v1424
    %1908 = vmatmul.bf16.gmra.mxu0 %v470
    %v1909 = vpop.f32.mrf.mxu0
    %v1910 = vadd.f32 %v1897, %v1909
    %v1911 = vpop.f32.mrf.mxu0
    %1912 = vdwg.mxu0
    %1913 = vmatpush.bf16.msra.mxu0 %v1499
    %1914 = vmatpush.bf16.msra.mxu0 %v1494
    %1915 = vmatpush.bf16.msra.mxu0 %v1489
    %1916 = vmatpush.bf16.msra.mxu0 %v1484
    %1917 = vmatpush.bf16.msra.mxu0 %v1479
    %1918 = vmatpush.bf16.msra.mxu0 %v1474
    %1919 = vmatpush.bf16.msra.mxu0 %v1469
    %1920 = vmatpush.bf16.msra.mxu0 %v1464
    %1921 = vmatmul.bf16.gmra.mxu0 %v471
    %v1922 = vpop.f32.mrf.mxu0
    %v1923 = vadd.f32 %v1910, %v1922
    %v1924 = vpop.f32.mrf.mxu0
    %1925 = vdwg.mxu0
    %1926 = vmatpush.bf16.msra.mxu0 0
    %1927 = vmatpush.bf16.msra.mxu0 0
    %1928 = vmatpush.bf16.msra.mxu0 0
    %1929 = vmatpush.bf16.msra.mxu0 0
    %1930 = vmatpush.bf16.msra.mxu0 0
    %1931 = vmatpush.bf16.msra.mxu0 0
    %1932 = vmatpush.bf16.msra.mxu0 0
    %1933 = vmatpush.bf16.msra.mxu0 %v1504
    %1934 = vmatmul.bf16.gmra.mxu0 %v1755
    %v1935 = vpop.f32.mrf.mxu0
    %v1936 = vadd.f32 %v1923, %v1935
    %v1937 = vpop.f32.mrf.mxu0
    %1938 = vdwg.mxu0
    %1939 = vmatpush.bf16.msra.mxu0 %v1300
    %1940 = vmatpush.bf16.msra.mxu0 %v1295
    %1941 = vmatpush.bf16.msra.mxu0 %v1290
    %1942 = vmatpush.bf16.msra.mxu0 %v1285
    %1943 = vmatpush.bf16.msra.mxu0 %v1280
    %1944 = vmatpush.bf16.msra.mxu0 %v1275
    %1945 = vmatpush.bf16.msra.mxu0 %v1270
    %1946 = vmatpush.bf16.msra.mxu0 %v1265
    %1947 = vmatmul.bf16.gmra.mxu0 %v466
    %v1948 = vpop.f32.mrf.mxu0
    %v1949 = vadd.f32 %v447, %v1948
    %v1950 = vpop.f32.mrf.mxu0
    %1951 = vdwg.mxu0
    %1952 = vmatpush.bf16.msra.mxu0 %v1340
    %1953 = vmatpush.bf16.msra.mxu0 %v1335
    %1954 = vmatpush.bf16.msra.mxu0 %v1330
    %1955 = vmatpush.bf16.msra.mxu0 %v1325
    %1956 = vmatpush.bf16.msra.mxu0 %v1320
    %1957 = vmatpush.bf16.msra.mxu0 %v1315
    %1958 = vmatpush.bf16.msra.mxu0 %v1310
    %1959 = vmatpush.bf16.msra.mxu0 %v1305
    %1960 = vmatmul.bf16.gmra.mxu0 %v467
    %v1961 = vpop.f32.mrf.mxu0
    %v1962 = vadd.f32 %v1949, %v1961
    %v1963 = vpop.f32.mrf.mxu0
    %1964 = vdwg.mxu0
    %1965 = vmatpush.bf16.msra.mxu0 %v1380
    %1966 = vmatpush.bf16.msra.mxu0 %v1375
    %1967 = vmatpush.bf16.msra.mxu0 %v1370
    %1968 = vmatpush.bf16.msra.mxu0 %v1365
    %1969 = vmatpush.bf16.msra.mxu0 %v1360
    %1970 = vmatpush.bf16.msra.mxu0 %v1355
    %1971 = vmatpush.bf16.msra.mxu0 %v1350
    %1972 = vmatpush.bf16.msra.mxu0 %v1345
    %1973 = vmatmul.bf16.gmra.mxu0 %v468
    %v1974 = vpop.f32.mrf.mxu0
    %v1975 = vadd.f32 %v1962, %v1974
    %v1976 = vpop.f32.mrf.mxu0
    %1977 = vdwg.mxu0
    %1978 = vmatpush.bf16.msra.mxu0 %v1420
    %1979 = vmatpush.bf16.msra.mxu0 %v1415
    %1980 = vmatpush.bf16.msra.mxu0 %v1410
    %1981 = vmatpush.bf16.msra.mxu0 %v1405
    %1982 = vmatpush.bf16.msra.mxu0 %v1400
    %1983 = vmatpush.bf16.msra.mxu0 %v1395
    %1984 = vmatpush.bf16.msra.mxu0 %v1390
    %1985 = vmatpush.bf16.msra.mxu0 %v1385
    %1986 = vmatmul.bf16.gmra.mxu0 %v469
    %v1987 = vpop.f32.mrf.mxu0
    %v1988 = vadd.f32 %v1975, %v1987
    %v1989 = vpop.f32.mrf.mxu0
    %1990 = vdwg.mxu0
    %1991 = vmatpush.bf16.msra.mxu0 %v1460
    %1992 = vmatpush.bf16.msra.mxu0 %v1455
    %1993 = vmatpush.bf16.msra.mxu0 %v1450
    %1994 = vmatpush.bf16.msra.mxu0 %v1445
    %1995 = vmatpush.bf16.msra.mxu0 %v1440
    %1996 = vmatpush.bf16.msra.mxu0 %v1435
    %1997 = vmatpush.bf16.msra.mxu0 %v1430
    %1998 = vmatpush.bf16.msra.mxu0 %v1425
    %1999 = vmatmul.bf16.gmra.mxu0 %v470
    %v2000 = vpop.f32.mrf.mxu0
    %v2001 = vadd.f32 %v1988, %v2000
    %v2002 = vpop.f32.mrf.mxu0
    %2003 = vdwg.mxu0
    %2004 = vmatpush.bf16.msra.mxu0 %v1500
    %2005 = vmatpush.bf16.msra.mxu0 %v1495
    %2006 = vmatpush.bf16.msra.mxu0 %v1490
    %2007 = vmatpush.bf16.msra.mxu0 %v1485
    %2008 = vmatpush.bf16.msra.mxu0 %v1480
    %2009 = vmatpush.bf16.msra.mxu0 %v1475
    %2010 = vmatpush.bf16.msra.mxu0 %v1470
    %2011 = vmatpush.bf16.msra.mxu0 %v1465
    %2012 = vmatmul.bf16.gmra.mxu0 %v471
    %v2013 = vpop.f32.mrf.mxu0
    %v2014 = vadd.f32 %v2001, %v2013
    %v2015 = vpop.f32.mrf.mxu0
    %2016 = vdwg.mxu0
    %2017 = vmatpush.bf16.msra.mxu0 0
    %2018 = vmatpush.bf16.msra.mxu0 0
    %2019 = vmatpush.bf16.msra.mxu0 0
    %2020 = vmatpush.bf16.msra.mxu0 0
    %2021 = vmatpush.bf16.msra.mxu0 0
    %2022 = vmatpush.bf16.msra.mxu0 0
    %2023 = vmatpush.bf16.msra.mxu0 0
    %2024 = vmatpush.bf16.msra.mxu0 %v1505
    %2025 = vmatmul.bf16.gmra.mxu0 %v1755
    %v2026 = vpop.f32.mrf.mxu0
    %v2027 = vadd.f32 %v2014, %v2026
    %v2028 = vpop.f32.mrf.mxu0
    %2029 = vdwg.mxu0
    %2030 = vmatpush.bf16.msra.mxu0 %v1301
    %2031 = vmatpush.bf16.msra.mxu0 %v1296
    %2032 = vmatpush.bf16.msra.mxu0 %v1291
    %2033 = vmatpush.bf16.msra.mxu0 %v1286
    %2034 = vmatpush.bf16.msra.mxu0 %v1281
    %2035 = vmatpush.bf16.msra.mxu0 %v1276
    %2036 = vmatpush.bf16.msra.mxu0 %v1271
    %2037 = vmatpush.bf16.msra.mxu0 %v1266
    %2038 = vmatmul.bf16.gmra.mxu0 %v466
    %v2039 = vpop.f32.mrf.mxu0
    %v2040 = vadd.f32 %v448, %v2039
    %v2041 = vpop.f32.mrf.mxu0
    %2042 = vdwg.mxu0
    %2043 = vmatpush.bf16.msra.mxu0 %v1341
    %2044 = vmatpush.bf16.msra.mxu0 %v1336
    %2045 = vmatpush.bf16.msra.mxu0 %v1331
    %2046 = vmatpush.bf16.msra.mxu0 %v1326
    %2047 = vmatpush.bf16.msra.mxu0 %v1321
    %2048 = vmatpush.bf16.msra.mxu0 %v1316
    %2049 = vmatpush.bf16.msra.mxu0 %v1311
    %2050 = vmatpush.bf16.msra.mxu0 %v1306
    %2051 = vmatmul.bf16.gmra.mxu0 %v467
    %v2052 = vpop.f32.mrf.mxu0
    %v2053 = vadd.f32 %v2040, %v2052
    %v2054 = vpop.f32.mrf.mxu0
    %2055 = vdwg.mxu0
    %2056 = vmatpush.bf16.msra.mxu0 %v1381
    %2057 = vmatpush.bf16.msra.mxu0 %v1376
    %2058 = vmatpush.bf16.msra.mxu0 %v1371
    %2059 = vmatpush.bf16.msra.mxu0 %v1366
    %2060 = vmatpush.bf16.msra.mxu0 %v1361
    %2061 = vmatpush.bf16.msra.mxu0 %v1356
    %2062 = vmatpush.bf16.msra.mxu0 %v1351
    %2063 = vmatpush.bf16.msra.mxu0 %v1346
    %2064 = vmatmul.bf16.gmra.mxu0 %v468
    %v2065 = vpop.f32.mrf.mxu0
    %v2066 = vadd.f32 %v2053, %v2065
    %v2067 = vpop.f32.mrf.mxu0
    %2068 = vdwg.mxu0
    %2069 = vmatpush.bf16.msra.mxu0 %v1421
    %2070 = vmatpush.bf16.msra.mxu0 %v1416
    %2071 = vmatpush.bf16.msra.mxu0 %v1411
    %2072 = vmatpush.bf16.msra.mxu0 %v1406
    %2073 = vmatpush.bf16.msra.mxu0 %v1401
    %2074 = vmatpush.bf16.msra.mxu0 %v1396
    %2075 = vmatpush.bf16.msra.mxu0 %v1391
    %2076 = vmatpush.bf16.msra.mxu0 %v1386
    %2077 = vmatmul.bf16.gmra.mxu0 %v469
    %v2078 = vpop.f32.mrf.mxu0
    %v2079 = vadd.f32 %v2066, %v2078
    %v2080 = vpop.f32.mrf.mxu0
    %2081 = vdwg.mxu0
    %2082 = vmatpush.bf16.msra.mxu0 %v1461
    %2083 = vmatpush.bf16.msra.mxu0 %v1456
    %2084 = vmatpush.bf16.msra.mxu0 %v1451
    %2085 = vmatpush.bf16.msra.mxu0 %v1446
    %2086 = vmatpush.bf16.msra.mxu0 %v1441
    %2087 = vmatpush.bf16.msra.mxu0 %v1436
    %2088 = vmatpush.bf16.msra.mxu0 %v1431
    %2089 = vmatpush.bf16.msra.mxu0 %v1426
    %2090 = vmatmul.bf16.gmra.mxu0 %v470
    %v2091 = vpop.f32.mrf.mxu0
    %v2092 = vadd.f32 %v2079, %v2091
    %v2093 = vpop.f32.mrf.mxu0
    %2094 = vdwg.mxu0
    %2095 = vmatpush.bf16.msra.mxu0 %v1501
    %2096 = vmatpush.bf16.msra.mxu0 %v1496
    %2097 = vmatpush.bf16.msra.mxu0 %v1491
    %2098 = vmatpush.bf16.msra.mxu0 %v1486
    %2099 = vmatpush.bf16.msra.mxu0 %v1481
    %2100 = vmatpush.bf16.msra.mxu0 %v1476
    %2101 = vmatpush.bf16.msra.mxu0 %v1471
    %2102 = vmatpush.bf16.msra.mxu0 %v1466
    %2103 = vmatmul.bf16.gmra.mxu0 %v471
    %v2104 = vpop.f32.mrf.mxu0
    %v2105 = vadd.f32 %v2092, %v2104
    %v2106 = vpop.f32.mrf.mxu0
    %2107 = vdwg.mxu0
    %2108 = vmatpush.bf16.msra.mxu0 0
    %2109 = vmatpush.bf16.msra.mxu0 0
    %2110 = vmatpush.bf16.msra.mxu0 0
    %2111 = vmatpush.bf16.msra.mxu0 0
    %2112 = vmatpush.bf16.msra.mxu0 0
    %2113 = vmatpush.bf16.msra.mxu0 0
    %2114 = vmatpush.bf16.msra.mxu0 0
    %2115 = vmatpush.bf16.msra.mxu0 %v1506
    %2116 = vmatmul.bf16.gmra.mxu0 %v1755
    %v2117 = vpop.f32.mrf.mxu0
    %v2118 = vadd.f32 %v2105, %v2117
    %v2119 = vpop.f32.mrf.mxu0
    %2120 = vdwg.mxu0
    %2121 = vmatpush.bf16.msra.mxu0 %v1302
    %2122 = vmatpush.bf16.msra.mxu0 %v1297
    %2123 = vmatpush.bf16.msra.mxu0 %v1292
    %2124 = vmatpush.bf16.msra.mxu0 %v1287
    %2125 = vmatpush.bf16.msra.mxu0 %v1282
    %2126 = vmatpush.bf16.msra.mxu0 %v1277
    %2127 = vmatpush.bf16.msra.mxu0 %v1272
    %2128 = vmatpush.bf16.msra.mxu0 %v1267
    %2129 = vmatmul.bf16.gmra.mxu0 %v466
    %v2130 = vpop.f32.mrf.mxu0
    %v2131 = vadd.f32 %v449, %v2130
    %v2132 = vpop.f32.mrf.mxu0
    %2133 = vdwg.mxu0
    %2134 = vmatpush.bf16.msra.mxu0 %v1342
    %2135 = vmatpush.bf16.msra.mxu0 %v1337
    %2136 = vmatpush.bf16.msra.mxu0 %v1332
    %2137 = vmatpush.bf16.msra.mxu0 %v1327
    %2138 = vmatpush.bf16.msra.mxu0 %v1322
    %2139 = vmatpush.bf16.msra.mxu0 %v1317
    %2140 = vmatpush.bf16.msra.mxu0 %v1312
    %2141 = vmatpush.bf16.msra.mxu0 %v1307
    %2142 = vmatmul.bf16.gmra.mxu0 %v467
    %v2143 = vpop.f32.mrf.mxu0
    %v2144 = vadd.f32 %v2131, %v2143
    %v2145 = vpop.f32.mrf.mxu0
    %2146 = vdwg.mxu0
    %2147 = vmatpush.bf16.msra.mxu0 %v1382
    %2148 = vmatpush.bf16.msra.mxu0 %v1377
    %2149 = vmatpush.bf16.msra.mxu0 %v1372
    %2150 = vmatpush.bf16.msra.mxu0 %v1367
    %2151 = vmatpush.bf16.msra.mxu0 %v1362
    %2152 = vmatpush.bf16.msra.mxu0 %v1357
    %2153 = vmatpush.bf16.msra.mxu0 %v1352
    %2154 = vmatpush.bf16.msra.mxu0 %v1347
    %2155 = vmatmul.bf16.gmra.mxu0 %v468
    %v2156 = vpop.f32.mrf.mxu0
    %v2157 = vadd.f32 %v2144, %v2156
    %v2158 = vpop.f32.mrf.mxu0
    %2159 = vdwg.mxu0
    %2160 = vmatpush.bf16.msra.mxu0 %v1422
    %2161 = vmatpush.bf16.msra.mxu0 %v1417
    %2162 = vmatpush.bf16.msra.mxu0 %v1412
    %2163 = vmatpush.bf16.msra.mxu0 %v1407
    %2164 = vmatpush.bf16.msra.mxu0 %v1402
    %2165 = vmatpush.bf16.msra.mxu0 %v1397
    %2166 = vmatpush.bf16.msra.mxu0 %v1392
    %2167 = vmatpush.bf16.msra.mxu0 %v1387
    %2168 = vmatmul.bf16.gmra.mxu0 %v469
    %v2169 = vpop.f32.mrf.mxu0
    %v2170 = vadd.f32 %v2157, %v2169
    %v2171 = vpop.f32.mrf.mxu0
    %2172 = vdwg.mxu0
    %2173 = vmatpush.bf16.msra.mxu0 %v1462
    %2174 = vmatpush.bf16.msra.mxu0 %v1457
    %2175 = vmatpush.bf16.msra.mxu0 %v1452
    %2176 = vmatpush.bf16.msra.mxu0 %v1447
    %2177 = vmatpush.bf16.msra.mxu0 %v1442
    %2178 = vmatpush.bf16.msra.mxu0 %v1437
    %2179 = vmatpush.bf16.msra.mxu0 %v1432
    %2180 = vmatpush.bf16.msra.mxu0 %v1427
    %2181 = vmatmul.bf16.gmra.mxu0 %v470
    %v2182 = vpop.f32.mrf.mxu0
    %v2183 = vadd.f32 %v2170, %v2182
    %v2184 = vpop.f32.mrf.mxu0
    %2185 = vdwg.mxu0
    %2186 = vmatpush.bf16.msra.mxu0 %v1502
    %2187 = vmatpush.bf16.msra.mxu0 %v1497
    %2188 = vmatpush.bf16.msra.mxu0 %v1492
    %2189 = vmatpush.bf16.msra.mxu0 %v1487
    %2190 = vmatpush.bf16.msra.mxu0 %v1482
    %2191 = vmatpush.bf16.msra.mxu0 %v1477
    %2192 = vmatpush.bf16.msra.mxu0 %v1472
    %2193 = vmatpush.bf16.msra.mxu0 %v1467
    %2194 = vmatmul.bf16.gmra.mxu0 %v471
    %v2195 = vpop.f32.mrf.mxu0
    %v2196 = vadd.f32 %v2183, %v2195
    %v2197 = vpop.f32.mrf.mxu0
    %2198 = vdwg.mxu0
    %2199 = vmatpush.bf16.msra.mxu0 0
    %2200 = vmatpush.bf16.msra.mxu0 0
    %2201 = vmatpush.bf16.msra.mxu0 0
    %2202 = vmatpush.bf16.msra.mxu0 0
    %2203 = vmatpush.bf16.msra.mxu0 0
    %2204 = vmatpush.bf16.msra.mxu0 0
    %2205 = vmatpush.bf16.msra.mxu0 0
    %2206 = vmatpush.bf16.msra.mxu0 %v1507
    %2207 = vmatmul.bf16.gmra.mxu0 %v1755
    %v2208 = vpop.f32.mrf.mxu0
    %v2209 = vadd.f32 %v2196, %v2208
    %v2210 = vpop.f32.mrf.mxu0
    %2211 = vdwg.mxu0
    %v2212 = vmax.f32 %v1845, 0.0
    %v2213 = vmax.f32 %v1936, 0.0
    %v2214 = vmax.f32 %v2027, 0.0
    %v2215 = vmax.f32 %v2118, 0.0
    %v2216 = vmax.f32 %v2209, 0.0
    %v2217 = vpack.c.bf16 %v2212, %v2212
    %v2218 = vpack.c.bf16 %v2213, %v2213
    %v2219 = vpack.c.bf16 %v2214, %v2214
    %v2220 = vpack.c.bf16 %v2215, %v2215
    %v2221 = vpack.c.bf16 %v2216, %v2216
    %v2222 = vld [vmem:[#allocation8] sm:$0xff]
    %v2223 = vld [vmem:[#allocation8 + $0x8] sm:$0xf]
    %v2224 = vld [vmem:[#allocation8 + $0xc] sm:$0xff]
    %v2225 = vld [vmem:[#allocation8 + $0x14] sm:$0xf]
    %v2226 = vld [vmem:[#allocation8 + $0x18] sm:$0xff]
    %v2227 = vld [vmem:[#allocation8 + $0x20] sm:$0xf]
    %v2228 = vld [vmem:[#allocation8 + $0x24] sm:$0xff]
    %v2229 = vld [vmem:[#allocation8 + $0x2c] sm:$0xf]
    %v2230 = vld [vmem:[#allocation8 + $0x30] sm:$0xff]
    %v2231 = vld [vmem:[#allocation8 + $0x38] sm:$0xf]
    %v2232 = vld [vmem:[#allocation8 + $0x3c] sm:$0xff]
    %v2233 = vld [vmem:[#allocation8 + $0x44] sm:$0xf]
    %v2234 = vld [vmem:[#allocation8 + $0x48] sm:$0xff]
    %v2235 = vld [vmem:[#allocation8 + $0x50] sm:$0xf]
    %v2236 = vld [vmem:[#allocation8 + $0x54] sm:$0xff]
    %v2237 = vld [vmem:[#allocation8 + $0x5c] sm:$0xf]
    %v2238 = vld [vmem:[#allocation8 + $0x60] sm:$0xff]
    %v2239 = vld [vmem:[#allocation8 + $0x68] sm:$0xf]
    %v2240 = vld [vmem:[#allocation8 + $0x6c] sm:$0xff]
    %v2241 = vld [vmem:[#allocation8 + $0x74] sm:$0xf]
    %v2242 = vld [vmem:[#allocation8 + $0x78] sm:$0xff]
    %v2243 = vld [vmem:[#allocation8 + $0x80] sm:$0xf]
    %v2244 = vld [vmem:[#allocation8 + $0x84] sm:$0xff]
    %v2245 = vld [vmem:[#allocation8 + $0x8c] sm:$0xf]
    %v2246 = vld [vmem:[#allocation8 + $0x90] sm:$0xff]
    %v2247 = vld [vmem:[#allocation8 + $0x98] sm:$0xf]
    %v2248 = vld [vmem:[#allocation8 + $0x9c] sm:$0xff]
    %v2249 = vld [vmem:[#allocation8 + $0xa4] sm:$0xf]
    %v2250 = vld [vmem:[#allocation8 + $0xa8] sm:$0xff]
    %v2251 = vld [vmem:[#allocation8 + $0xb0] sm:$0xf]
    %v2252 = vld [vmem:[#allocation8 + $0xb4] sm:$0xff]
    %v2253 = vld [vmem:[#allocation8 + $0xbc] sm:$0xf]
    %v2254 = vld [vmem:[#allocation8 + $0xc0] sm:$0xff]
    %v2255 = vld [vmem:[#allocation8 + $0xc8] sm:$0xf]
    %v2256 = vld [vmem:[#allocation8 + $0xcc] sm:$0xff]
    %v2257 = vld [vmem:[#allocation8 + $0xd4] sm:$0xf]
    %v2258 = vld [vmem:[#allocation8 + $0xd8] sm:$0xff]
    %v2259 = vld [vmem:[#allocation8 + $0xe0] sm:$0xf]
    %v2260 = vld [vmem:[#allocation8 + $0xe4] sm:$0xff]
    %v2261 = vld [vmem:[#allocation8 + $0xec] sm:$0xf]
    %v2262 = vld [vmem:[#allocation8 + $0xf0] sm:$0xff]
    %v2263 = vld [vmem:[#allocation8 + $0xf8] sm:$0xf]
    %v2264 = vld [vmem:[#allocation8 + $0xfc] sm:$0xff]
    %v2265 = vld [vmem:[#allocation8 + $0x104] sm:$0xf]
    %v2266 = vld [vmem:[#allocation8 + $0x108] sm:$0xff]
    %v2267 = vld [vmem:[#allocation8 + $0x110] sm:$0xf]
    %v2268 = vld [vmem:[#allocation8 + $0x114] sm:$0xff]
    %v2269 = vld [vmem:[#allocation8 + $0x11c] sm:$0xf]
    %v2270 = vld [vmem:[#allocation8 + $0x120] sm:$0xff]
    %v2271 = vld [vmem:[#allocation8 + $0x128] sm:$0xf]
    %v2272 = vld [vmem:[#allocation8 + $0x12c] sm:$0xff]
    %v2273 = vld [vmem:[#allocation8 + $0x134] sm:$0xf]
    %v2274 = vld [vmem:[#allocation8 + $0x138] sm:$0xff]
    %v2275 = vld [vmem:[#allocation8 + $0x140] sm:$0xf]
    %v2276 = vld [vmem:[#allocation8 + $0x144] sm:$0xff]
    %v2277 = vld [vmem:[#allocation8 + $0x14c] sm:$0xf]
    %v2278 = vld [vmem:[#allocation8 + $0x150] sm:$0xff]
    %v2279 = vld [vmem:[#allocation8 + $0x158] sm:$0xf]
    %v2280 = vld [vmem:[#allocation8 + $0x15c] sm:$0xff]
    %v2281 = vld [vmem:[#allocation8 + $0x164] sm:$0xf]
    %v2282 = vld [vmem:[#allocation8 + $0x168] sm:$0xff]
    %v2283 = vld [vmem:[#allocation8 + $0x170] sm:$0xf]
    %v2284 = vld [vmem:[#allocation8 + $0x174] sm:$0xff]
    %v2285 = vld [vmem:[#allocation8 + $0x17c] sm:$0xf]
    %v2286 = vld [vmem:[#allocation8 + $0x180] sm:$0xff]
    %v2287 = vld [vmem:[#allocation8 + $0x188] sm:$0xf]
    %v2288 = vld [vmem:[#allocation8 + $0x18c] sm:$0xff]
    %v2289 = vld [vmem:[#allocation8 + $0x194] sm:$0xf]
    %v2290 = vld [vmem:[#allocation8 + $0x198] sm:$0xff]
    %v2291 = vld [vmem:[#allocation8 + $0x1a0] sm:$0xf]
    %v2292 = vld [vmem:[#allocation8 + $0x1a4] sm:$0xff]
    %v2293 = vld [vmem:[#allocation8 + $0x1ac] sm:$0xf]
    %v2294 = vld [vmem:[#allocation8 + $0x1b0] sm:$0xff]
    %v2295 = vld [vmem:[#allocation8 + $0x1b8] sm:$0xf]
    %v2296 = vld [vmem:[#allocation8 + $0x1bc] sm:$0xff]
    %v2297 = vld [vmem:[#allocation8 + $0x1c4] sm:$0xf]
    %v2298 = vld [vmem:[#allocation8 + $0x1c8] sm:$0xff]
    %v2299 = vld [vmem:[#allocation8 + $0x1d0] sm:$0xf]
    %v2300 = vld [vmem:[#allocation8 + $0x1d4] sm:$0xff]
    %v2301 = vld [vmem:[#allocation8 + $0x1dc] sm:$0xf]
    %v2302 = vld [vmem:[#allocation8 + $0x1e0] sm:$0xff]
    %v2303 = vld [vmem:[#allocation8 + $0x1e8] sm:$0xf]
    %v2304 = vld [vmem:[#allocation8 + $0x1ec] sm:$0xff]
    %v2305 = vld [vmem:[#allocation8 + $0x1f4] sm:$0xf]
    %v2306 = vld [vmem:[#allocation8 + $0x1f8] sm:$0xff]
    %v2307 = vld [vmem:[#allocation8 + $0x200] sm:$0xf]
    %v2308 = vld [vmem:[#allocation8 + $0x204] sm:$0xff]
    %v2309 = vld [vmem:[#allocation8 + $0x20c] sm:$0xf]
    %v2310 = vld [vmem:[#allocation8 + $0x210] sm:$0xff]
    %v2311 = vld [vmem:[#allocation8 + $0x218] sm:$0xf]
    %v2312 = vld [vmem:[#allocation8 + $0x21c] sm:$0xff]
    %v2313 = vld [vmem:[#allocation8 + $0x224] sm:$0xf]
    %v2314 = vld [vmem:[#allocation8 + $0x228] sm:$0xff]
    %v2315 = vld [vmem:[#allocation8 + $0x230] sm:$0xf]
    %v2316 = vld [vmem:[#allocation8 + $0x234] sm:$0xff]
    %v2317 = vld [vmem:[#allocation8 + $0x23c] sm:$0xf]
    %v2318 = vld [vmem:[#allocation8 + $0x240] sm:$0xff]
    %v2319 = vld [vmem:[#allocation8 + $0x248] sm:$0xf]
    %v2320 = vld [vmem:[#allocation8 + $0x24c] sm:$0xff]
    %v2321 = vld [vmem:[#allocation8 + $0x254] sm:$0xf]
    %v2322 = vld [vmem:[#allocation8 + $0x258] sm:$0xff]
    %v2323 = vld [vmem:[#allocation8 + $0x260] sm:$0xf]
    %v2324 = vld [vmem:[#allocation8 + $0x264] sm:$0xff]
    %v2325 = vld [vmem:[#allocation8 + $0x26c] sm:$0xf]
    %v2326 = vld [vmem:[#allocation8 + $0x270] sm:$0xff]
    %v2327 = vld [vmem:[#allocation8 + $0x278] sm:$0xf]
    %v2328 = vld [vmem:[#allocation8 + $0x27c] sm:$0xff]
    %v2329 = vld [vmem:[#allocation8 + $0x284] sm:$0xf]
    %v2330 = vld [vmem:[#allocation8 + $0x288] sm:$0xff]
    %v2331 = vld [vmem:[#allocation8 + $0x290] sm:$0xf]
    %v2332 = vld [vmem:[#allocation8 + $0x294] sm:$0xff]
    %v2333 = vld [vmem:[#allocation8 + $0x29c] sm:$0xf]
    %v2334 = vld [vmem:[#allocation8 + $0x2a0] sm:$0xff]
    %v2335 = vld [vmem:[#allocation8 + $0x2a8] sm:$0xf]
    %v2336 = vld [vmem:[#allocation8 + $0x2ac] sm:$0xff]
    %v2337 = vld [vmem:[#allocation8 + $0x2b4] sm:$0xf]
    %v2338 = vld [vmem:[#allocation8 + $0x2b8] sm:$0xff]
    %v2339 = vld [vmem:[#allocation8 + $0x2c0] sm:$0xf]
    %v2340 = vld [vmem:[#allocation8 + $0x2c4] sm:$0xff]
    %v2341 = vld [vmem:[#allocation8 + $0x2cc] sm:$0xf]
    %v2342 = vld [vmem:[#allocation8 + $0x2d0] sm:$0xff]
    %v2343 = vld [vmem:[#allocation8 + $0x2d8] sm:$0xf]
    %v2344 = vld [vmem:[#allocation8 + $0x2dc] sm:$0xff]
    %v2345 = vld [vmem:[#allocation8 + $0x2e4] sm:$0xf]
    %v2346 = vld [vmem:[#allocation8 + $0x2e8] sm:$0xff]
    %v2347 = vld [vmem:[#allocation8 + $0x2f0] sm:$0xf]
    %v2348 = vld [vmem:[#allocation8 + $0x2f4] sm:$0xff]
    %v2349 = vld [vmem:[#allocation8 + $0x2fc] sm:$0xf]
    %v2350 = vld [vmem:[#allocation8 + $0x300] sm:$0xff]
    %v2351 = vld [vmem:[#allocation8 + $0x308] sm:$0xf]
    %v2352 = vld [vmem:[#allocation8 + $0x30c] sm:$0xff]
    %v2353 = vld [vmem:[#allocation8 + $0x314] sm:$0xf]
    %v2354 = vld [vmem:[#allocation8 + $0x318] sm:$0xff]
    %v2355 = vld [vmem:[#allocation8 + $0x320] sm:$0xf]
    %v2356 = vld [vmem:[#allocation8 + $0x324] sm:$0xff]
    %v2357 = vld [vmem:[#allocation8 + $0x32c] sm:$0xf]
    %v2358 = vld [vmem:[#allocation8 + $0x330] sm:$0xff]
    %v2359 = vld [vmem:[#allocation8 + $0x338] sm:$0xf]
    %v2360 = vld [vmem:[#allocation8 + $0x33c] sm:$0xff]
    %v2361 = vld [vmem:[#allocation8 + $0x344] sm:$0xf]
    %v2362 = vld [vmem:[#allocation8 + $0x348] sm:$0xff]
    %v2363 = vld [vmem:[#allocation8 + $0x350] sm:$0xf]
    %v2364 = vld [vmem:[#allocation8 + $0x354] sm:$0xff]
    %v2365 = vld [vmem:[#allocation8 + $0x35c] sm:$0xf]
    %v2366 = vld [vmem:[#allocation8 + $0x360] sm:$0xff]
    %v2367 = vld [vmem:[#allocation8 + $0x368] sm:$0xf]
    %v2368 = vld [vmem:[#allocation8 + $0x36c] sm:$0xff]
    %v2369 = vld [vmem:[#allocation8 + $0x374] sm:$0xf]
    %v2370 = vld [vmem:[#allocation8 + $0x378] sm:$0xff]
    %v2371 = vld [vmem:[#allocation8 + $0x380] sm:$0xf]
    %v2372 = vld [vmem:[#allocation8 + $0x384] sm:$0xff]
    %v2373 = vld [vmem:[#allocation8 + $0x38c] sm:$0xf]
    %v2374 = vld [vmem:[#allocation8 + $0x390] sm:$0xff]
    %v2375 = vld [vmem:[#allocation8 + $0x398] sm:$0xf]
    %v2376 = vld [vmem:[#allocation8 + $0x39c] sm:$0xff]
    %v2377 = vld [vmem:[#allocation8 + $0x3a4] sm:$0xf]
    %v2378 = vld [vmem:[#allocation8 + $0x3a8] sm:$0xff]
    %v2379 = vld [vmem:[#allocation8 + $0x3b0] sm:$0xf]
    %v2380 = vld [vmem:[#allocation8 + $0x3b4] sm:$0xff]
    %v2381 = vld [vmem:[#allocation8 + $0x3bc] sm:$0xf]
    %v2382 = vld [vmem:[%s4] sm:$0x7]
    %v2384 = vperm.slane %v2382, 0
    %v2385 = vperm.slane %v2382, 1
    %v2386 = vperm.slane %v2382, 2
    %v2550 = vunpack.c.l.b16 %v2222
    %v2551 = vunpack.c.h.b16 %v2222
    %v2552 = vunpack.c.l.b16 %v2223
    %v2553 = vunpack.c.l.b16 %v2224
    %v2554 = vunpack.c.h.b16 %v2224
    %v2555 = vunpack.c.l.b16 %v2225
    %v2556 = vunpack.c.l.b16 %v2226
    %v2557 = vunpack.c.h.b16 %v2226
    %v2558 = vunpack.c.l.b16 %v2227
    %v2559 = vunpack.c.l.b16 %v2228
    %v2560 = vunpack.c.h.b16 %v2228
    %v2561 = vunpack.c.l.b16 %v2229
    %v2562 = vunpack.c.l.b16 %v2230
    %v2563 = vunpack.c.h.b16 %v2230
    %v2564 = vunpack.c.l.b16 %v2231
    %v2565 = vunpack.c.l.b16 %v2232
    %v2566 = vunpack.c.h.b16 %v2232
    %v2567 = vunpack.c.l.b16 %v2233
    %v2568 = vunpack.c.l.b16 %v2234
    %v2569 = vunpack.c.h.b16 %v2234
    %v2570 = vunpack.c.l.b16 %v2235
    %v2571 = vunpack.c.l.b16 %v2236
    %v2572 = vunpack.c.h.b16 %v2236
    %v2573 = vunpack.c.l.b16 %v2237
    %v2574 = vunpack.c.l.b16 %v2238
    %v2575 = vunpack.c.h.b16 %v2238
    %v2576 = vunpack.c.l.b16 %v2239
    %v2577 = vunpack.c.l.b16 %v2240
    %v2578 = vunpack.c.h.b16 %v2240
    %v2579 = vunpack.c.l.b16 %v2241
    %v2580 = vunpack.c.l.b16 %v2242
    %v2581 = vunpack.c.h.b16 %v2242
    %v2582 = vunpack.c.l.b16 %v2243
    %v2583 = vunpack.c.l.b16 %v2244
    %v2584 = vunpack.c.h.b16 %v2244
    %v2585 = vunpack.c.l.b16 %v2245
    %v2586 = vunpack.c.l.b16 %v2246
    %v2587 = vunpack.c.h.b16 %v2246
    %v2588 = vunpack.c.l.b16 %v2247
    %v2589 = vunpack.c.l.b16 %v2248
    %v2590 = vunpack.c.h.b16 %v2248
    %v2591 = vunpack.c.l.b16 %v2249
    %v2592 = vunpack.c.l.b16 %v2250
    %v2593 = vunpack.c.h.b16 %v2250
    %v2594 = vunpack.c.l.b16 %v2251
    %v2595 = vunpack.c.l.b16 %v2252
    %v2596 = vunpack.c.h.b16 %v2252
    %v2597 = vunpack.c.l.b16 %v2253
    %v2598 = vunpack.c.l.b16 %v2254
    %v2599 = vunpack.c.h.b16 %v2254
    %v2600 = vunpack.c.l.b16 %v2255
    %v2601 = vunpack.c.l.b16 %v2256
    %v2602 = vunpack.c.h.b16 %v2256
    %v2603 = vunpack.c.l.b16 %v2257
    %v2604 = vunpack.c.l.b16 %v2258
    %v2605 = vunpack.c.h.b16 %v2258
    %v2606 = vunpack.c.l.b16 %v2259
    %v2607 = vunpack.c.l.b16 %v2260
    %v2608 = vunpack.c.h.b16 %v2260
    %v2609 = vunpack.c.l.b16 %v2261
    %v2610 = vunpack.c.l.b16 %v2262
    %v2611 = vunpack.c.h.b16 %v2262
    %v2612 = vunpack.c.l.b16 %v2263
    %v2613 = vunpack.c.l.b16 %v2264
    %v2614 = vunpack.c.h.b16 %v2264
    %v2615 = vunpack.c.l.b16 %v2265
    %v2616 = vunpack.c.l.b16 %v2266
    %v2617 = vunpack.c.h.b16 %v2266
    %v2618 = vunpack.c.l.b16 %v2267
    %v2619 = vunpack.c.l.b16 %v2268
    %v2620 = vunpack.c.h.b16 %v2268
    %v2621 = vunpack.c.l.b16 %v2269
    %v2622 = vunpack.c.l.b16 %v2270
    %v2623 = vunpack.c.h.b16 %v2270
    %v2624 = vunpack.c.l.b16 %v2271
    %v2625 = vunpack.c.l.b16 %v2272
    %v2626 = vunpack.c.h.b16 %v2272
    %v2627 = vunpack.c.l.b16 %v2273
    %v2628 = vunpack.c.l.b16 %v2274
    %v2629 = vunpack.c.h.b16 %v2274
    %v2630 = vunpack.c.l.b16 %v2275
    %v2631 = vunpack.c.l.b16 %v2276
    %v2632 = vunpack.c.h.b16 %v2276
    %v2633 = vunpack.c.l.b16 %v2277
    %v2634 = vunpack.c.l.b16 %v2278
    %v2635 = vunpack.c.h.b16 %v2278
    %v2636 = vunpack.c.l.b16 %v2279
    %v2637 = vunpack.c.l.b16 %v2280
    %v2638 = vunpack.c.h.b16 %v2280
    %v2639 = vunpack.c.l.b16 %v2281
    %v2640 = vunpack.c.l.b16 %v2282
    %v2641 = vunpack.c.h.b16 %v2282
    %v2642 = vunpack.c.l.b16 %v2283
    %v2643 = vunpack.c.l.b16 %v2284
    %v2644 = vunpack.c.h.b16 %v2284
    %v2645 = vunpack.c.l.b16 %v2285
    %v2646 = vunpack.c.l.b16 %v2286
    %v2647 = vunpack.c.h.b16 %v2286
    %v2648 = vunpack.c.l.b16 %v2287
    %v2649 = vunpack.c.l.b16 %v2288
    %v2650 = vunpack.c.h.b16 %v2288
    %v2651 = vunpack.c.l.b16 %v2289
    %v2652 = vunpack.c.l.b16 %v2290
    %v2653 = vunpack.c.h.b16 %v2290
    %v2654 = vunpack.c.l.b16 %v2291
    %v2655 = vunpack.c.l.b16 %v2292
    %v2656 = vunpack.c.h.b16 %v2292
    %v2657 = vunpack.c.l.b16 %v2293
    %v2658 = vunpack.c.l.b16 %v2294
    %v2659 = vunpack.c.h.b16 %v2294
    %v2660 = vunpack.c.l.b16 %v2295
    %v2661 = vunpack.c.l.b16 %v2296
    %v2662 = vunpack.c.h.b16 %v2296
    %v2663 = vunpack.c.l.b16 %v2297
    %v2664 = vunpack.c.l.b16 %v2298
    %v2665 = vunpack.c.h.b16 %v2298
    %v2666 = vunpack.c.l.b16 %v2299
    %v2667 = vunpack.c.l.b16 %v2300
    %v2668 = vunpack.c.h.b16 %v2300
    %v2669 = vunpack.c.l.b16 %v2301
    %v2670 = vunpack.c.l.b16 %v2302
    %v2671 = vunpack.c.h.b16 %v2302
    %v2672 = vunpack.c.l.b16 %v2303
    %v2673 = vunpack.c.l.b16 %v2304
    %v2674 = vunpack.c.h.b16 %v2304
    %v2675 = vunpack.c.l.b16 %v2305
    %v2676 = vunpack.c.l.b16 %v2306
    %v2677 = vunpack.c.h.b16 %v2306
    %v2678 = vunpack.c.l.b16 %v2307
    %v2679 = vunpack.c.l.b16 %v2308
    %v2680 = vunpack.c.h.b16 %v2308
    %v2681 = vunpack.c.l.b16 %v2309
    %v2682 = vunpack.c.l.b16 %v2310
    %v2683 = vunpack.c.h.b16 %v2310
    %v2684 = vunpack.c.l.b16 %v2311
    %v2685 = vunpack.c.l.b16 %v2312
    %v2686 = vunpack.c.h.b16 %v2312
    %v2687 = vunpack.c.l.b16 %v2313
    %v2688 = vunpack.c.l.b16 %v2314
    %v2689 = vunpack.c.h.b16 %v2314
    %v2690 = vunpack.c.l.b16 %v2315
    %v2691 = vunpack.c.l.b16 %v2316
    %v2692 = vunpack.c.h.b16 %v2316
    %v2693 = vunpack.c.l.b16 %v2317
    %v2694 = vunpack.c.l.b16 %v2318
    %v2695 = vunpack.c.h.b16 %v2318
    %v2696 = vunpack.c.l.b16 %v2319
    %v2697 = vunpack.c.l.b16 %v2320
    %v2698 = vunpack.c.h.b16 %v2320
    %v2699 = vunpack.c.l.b16 %v2321
    %v2700 = vunpack.c.l.b16 %v2322
    %v2701 = vunpack.c.h.b16 %v2322
    %v2702 = vunpack.c.l.b16 %v2323
    %v2703 = vunpack.c.l.b16 %v2324
    %v2704 = vunpack.c.h.b16 %v2324
    %v2705 = vunpack.c.l.b16 %v2325
    %v2706 = vunpack.c.l.b16 %v2326
    %v2707 = vunpack.c.h.b16 %v2326
    %v2708 = vunpack.c.l.b16 %v2327
    %v2709 = vunpack.c.l.b16 %v2328
    %v2710 = vunpack.c.h.b16 %v2328
    %v2711 = vunpack.c.l.b16 %v2329
    %v2712 = vunpack.c.l.b16 %v2330
    %v2713 = vunpack.c.h.b16 %v2330
    %v2714 = vunpack.c.l.b16 %v2331
    %v2715 = vunpack.c.l.b16 %v2332
    %v2716 = vunpack.c.h.b16 %v2332
    %v2717 = vunpack.c.l.b16 %v2333
    %v2718 = vunpack.c.l.b16 %v2334
    %v2719 = vunpack.c.h.b16 %v2334
    %v2720 = vunpack.c.l.b16 %v2335
    %v2721 = vunpack.c.l.b16 %v2336
    %v2722 = vunpack.c.h.b16 %v2336
    %v2723 = vunpack.c.l.b16 %v2337
    %v2724 = vunpack.c.l.b16 %v2338
    %v2725 = vunpack.c.h.b16 %v2338
    %v2726 = vunpack.c.l.b16 %v2339
    %v2727 = vunpack.c.l.b16 %v2340
    %v2728 = vunpack.c.h.b16 %v2340
    %v2729 = vunpack.c.l.b16 %v2341
    %v2730 = vunpack.c.l.b16 %v2342
    %v2731 = vunpack.c.h.b16 %v2342
    %v2732 = vunpack.c.l.b16 %v2343
    %v2733 = vunpack.c.l.b16 %v2344
    %v2734 = vunpack.c.h.b16 %v2344
    %v2735 = vunpack.c.l.b16 %v2345
    %v2736 = vunpack.c.l.b16 %v2346
    %v2737 = vunpack.c.h.b16 %v2346
    %v2738 = vunpack.c.l.b16 %v2347
    %v2739 = vunpack.c.l.b16 %v2348
    %v2740 = vunpack.c.h.b16 %v2348
    %v2741 = vunpack.c.l.b16 %v2349
    %v2742 = vunpack.c.l.b16 %v2350
    %v2743 = vunpack.c.h.b16 %v2350
    %v2744 = vunpack.c.l.b16 %v2351
    %v2745 = vunpack.c.l.b16 %v2352
    %v2746 = vunpack.c.h.b16 %v2352
    %v2747 = vunpack.c.l.b16 %v2353
    %v2748 = vunpack.c.l.b16 %v2354
    %v2749 = vunpack.c.h.b16 %v2354
    %v2750 = vunpack.c.l.b16 %v2355
    %v2751 = vunpack.c.l.b16 %v2356
    %v2752 = vunpack.c.h.b16 %v2356
    %v2753 = vunpack.c.l.b16 %v2357
    %v2754 = vunpack.c.l.b16 %v2358
    %v2755 = vunpack.c.h.b16 %v2358
    %v2756 = vunpack.c.l.b16 %v2359
    %v2757 = vunpack.c.l.b16 %v2360
    %v2758 = vunpack.c.h.b16 %v2360
    %v2759 = vunpack.c.l.b16 %v2361
    %v2760 = vunpack.c.l.b16 %v2362
    %v2761 = vunpack.c.h.b16 %v2362
    %v2762 = vunpack.c.l.b16 %v2363
    %v2763 = vunpack.c.l.b16 %v2364
    %v2764 = vunpack.c.h.b16 %v2364
    %v2765 = vunpack.c.l.b16 %v2365
    %v2766 = vunpack.c.l.b16 %v2366
    %v2767 = vunpack.c.h.b16 %v2366
    %v2768 = vunpack.c.l.b16 %v2367
    %v2769 = vunpack.c.l.b16 %v2368
    %v2770 = vunpack.c.h.b16 %v2368
    %v2771 = vunpack.c.l.b16 %v2369
    %v2772 = vunpack.c.l.b16 %v2370
    %v2773 = vunpack.c.h.b16 %v2370
    %v2774 = vunpack.c.l.b16 %v2371
    %v2775 = vunpack.c.l.b16 %v2372
    %v2776 = vunpack.c.h.b16 %v2372
    %v2777 = vunpack.c.l.b16 %v2373
    %v2778 = vunpack.c.l.b16 %v2374
    %v2779 = vunpack.c.h.b16 %v2374
    %v2780 = vunpack.c.l.b16 %v2375
    %v2781 = vunpack.c.l.b16 %v2376
    %v2782 = vunpack.c.h.b16 %v2376
    %v2783 = vunpack.c.l.b16 %v2377
    %v2784 = vunpack.c.l.b16 %v2378
    %v2785 = vunpack.c.h.b16 %v2378
    %v2786 = vunpack.c.l.b16 %v2379
    %v2787 = vunpack.c.l.b16 %v2380
    %v2788 = vunpack.c.h.b16 %v2380
    %v2789 = vunpack.c.l.b16 %v2381
    %v2790 = vpack.c.b16 %v2553, %v2550
    %v2791 = vpack.c.b16 %v2554, %v2551
    %v2792 = vpack.c.b16 %v2555, %v2552
    %v2793 = vpack.c.b16 %v2559, %v2556
    %v2794 = vpack.c.b16 %v2560, %v2557
    %v2795 = vpack.c.b16 %v2561, %v2558
    %v2796 = vpack.c.b16 %v2565, %v2562
    %v2797 = vpack.c.b16 %v2566, %v2563
    %v2798 = vpack.c.b16 %v2567, %v2564
    %v2799 = vpack.c.b16 %v2571, %v2568
    %v2800 = vpack.c.b16 %v2572, %v2569
    %v2801 = vpack.c.b16 %v2573, %v2570
    %v2802 = vpack.c.b16 %v2577, %v2574
    %v2803 = vpack.c.b16 %v2578, %v2575
    %v2804 = vpack.c.b16 %v2579, %v2576
    %v2805 = vpack.c.b16 %v2583, %v2580
    %v2806 = vpack.c.b16 %v2584, %v2581
    %v2807 = vpack.c.b16 %v2585, %v2582
    %v2808 = vpack.c.b16 %v2589, %v2586
    %v2809 = vpack.c.b16 %v2590, %v2587
    %v2810 = vpack.c.b16 %v2591, %v2588
    %v2811 = vpack.c.b16 %v2595, %v2592
    %v2812 = vpack.c.b16 %v2596, %v2593
    %v2813 = vpack.c.b16 %v2597, %v2594
    %v2814 = vpack.c.b16 %v2601, %v2598
    %v2815 = vpack.c.b16 %v2602, %v2599
    %v2816 = vpack.c.b16 %v2603, %v2600
    %v2817 = vpack.c.b16 %v2607, %v2604
    %v2818 = vpack.c.b16 %v2608, %v2605
    %v2819 = vpack.c.b16 %v2609, %v2606
    %v2820 = vpack.c.b16 %v2613, %v2610
    %v2821 = vpack.c.b16 %v2614, %v2611
    %v2822 = vpack.c.b16 %v2615, %v2612
    %v2823 = vpack.c.b16 %v2619, %v2616
    %v2824 = vpack.c.b16 %v2620, %v2617
    %v2825 = vpack.c.b16 %v2621, %v2618
    %v2826 = vpack.c.b16 %v2625, %v2622
    %v2827 = vpack.c.b16 %v2626, %v2623
    %v2828 = vpack.c.b16 %v2627, %v2624
    %v2829 = vpack.c.b16 %v2631, %v2628
    %v2830 = vpack.c.b16 %v2632, %v2629
    %v2831 = vpack.c.b16 %v2633, %v2630
    %v2832 = vpack.c.b16 %v2637, %v2634
    %v2833 = vpack.c.b16 %v2638, %v2635
    %v2834 = vpack.c.b16 %v2639, %v2636
    %v2835 = vpack.c.b16 %v2643, %v2640
    %v2836 = vpack.c.b16 %v2644, %v2641
    %v2837 = vpack.c.b16 %v2645, %v2642
    %v2838 = vpack.c.b16 %v2649, %v2646
    %v2839 = vpack.c.b16 %v2650, %v2647
    %v2840 = vpack.c.b16 %v2651, %v2648
    %v2841 = vpack.c.b16 %v2655, %v2652
    %v2842 = vpack.c.b16 %v2656, %v2653
    %v2843 = vpack.c.b16 %v2657, %v2654
    %v2844 = vpack.c.b16 %v2661, %v2658
    %v2845 = vpack.c.b16 %v2662, %v2659
    %v2846 = vpack.c.b16 %v2663, %v2660
    %v2847 = vpack.c.b16 %v2667, %v2664
    %v2848 = vpack.c.b16 %v2668, %v2665
    %v2849 = vpack.c.b16 %v2669, %v2666
    %v2850 = vpack.c.b16 %v2673, %v2670
    %v2851 = vpack.c.b16 %v2674, %v2671
    %v2852 = vpack.c.b16 %v2675, %v2672
    %v2853 = vpack.c.b16 %v2679, %v2676
    %v2854 = vpack.c.b16 %v2680, %v2677
    %v2855 = vpack.c.b16 %v2681, %v2678
    %v2856 = vpack.c.b16 %v2685, %v2682
    %v2857 = vpack.c.b16 %v2686, %v2683
    %v2858 = vpack.c.b16 %v2687, %v2684
    %v2859 = vpack.c.b16 %v2691, %v2688
    %v2860 = vpack.c.b16 %v2692, %v2689
    %v2861 = vpack.c.b16 %v2693, %v2690
    %v2862 = vpack.c.b16 %v2697, %v2694
    %v2863 = vpack.c.b16 %v2698, %v2695
    %v2864 = vpack.c.b16 %v2699, %v2696
    %v2865 = vpack.c.b16 %v2703, %v2700
    %v2866 = vpack.c.b16 %v2704, %v2701
    %v2867 = vpack.c.b16 %v2705, %v2702
    %v2868 = vpack.c.b16 %v2709, %v2706
    %v2869 = vpack.c.b16 %v2710, %v2707
    %v2870 = vpack.c.b16 %v2711, %v2708
    %v2871 = vpack.c.b16 %v2715, %v2712
    %v2872 = vpack.c.b16 %v2716, %v2713
    %v2873 = vpack.c.b16 %v2717, %v2714
    %v2874 = vpack.c.b16 %v2721, %v2718
    %v2875 = vpack.c.b16 %v2722, %v2719
    %v2876 = vpack.c.b16 %v2723, %v2720
    %v2877 = vpack.c.b16 %v2727, %v2724
    %v2878 = vpack.c.b16 %v2728, %v2725
    %v2879 = vpack.c.b16 %v2729, %v2726
    %v2880 = vpack.c.b16 %v2733, %v2730
    %v2881 = vpack.c.b16 %v2734, %v2731
    %v2882 = vpack.c.b16 %v2735, %v2732
    %v2883 = vpack.c.b16 %v2739, %v2736
    %v2884 = vpack.c.b16 %v2740, %v2737
    %v2885 = vpack.c.b16 %v2741, %v2738
    %v2886 = vpack.c.b16 %v2745, %v2742
    %v2887 = vpack.c.b16 %v2746, %v2743
    %v2888 = vpack.c.b16 %v2747, %v2744
    %v2889 = vpack.c.b16 %v2751, %v2748
    %v2890 = vpack.c.b16 %v2752, %v2749
    %v2891 = vpack.c.b16 %v2753, %v2750
    %v2892 = vpack.c.b16 %v2757, %v2754
    %v2893 = vpack.c.b16 %v2758, %v2755
    %v2894 = vpack.c.b16 %v2759, %v2756
    %v2895 = vpack.c.b16 %v2763, %v2760
    %v2896 = vpack.c.b16 %v2764, %v2761
    %v2897 = vpack.c.b16 %v2765, %v2762
    %v2898 = vpack.c.b16 %v2769, %v2766
    %v2899 = vpack.c.b16 %v2770, %v2767
    %v2900 = vpack.c.b16 %v2771, %v2768
    %v2901 = vpack.c.b16 %v2775, %v2772
    %v2902 = vpack.c.b16 %v2776, %v2773
    %v2903 = vpack.c.b16 %v2777, %v2774
    %v2904 = vpack.c.b16 %v2781, %v2778
    %v2905 = vpack.c.b16 %v2782, %v2779
    %v2906 = vpack.c.b16 %v2783, %v2780
    %v2907 = vpack.c.b16 %v2787, %v2784
    %v2908 = vpack.c.b16 %v2788, %v2785
    %v2909 = vpack.c.b16 %v2789, %v2786
    %3030 = vmatpush.bf16.msra.mxu0 %v2811
    %3031 = vmatpush.bf16.msra.mxu0 %v2808
    %3032 = vmatpush.bf16.msra.mxu0 %v2805
    %3033 = vmatpush.bf16.msra.mxu0 %v2802
    %3034 = vmatpush.bf16.msra.mxu0 %v2799
    %3035 = vmatpush.bf16.msra.mxu0 %v2796
    %3036 = vmatpush.bf16.msra.mxu0 %v2793
    %3037 = vmatpush.bf16.msra.mxu0 %v2790
    %3038 = vmatmul.bf16.gmra.mxu0 %v2217
    %v3039 = vpop.f32.mrf.mxu0
    %v3040 = vadd.f32 %v2384, %v3039
    %v3041 = vpop.f32.mrf.mxu0
    %3042 = vdwg.mxu0
    %3043 = vmatpush.bf16.msra.mxu0 %v2835
    %3044 = vmatpush.bf16.msra.mxu0 %v2832
    %3045 = vmatpush.bf16.msra.mxu0 %v2829
    %3046 = vmatpush.bf16.msra.mxu0 %v2826
    %3047 = vmatpush.bf16.msra.mxu0 %v2823
    %3048 = vmatpush.bf16.msra.mxu0 %v2820
    %3049 = vmatpush.bf16.msra.mxu0 %v2817
    %3050 = vmatpush.bf16.msra.mxu0 %v2814
    %3051 = vmatmul.bf16.gmra.mxu0 %v2218
    %v3052 = vpop.f32.mrf.mxu0
    %v3053 = vadd.f32 %v3040, %v3052
    %v3054 = vpop.f32.mrf.mxu0
    %3055 = vdwg.mxu0
    %3056 = vmatpush.bf16.msra.mxu0 %v2859
    %3057 = vmatpush.bf16.msra.mxu0 %v2856
    %3058 = vmatpush.bf16.msra.mxu0 %v2853
    %3059 = vmatpush.bf16.msra.mxu0 %v2850
    %3060 = vmatpush.bf16.msra.mxu0 %v2847
    %3061 = vmatpush.bf16.msra.mxu0 %v2844
    %3062 = vmatpush.bf16.msra.mxu0 %v2841
    %3063 = vmatpush.bf16.msra.mxu0 %v2838
    %3064 = vmatmul.bf16.gmra.mxu0 %v2219
    %v3065 = vpop.f32.mrf.mxu0
    %v3066 = vadd.f32 %v3053, %v3065
    %v3067 = vpop.f32.mrf.mxu0
    %3068 = vdwg.mxu0
    %3069 = vmatpush.bf16.msra.mxu0 %v2883
    %3070 = vmatpush.bf16.msra.mxu0 %v2880
    %3071 = vmatpush.bf16.msra.mxu0 %v2877
    %3072 = vmatpush.bf16.msra.mxu0 %v2874
    %3073 = vmatpush.bf16.msra.mxu0 %v2871
    %3074 = vmatpush.bf16.msra.mxu0 %v2868
    %3075 = vmatpush.bf16.msra.mxu0 %v2865
    %3076 = vmatpush.bf16.msra.mxu0 %v2862
    %3077 = vmatmul.bf16.gmra.mxu0 %v2220
    %v3078 = vpop.f32.mrf.mxu0
    %v3079 = vadd.f32 %v3066, %v3078
    %v3080 = vpop.f32.mrf.mxu0
    %3081 = vdwg.mxu0
    %3082 = vmatpush.bf16.msra.mxu0 %v2907
    %3083 = vmatpush.bf16.msra.mxu0 %v2904
    %3084 = vmatpush.bf16.msra.mxu0 %v2901
    %3085 = vmatpush.bf16.msra.mxu0 %v2898
    %3086 = vmatpush.bf16.msra.mxu0 %v2895
    %3087 = vmatpush.bf16.msra.mxu0 %v2892
    %3088 = vmatpush.bf16.msra.mxu0 %v2889
    %3089 = vmatpush.bf16.msra.mxu0 %v2886
    %3090 = vmatmul.bf16.gmra.mxu0 %v2221
    %v3091 = vpop.f32.mrf.mxu0
    %v3092 = vadd.f32 %v3079, %v3091
    %v3093 = vpop.f32.mrf.mxu0
    %3094 = vdwg.mxu0
    %3095 = vmatpush.bf16.msra.mxu0 %v2812
    %3096 = vmatpush.bf16.msra.mxu0 %v2809
    %3097 = vmatpush.bf16.msra.mxu0 %v2806
    %3098 = vmatpush.bf16.msra.mxu0 %v2803
    %3099 = vmatpush.bf16.msra.mxu0 %v2800
    %3100 = vmatpush.bf16.msra.mxu0 %v2797
    %3101 = vmatpush.bf16.msra.mxu0 %v2794
    %3102 = vmatpush.bf16.msra.mxu0 %v2791
    %3103 = vmatmul.bf16.gmra.mxu0 %v2217
    %v3104 = vpop.f32.mrf.mxu0
    %v3105 = vadd.f32 %v2385, %v3104
    %v3106 = vpop.f32.mrf.mxu0
    %3107 = vdwg.mxu0
    %3108 = vmatpush.bf16.msra.mxu0 %v2836
    %3109 = vmatpush.bf16.msra.mxu0 %v2833
    %3110 = vmatpush.bf16.msra.mxu0 %v2830
    %3111 = vmatpush.bf16.msra.mxu0 %v2827
    %3112 = vmatpush.bf16.msra.mxu0 %v2824
    %3113 = vmatpush.bf16.msra.mxu0 %v2821
    %3114 = vmatpush.bf16.msra.mxu0 %v2818
    %3115 = vmatpush.bf16.msra.mxu0 %v2815
    %3116 = vmatmul.bf16.gmra.mxu0 %v2218
    %v3117 = vpop.f32.mrf.mxu0
    %v3118 = vadd.f32 %v3105, %v3117
    %v3119 = vpop.f32.mrf.mxu0
    %3120 = vdwg.mxu0
    %3121 = vmatpush.bf16.msra.mxu0 %v2860
    %3122 = vmatpush.bf16.msra.mxu0 %v2857
    %3123 = vmatpush.bf16.msra.mxu0 %v2854
    %3124 = vmatpush.bf16.msra.mxu0 %v2851
    %3125 = vmatpush.bf16.msra.mxu0 %v2848
    %3126 = vmatpush.bf16.msra.mxu0 %v2845
    %3127 = vmatpush.bf16.msra.mxu0 %v2842
    %3128 = vmatpush.bf16.msra.mxu0 %v2839
    %3129 = vmatmul.bf16.gmra.mxu0 %v2219
    %v3130 = vpop.f32.mrf.mxu0
    %v3131 = vadd.f32 %v3118, %v3130
    %v3132 = vpop.f32.mrf.mxu0
    %3133 = vdwg.mxu0
    %3134 = vmatpush.bf16.msra.mxu0 %v2884
    %3135 = vmatpush.bf16.msra.mxu0 %v2881
    %3136 = vmatpush.bf16.msra.mxu0 %v2878
    %3137 = vmatpush.bf16.msra.mxu0 %v2875
    %3138 = vmatpush.bf16.msra.mxu0 %v2872
    %3139 = vmatpush.bf16.msra.mxu0 %v2869
    %3140 = vmatpush.bf16.msra.mxu0 %v2866
    %3141 = vmatpush.bf16.msra.mxu0 %v2863
    %3142 = vmatmul.bf16.gmra.mxu0 %v2220
    %v3143 = vpop.f32.mrf.mxu0
    %v3144 = vadd.f32 %v3131, %v3143
    %v3145 = vpop.f32.mrf.mxu0
    %3146 = vdwg.mxu0
    %3147 = vmatpush.bf16.msra.mxu0 %v2908
    %3148 = vmatpush.bf16.msra.mxu0 %v2905
    %3149 = vmatpush.bf16.msra.mxu0 %v2902
    %3150 = vmatpush.bf16.msra.mxu0 %v2899
    %3151 = vmatpush.bf16.msra.mxu0 %v2896
    %3152 = vmatpush.bf16.msra.mxu0 %v2893
    %3153 = vmatpush.bf16.msra.mxu0 %v2890
    %3154 = vmatpush.bf16.msra.mxu0 %v2887
    %3155 = vmatmul.bf16.gmra.mxu0 %v2221
    %v3156 = vpop.f32.mrf.mxu0
    %v3157 = vadd.f32 %v3144, %v3156
    %v3158 = vpop.f32.mrf.mxu0
    %3159 = vdwg.mxu0
    %3160 = vmatpush.bf16.msra.mxu0 %v2813
    %3161 = vmatpush.bf16.msra.mxu0 %v2810
    %3162 = vmatpush.bf16.msra.mxu0 %v2807
    %3163 = vmatpush.bf16.msra.mxu0 %v2804
    %3164 = vmatpush.bf16.msra.mxu0 %v2801
    %3165 = vmatpush.bf16.msra.mxu0 %v2798
    %3166 = vmatpush.bf16.msra.mxu0 %v2795
    %3167 = vmatpush.bf16.msra.mxu0 %v2792
    %3168 = vmatmul.bf16.gmra.mxu0 %v2217
    %v3169 = vpop.f32.mrf.mxu0
    %v3170 = vadd.f32 %v2386, %v3169
    %v3171 = vpop.f32.mrf.mxu0
    %3172 = vdwg.mxu0
    %3173 = vmatpush.bf16.msra.mxu0 %v2837
    %3174 = vmatpush.bf16.msra.mxu0 %v2834
    %3175 = vmatpush.bf16.msra.mxu0 %v2831
    %3176 = vmatpush.bf16.msra.mxu0 %v2828
    %3177 = vmatpush.bf16.msra.mxu0 %v2825
    %3178 = vmatpush.bf16.msra.mxu0 %v2822
    %3179 = vmatpush.bf16.msra.mxu0 %v2819
    %3180 = vmatpush.bf16.msra.mxu0 %v2816
    %3181 = vmatmul.bf16.gmra.mxu0 %v2218
    %v3182 = vpop.f32.mrf.mxu0
    %v3183 = vadd.f32 %v3170, %v3182
    %v3184 = vpop.f32.mrf.mxu0
    %3185 = vdwg.mxu0
    %3186 = vmatpush.bf16.msra.mxu0 %v2861
    %3187 = vmatpush.bf16.msra.mxu0 %v2858
    %3188 = vmatpush.bf16.msra.mxu0 %v2855
    %3189 = vmatpush.bf16.msra.mxu0 %v2852
    %3190 = vmatpush.bf16.msra.mxu0 %v2849
    %3191 = vmatpush.bf16.msra.mxu0 %v2846
    %3192 = vmatpush.bf16.msra.mxu0 %v2843
    %3193 = vmatpush.bf16.msra.mxu0 %v2840
    %3194 = vmatmul.bf16.gmra.mxu0 %v2219
    %v3195 = vpop.f32.mrf.mxu0
    %v3196 = vadd.f32 %v3183, %v3195
    %v3197 = vpop.f32.mrf.mxu0
    %3198 = vdwg.mxu0
    %3199 = vmatpush.bf16.msra.mxu0 %v2885
    %3200 = vmatpush.bf16.msra.mxu0 %v2882
    %3201 = vmatpush.bf16.msra.mxu0 %v2879
    %3202 = vmatpush.bf16.msra.mxu0 %v2876
    %3203 = vmatpush.bf16.msra.mxu0 %v2873
    %3204 = vmatpush.bf16.msra.mxu0 %v2870
    %3205 = vmatpush.bf16.msra.mxu0 %v2867
    %3206 = vmatpush.bf16.msra.mxu0 %v2864
    %3207 = vmatmul.bf16.gmra.mxu0 %v2220
    %v3208 = vpop.f32.mrf.mxu0
    %v3209 = vadd.f32 %v3196, %v3208
    %v3210 = vpop.f32.mrf.mxu0
    %3211 = vdwg.mxu0
    %3212 = vmatpush.bf16.msra.mxu0 %v2909
    %3213 = vmatpush.bf16.msra.mxu0 %v2906
    %3214 = vmatpush.bf16.msra.mxu0 %v2903
    %3215 = vmatpush.bf16.msra.mxu0 %v2900
    %3216 = vmatpush.bf16.msra.mxu0 %v2897
    %3217 = vmatpush.bf16.msra.mxu0 %v2894
    %3218 = vmatpush.bf16.msra.mxu0 %v2891
    %3219 = vmatpush.bf16.msra.mxu0 %v2888
    %3220 = vmatmul.bf16.gmra.mxu0 %v2221
    %v3221 = vpop.f32.mrf.mxu0
    %v3222 = vadd.f32 %v3209, %v3221
    %v3223 = vpop.f32.mrf.mxu0
    %3224 = vdwg.mxu0
    %v3225 = vmax.f32 %v3092, 0.0
    %v3226 = vmax.f32 %v3157, 0.0
    %v3227 = vmax.f32 %v3222, 0.0
    %v3228 = vpack.c.bf16 %v3225, %v3225
    %v3229 = vpack.c.bf16 %v3226, %v3226
    %v3230 = vpack.c.bf16 %v3227, %v3227
    %v3231 = vld [vmem:[#allocation10] sm:$0xff]
    %v3232 = vld [vmem:[#allocation10 + $0x8] sm:$0xff]
    %v3233 = vld [vmem:[#allocation10 + $0x10] sm:$0xff]
    %v3234 = vld [vmem:[#allocation10 + $0x18] sm:$0xff]
    %v3235 = vld [vmem:[#allocation10 + $0x20] sm:$0xff]
    %v3236 = vld [vmem:[#allocation10 + $0x28] sm:$0xff]
    %v3237 = vld [vmem:[#allocation10 + $0x30] sm:$0xff]
    %v3238 = vld [vmem:[#allocation10 + $0x38] sm:$0xff]
    %v3239 = vld [vmem:[#allocation10 + $0x40] sm:$0xff]
    %v3240 = vld [vmem:[#allocation10 + $0x48] sm:$0xff]
    %v3241 = vld [vmem:[#allocation10 + $0x50] sm:$0xff]
    %v3242 = vld [vmem:[#allocation10 + $0x58] sm:$0xff]
    %v3243 = vld [vmem:[#allocation10 + $0x60] sm:$0xff]
    %v3244 = vld [vmem:[#allocation10 + $0x68] sm:$0xff]
    %v3245 = vld [vmem:[#allocation10 + $0x70] sm:$0xff]
    %v3246 = vld [vmem:[#allocation10 + $0x78] sm:$0xff]
    %v3247 = vld [vmem:[#allocation10 + $0x80] sm:$0xff]
    %v3248 = vld [vmem:[#allocation10 + $0x88] sm:$0xff]
    %v3249 = vld [vmem:[#allocation10 + $0x90] sm:$0xff]
    %v3250 = vld [vmem:[#allocation10 + $0x98] sm:$0xff]
    %v3251 = vld [vmem:[#allocation10 + $0xa0] sm:$0xff]
    %v3252 = vld [vmem:[#allocation10 + $0xa8] sm:$0xff]
    %v3253 = vld [vmem:[#allocation10 + $0xb0] sm:$0xff]
    %v3254 = vld [vmem:[#allocation10 + $0xb8] sm:$0xff]
    %v3255 = vld [vmem:[#allocation10 + $0xc0] sm:$0xff]
    %v3256 = vld [vmem:[#allocation10 + $0xc8] sm:$0xff]
    %v3257 = vld [vmem:[#allocation10 + $0xd0] sm:$0xff]
    %v3258 = vld [vmem:[#allocation10 + $0xd8] sm:$0xff]
    %v3259 = vld [vmem:[#allocation10 + $0xe0] sm:$0xff]
    %v3260 = vld [vmem:[#allocation10 + $0xe8] sm:$0xff]
    %v3261 = vld [vmem:[#allocation10 + $0xf0] sm:$0xff]
    %v3262 = vld [vmem:[#allocation10 + $0xf8] sm:$0xff]
    %v3263 = vld [vmem:[#allocation10 + $0x100] sm:$0xff]
    %v3264 = vld [vmem:[#allocation10 + $0x108] sm:$0xff]
    %v3265 = vld [vmem:[#allocation10 + $0x110] sm:$0xff]
    %v3266 = vld [vmem:[#allocation10 + $0x118] sm:$0xff]
    %v3267 = vld [vmem:[#allocation10 + $0x120] sm:$0xff]
    %v3268 = vld [vmem:[#allocation10 + $0x128] sm:$0xff]
    %v3269 = vld [vmem:[#allocation10 + $0x130] sm:$0xff]
    %v3270 = vld [vmem:[#allocation10 + $0x138] sm:$0xff]
    %v3271 = vld [vmem:[#allocation10 + $0x140] sm:$0xff]
    %v3272 = vld [vmem:[#allocation10 + $0x148] sm:$0xff]
    %v3273 = vld [vmem:[#allocation10 + $0x150] sm:$0xff]
    %v3274 = vld [vmem:[#allocation10 + $0x158] sm:$0xff]
    %v3275 = vld [vmem:[#allocation10 + $0x160] sm:$0xff]
    %v3276 = vld [vmem:[#allocation10 + $0x168] sm:$0xff]
    %v3277 = vld [vmem:[#allocation10 + $0x170] sm:$0xff]
    %v3278 = vld [vmem:[#allocation10 + $0x178] sm:$0xff]
    %v3279 = vld [vmem:[%s6] sm:$0x3]
    %v3281 = vperm.slane %v3279, 0
    %v3282 = vperm.slane %v3279, 1
    %v3333 = vunpack.c.l.b16 %v3231
    %v3334 = vunpack.c.h.b16 %v3231
    %v3335 = vunpack.c.l.b16 %v3232
    %v3336 = vunpack.c.h.b16 %v3232
    %v3337 = vunpack.c.l.b16 %v3233
    %v3338 = vunpack.c.h.b16 %v3233
    %v3339 = vunpack.c.l.b16 %v3234
    %v3340 = vunpack.c.h.b16 %v3234
    %v3341 = vunpack.c.l.b16 %v3235
    %v3342 = vunpack.c.h.b16 %v3235
    %v3343 = vunpack.c.l.b16 %v3236
    %v3344 = vunpack.c.h.b16 %v3236
    %v3345 = vunpack.c.l.b16 %v3237
    %v3346 = vunpack.c.h.b16 %v3237
    %v3347 = vunpack.c.l.b16 %v3238
    %v3348 = vunpack.c.h.b16 %v3238
    %v3349 = vunpack.c.l.b16 %v3239
    %v3350 = vunpack.c.h.b16 %v3239
    %v3351 = vunpack.c.l.b16 %v3240
    %v3352 = vunpack.c.h.b16 %v3240
    %v3353 = vunpack.c.l.b16 %v3241
    %v3354 = vunpack.c.h.b16 %v3241
    %v3355 = vunpack.c.l.b16 %v3242
    %v3356 = vunpack.c.h.b16 %v3242
    %v3357 = vunpack.c.l.b16 %v3243
    %v3358 = vunpack.c.h.b16 %v3243
    %v3359 = vunpack.c.l.b16 %v3244
    %v3360 = vunpack.c.h.b16 %v3244
    %v3361 = vunpack.c.l.b16 %v3245
    %v3362 = vunpack.c.h.b16 %v3245
    %v3363 = vunpack.c.l.b16 %v3246
    %v3364 = vunpack.c.h.b16 %v3246
    %v3365 = vunpack.c.l.b16 %v3247
    %v3366 = vunpack.c.h.b16 %v3247
    %v3367 = vunpack.c.l.b16 %v3248
    %v3368 = vunpack.c.h.b16 %v3248
    %v3369 = vunpack.c.l.b16 %v3249
    %v3370 = vunpack.c.h.b16 %v3249
    %v3371 = vunpack.c.l.b16 %v3250
    %v3372 = vunpack.c.h.b16 %v3250
    %v3373 = vunpack.c.l.b16 %v3251
    %v3374 = vunpack.c.h.b16 %v3251
    %v3375 = vunpack.c.l.b16 %v3252
    %v3376 = vunpack.c.h.b16 %v3252
    %v3377 = vunpack.c.l.b16 %v3253
    %v3378 = vunpack.c.h.b16 %v3253
    %v3379 = vunpack.c.l.b16 %v3254
    %v3380 = vunpack.c.h.b16 %v3254
    %v3381 = vunpack.c.l.b16 %v3255
    %v3382 = vunpack.c.h.b16 %v3255
    %v3383 = vunpack.c.l.b16 %v3256
    %v3384 = vunpack.c.h.b16 %v3256
    %v3385 = vunpack.c.l.b16 %v3257
    %v3386 = vunpack.c.h.b16 %v3257
    %v3387 = vunpack.c.l.b16 %v3258
    %v3388 = vunpack.c.h.b16 %v3258
    %v3389 = vunpack.c.l.b16 %v3259
    %v3390 = vunpack.c.h.b16 %v3259
    %v3391 = vunpack.c.l.b16 %v3260
    %v3392 = vunpack.c.h.b16 %v3260
    %v3393 = vunpack.c.l.b16 %v3261
    %v3394 = vunpack.c.h.b16 %v3261
    %v3395 = vunpack.c.l.b16 %v3262
    %v3396 = vunpack.c.h.b16 %v3262
    %v3397 = vunpack.c.l.b16 %v3263
    %v3398 = vunpack.c.h.b16 %v3263
    %v3399 = vunpack.c.l.b16 %v3264
    %v3400 = vunpack.c.h.b16 %v3264
    %v3401 = vunpack.c.l.b16 %v3265
    %v3402 = vunpack.c.h.b16 %v3265
    %v3403 = vunpack.c.l.b16 %v3266
    %v3404 = vunpack.c.h.b16 %v3266
    %v3405 = vunpack.c.l.b16 %v3267
    %v3406 = vunpack.c.h.b16 %v3267
    %v3407 = vunpack.c.l.b16 %v3268
    %v3408 = vunpack.c.h.b16 %v3268
    %v3409 = vunpack.c.l.b16 %v3269
    %v3410 = vunpack.c.h.b16 %v3269
    %v3411 = vunpack.c.l.b16 %v3270
    %v3412 = vunpack.c.h.b16 %v3270
    %v3413 = vunpack.c.l.b16 %v3271
    %v3414 = vunpack.c.h.b16 %v3271
    %v3415 = vunpack.c.l.b16 %v3272
    %v3416 = vunpack.c.h.b16 %v3272
    %v3417 = vunpack.c.l.b16 %v3273
    %v3418 = vunpack.c.h.b16 %v3273
    %v3419 = vunpack.c.l.b16 %v3274
    %v3420 = vunpack.c.h.b16 %v3274
    %v3421 = vunpack.c.l.b16 %v3275
    %v3422 = vunpack.c.h.b16 %v3275
    %v3423 = vunpack.c.l.b16 %v3276
    %v3424 = vunpack.c.h.b16 %v3276
    %v3425 = vunpack.c.l.b16 %v3277
    %v3426 = vunpack.c.h.b16 %v3277
    %v3427 = vunpack.c.l.b16 %v3278
    %v3428 = vunpack.c.h.b16 %v3278
    %v3429 = vpack.c.b16 %v3335, %v3333
    %v3430 = vpack.c.b16 %v3336, %v3334
    %v3431 = vpack.c.b16 %v3339, %v3337
    %v3432 = vpack.c.b16 %v3340, %v3338
    %v3433 = vpack.c.b16 %v3343, %v3341
    %v3434 = vpack.c.b16 %v3344, %v3342
    %v3435 = vpack.c.b16 %v3347, %v3345
    %v3436 = vpack.c.b16 %v3348, %v3346
    %v3437 = vpack.c.b16 %v3351, %v3349
    %v3438 = vpack.c.b16 %v3352, %v3350
    %v3439 = vpack.c.b16 %v3355, %v3353
    %v3440 = vpack.c.b16 %v3356, %v3354
    %v3441 = vpack.c.b16 %v3359, %v3357
    %v3442 = vpack.c.b16 %v3360, %v3358
    %v3443 = vpack.c.b16 %v3363, %v3361
    %v3444 = vpack.c.b16 %v3364, %v3362
    %v3445 = vpack.c.b16 %v3367, %v3365
    %v3446 = vpack.c.b16 %v3368, %v3366
    %v3447 = vpack.c.b16 %v3371, %v3369
    %v3448 = vpack.c.b16 %v3372, %v3370
    %v3449 = vpack.c.b16 %v3375, %v3373
    %v3450 = vpack.c.b16 %v3376, %v3374
    %v3451 = vpack.c.b16 %v3379, %v3377
    %v3452 = vpack.c.b16 %v3380, %v3378
    %v3453 = vpack.c.b16 %v3383, %v3381
    %v3454 = vpack.c.b16 %v3384, %v3382
    %v3455 = vpack.c.b16 %v3387, %v3385
    %v3456 = vpack.c.b16 %v3388, %v3386
    %v3457 = vpack.c.b16 %v3391, %v3389
    %v3458 = vpack.c.b16 %v3392, %v3390
    %v3459 = vpack.c.b16 %v3395, %v3393
    %v3460 = vpack.c.b16 %v3396, %v3394
    %v3461 = vpack.c.b16 %v3399, %v3397
    %v3462 = vpack.c.b16 %v3400, %v3398
    %v3463 = vpack.c.b16 %v3403, %v3401
    %v3464 = vpack.c.b16 %v3404, %v3402
    %v3465 = vpack.c.b16 %v3407, %v3405
    %v3466 = vpack.c.b16 %v3408, %v3406
    %v3467 = vpack.c.b16 %v3411, %v3409
    %v3468 = vpack.c.b16 %v3412, %v3410
    %v3469 = vpack.c.b16 %v3415, %v3413
    %v3470 = vpack.c.b16 %v3416, %v3414
    %v3471 = vpack.c.b16 %v3419, %v3417
    %v3472 = vpack.c.b16 %v3420, %v3418
    %v3473 = vpack.c.b16 %v3423, %v3421
    %v3474 = vpack.c.b16 %v3424, %v3422
    %v3475 = vpack.c.b16 %v3427, %v3425
    %v3476 = vpack.c.b16 %v3428, %v3426
    %3525 = vmatpush.bf16.msra.mxu0 %v3443
    %3526 = vmatpush.bf16.msra.mxu0 %v3441
    %3527 = vmatpush.bf16.msra.mxu0 %v3439
    %3528 = vmatpush.bf16.msra.mxu0 %v3437
    %3529 = vmatpush.bf16.msra.mxu0 %v3435
    %3530 = vmatpush.bf16.msra.mxu0 %v3433
    %3531 = vmatpush.bf16.msra.mxu0 %v3431
    %3532 = vmatpush.bf16.msra.mxu0 %v3429
    %3533 = vmatmul.bf16.gmra.mxu0 %v3228
    %v3534 = vpop.f32.mrf.mxu0
    %v3535 = vadd.f32 %v3281, %v3534
    %v3536 = vpop.f32.mrf.mxu0
    %3537 = vdwg.mxu0
    %3538 = vmatpush.bf16.msra.mxu0 %v3459
    %3539 = vmatpush.bf16.msra.mxu0 %v3457
    %3540 = vmatpush.bf16.msra.mxu0 %v3455
    %3541 = vmatpush.bf16.msra.mxu0 %v3453
    %3542 = vmatpush.bf16.msra.mxu0 %v3451
    %3543 = vmatpush.bf16.msra.mxu0 %v3449
    %3544 = vmatpush.bf16.msra.mxu0 %v3447
    %3545 = vmatpush.bf16.msra.mxu0 %v3445
    %3546 = vmatmul.bf16.gmra.mxu0 %v3229
    %v3547 = vpop.f32.mrf.mxu0
    %v3548 = vadd.f32 %v3535, %v3547
    %v3549 = vpop.f32.mrf.mxu0
    %3550 = vdwg.mxu0
    %3551 = vmatpush.bf16.msra.mxu0 %v3475
    %3552 = vmatpush.bf16.msra.mxu0 %v3473
    %3553 = vmatpush.bf16.msra.mxu0 %v3471
    %3554 = vmatpush.bf16.msra.mxu0 %v3469
    %3555 = vmatpush.bf16.msra.mxu0 %v3467
    %3556 = vmatpush.bf16.msra.mxu0 %v3465
    %3557 = vmatpush.bf16.msra.mxu0 %v3463
    %3558 = vmatpush.bf16.msra.mxu0 %v3461
    %3559 = vmatmul.bf16.gmra.mxu0 %v3230
    %v3560 = vpop.f32.mrf.mxu0
    %v3561 = vadd.f32 %v3548, %v3560
    %v3562 = vpop.f32.mrf.mxu0
    %3563 = vdwg.mxu0
    %3564 = vmatpush.bf16.msra.mxu0 %v3444
    %3565 = vmatpush.bf16.msra.mxu0 %v3442
    %3566 = vmatpush.bf16.msra.mxu0 %v3440
    %3567 = vmatpush.bf16.msra.mxu0 %v3438
    %3568 = vmatpush.bf16.msra.mxu0 %v3436
    %3569 = vmatpush.bf16.msra.mxu0 %v3434
    %3570 = vmatpush.bf16.msra.mxu0 %v3432
    %3571 = vmatpush.bf16.msra.mxu0 %v3430
    %3572 = vmatmul.bf16.gmra.mxu0 %v3228
    %v3573 = vpop.f32.mrf.mxu0
    %v3574 = vadd.f32 %v3282, %v3573
    %v3575 = vpop.f32.mrf.mxu0
    %3576 = vdwg.mxu0
    %3577 = vmatpush.bf16.msra.mxu0 %v3460
    %3578 = vmatpush.bf16.msra.mxu0 %v3458
    %3579 = vmatpush.bf16.msra.mxu0 %v3456
    %3580 = vmatpush.bf16.msra.mxu0 %v3454
    %3581 = vmatpush.bf16.msra.mxu0 %v3452
    %3582 = vmatpush.bf16.msra.mxu0 %v3450
    %3583 = vmatpush.bf16.msra.mxu0 %v3448
    %3584 = vmatpush.bf16.msra.mxu0 %v3446
    %3585 = vmatmul.bf16.gmra.mxu0 %v3229
    %v3586 = vpop.f32.mrf.mxu0
    %v3587 = vadd.f32 %v3574, %v3586
    %v3588 = vpop.f32.mrf.mxu0
    %3589 = vdwg.mxu0
    %3590 = vmatpush.bf16.msra.mxu0 %v3476
    %3591 = vmatpush.bf16.msra.mxu0 %v3474
    %3592 = vmatpush.bf16.msra.mxu0 %v3472
    %3593 = vmatpush.bf16.msra.mxu0 %v3470
    %3594 = vmatpush.bf16.msra.mxu0 %v3468
    %3595 = vmatpush.bf16.msra.mxu0 %v3466
    %3596 = vmatpush.bf16.msra.mxu0 %v3464
    %3597 = vmatpush.bf16.msra.mxu0 %v3462
    %3598 = vmatmul.bf16.gmra.mxu0 %v3230
    %v3599 = vpop.f32.mrf.mxu0
    %v3600 = vadd.f32 %v3587, %v3599
    %v3601 = vpop.f32.mrf.mxu0
    %3602 = vdwg.mxu0
    %v3603 = vmax.f32 %v3561, 0.0
    %v3604 = vmax.f32 %v3600, 0.0
    %v3605 = vpack.c.bf16 %v3603, %v3603
    %v3606 = vpack.c.bf16 %v3604, %v3604
    %v3607 = vld [vmem:[#allocation11] sm:$0xf]
    %v3608 = vld [vmem:[#allocation11 + $0x4] sm:$0xf]
    %v3609 = vld [vmem:[#allocation11 + $0x8] sm:$0xf]
    %v3610 = vld [vmem:[#allocation11 + $0xc] sm:$0xf]
    %v3611 = vld [vmem:[#allocation11 + $0x10] sm:$0xf]
    %v3612 = vld [vmem:[#allocation11 + $0x14] sm:$0xf]
    %v3613 = vld [vmem:[#allocation11 + $0x18] sm:$0xf]
    %v3614 = vld [vmem:[#allocation11 + $0x1c] sm:$0xf]
    %v3615 = vld [vmem:[#allocation11 + $0x20] sm:$0xf]
    %v3616 = vld [vmem:[#allocation11 + $0x24] sm:$0xf]
    %v3617 = vld [vmem:[#allocation11 + $0x28] sm:$0xf]
    %v3618 = vld [vmem:[#allocation11 + $0x2c] sm:$0xf]
    %v3619 = vld [vmem:[#allocation11 + $0x30] sm:$0xf]
    %v3620 = vld [vmem:[#allocation11 + $0x34] sm:$0xf]
    %v3621 = vld [vmem:[#allocation11 + $0x38] sm:$0xf]
    %v3622 = vld [vmem:[#allocation11 + $0x3c] sm:$0xf]
    %v3623 = vld [vmem:[#allocation11 + $0x40] sm:$0xf]
    %v3624 = vld [vmem:[#allocation11 + $0x44] sm:$0xf]
    %v3625 = vld [vmem:[#allocation11 + $0x48] sm:$0xf]
    %v3626 = vld [vmem:[#allocation11 + $0x4c] sm:$0xf]
    %v3627 = vld [vmem:[#allocation11 + $0x50] sm:$0xf]
    %v3628 = vld [vmem:[#allocation11 + $0x54] sm:$0xf]
    %v3629 = vld [vmem:[#allocation11 + $0x58] sm:$0xf]
    %v3630 = vld [vmem:[#allocation11 + $0x5c] sm:$0xf]
    %v3631 = vld [vmem:[#allocation11 + $0x60] sm:$0xf]
    %v3632 = vld [vmem:[#allocation11 + $0x64] sm:$0xf]
    %v3633 = vld [vmem:[#allocation11 + $0x68] sm:$0xf]
    %v3634 = vld [vmem:[#allocation11 + $0x6c] sm:$0xf]
    %v3635 = vld [vmem:[#allocation11 + $0x70] sm:$0xf]
    %v3636 = vld [vmem:[#allocation11 + $0x74] sm:$0xf]
    %v3637 = vld [vmem:[#allocation11 + $0x78] sm:$0xf]
    %v3638 = vld [vmem:[#allocation11 + $0x7c] sm:$0xf]
    %v3639 = vld [vmem:[%s8] sm:$0x1]
    %v3641 = vperm.slane %v3639, 0
    %v3675 = vunpack.c.l.b16 %v3607
    %v3676 = vunpack.c.l.b16 %v3608
    %v3677 = vunpack.c.l.b16 %v3609
    %v3678 = vunpack.c.l.b16 %v3610
    %v3679 = vunpack.c.l.b16 %v3611
    %v3680 = vunpack.c.l.b16 %v3612
    %v3681 = vunpack.c.l.b16 %v3613
    %v3682 = vunpack.c.l.b16 %v3614
    %v3683 = vunpack.c.l.b16 %v3615
    %v3684 = vunpack.c.l.b16 %v3616
    %v3685 = vunpack.c.l.b16 %v3617
    %v3686 = vunpack.c.l.b16 %v3618
    %v3687 = vunpack.c.l.b16 %v3619
    %v3688 = vunpack.c.l.b16 %v3620
    %v3689 = vunpack.c.l.b16 %v3621
    %v3690 = vunpack.c.l.b16 %v3622
    %v3691 = vunpack.c.l.b16 %v3623
    %v3692 = vunpack.c.l.b16 %v3624
    %v3693 = vunpack.c.l.b16 %v3625
    %v3694 = vunpack.c.l.b16 %v3626
    %v3695 = vunpack.c.l.b16 %v3627
    %v3696 = vunpack.c.l.b16 %v3628
    %v3697 = vunpack.c.l.b16 %v3629
    %v3698 = vunpack.c.l.b16 %v3630
    %v3699 = vunpack.c.l.b16 %v3631
    %v3700 = vunpack.c.l.b16 %v3632
    %v3701 = vunpack.c.l.b16 %v3633
    %v3702 = vunpack.c.l.b16 %v3634
    %v3703 = vunpack.c.l.b16 %v3635
    %v3704 = vunpack.c.l.b16 %v3636
    %v3705 = vunpack.c.l.b16 %v3637
    %v3706 = vunpack.c.l.b16 %v3638
    %v3707 = vpack.c.b16 %v3676, %v3675
    %v3708 = vpack.c.b16 %v3678, %v3677
    %v3709 = vpack.c.b16 %v3680, %v3679
    %v3710 = vpack.c.b16 %v3682, %v3681
    %v3711 = vpack.c.b16 %v3684, %v3683
    %v3712 = vpack.c.b16 %v3686, %v3685
    %v3713 = vpack.c.b16 %v3688, %v3687
    %v3714 = vpack.c.b16 %v3690, %v3689
    %v3715 = vpack.c.b16 %v3692, %v3691
    %v3716 = vpack.c.b16 %v3694, %v3693
    %v3717 = vpack.c.b16 %v3696, %v3695
    %v3718 = vpack.c.b16 %v3698, %v3697
    %v3719 = vpack.c.b16 %v3700, %v3699
    %v3720 = vpack.c.b16 %v3702, %v3701
    %v3721 = vpack.c.b16 %v3704, %v3703
    %v3722 = vpack.c.b16 %v3706, %v3705
    %3739 = vmatpush.bf16.msra.mxu0 %v3714
    %3740 = vmatpush.bf16.msra.mxu0 %v3713
    %3741 = vmatpush.bf16.msra.mxu0 %v3712
    %3742 = vmatpush.bf16.msra.mxu0 %v3711
    %3743 = vmatpush.bf16.msra.mxu0 %v3710
    %3744 = vmatpush.bf16.msra.mxu0 %v3709
    %3745 = vmatpush.bf16.msra.mxu0 %v3708
    %3746 = vmatpush.bf16.msra.mxu0 %v3707
    %3747 = vmatmul.bf16.gmra.mxu0 %v3605
    %v3748 = vpop.f32.mrf.mxu0
    %v3749 = vadd.f32 %v3641, %v3748
    %v3750 = vpop.f32.mrf.mxu0
    %3751 = vdwg.mxu0
    %3752 = vmatpush.bf16.msra.mxu0 %v3722
    %3753 = vmatpush.bf16.msra.mxu0 %v3721
    %3754 = vmatpush.bf16.msra.mxu0 %v3720
    %3755 = vmatpush.bf16.msra.mxu0 %v3719
    %3756 = vmatpush.bf16.msra.mxu0 %v3718
    %3757 = vmatpush.bf16.msra.mxu0 %v3717
    %3758 = vmatpush.bf16.msra.mxu0 %v3716
    %3759 = vmatpush.bf16.msra.mxu0 %v3715
    %3760 = vmatmul.bf16.gmra.mxu0 %v3606
    %v3761 = vpop.f32.mrf.mxu0
    %v3762 = vadd.f32 %v3749, %v3761
    %v3763 = vpop.f32.mrf.mxu0
    %3764 = vdwg.mxu0
    %v3765 = vmax.f32 %v3762, 0.0
    %v3766 = vpack.c.bf16 %v3765, %v3765
    %v3767 = vld [vmem:[#allocation13] sm:$0xf]
    %v3768 = vld [vmem:[#allocation13 + $0x4] sm:$0xf]
    %v3769 = vld [vmem:[#allocation13 + $0x8] sm:$0xf]
    %v3770 = vld [vmem:[#allocation13 + $0xc] sm:$0xf]
    %v3771 = vld [vmem:[#allocation13 + $0x10] sm:$0xf]
    %v3772 = vld [vmem:[#allocation13 + $0x14] sm:$0xf]
    %v3773 = vld [vmem:[#allocation13 + $0x18] sm:$0xf]
    %v3774 = vld [vmem:[#allocation13 + $0x1c] sm:$0xf]
    %v3775 = vld [vmem:[#allocation13 + $0x20] sm:$0xf]
    %v3776 = vld [vmem:[#allocation13 + $0x24] sm:$0xf]
    %v3777 = vld [vmem:[#allocation13 + $0x28] sm:$0xf]
    %v3778 = vld [vmem:[#allocation13 + $0x2c] sm:$0xf]
    %v3779 = vld [vmem:[#allocation13 + $0x30] sm:$0xf]
    %v3780 = vld [vmem:[#allocation13 + $0x34] sm:$0xf]
    %v3781 = vld [vmem:[#allocation13 + $0x38] sm:$0xf]
    %v3782 = vld [vmem:[#allocation13 + $0x3c] sm:$0xf]
    %v3783 = vld [vmem:[%s10] sm:$0x1]
    %v3785 = vperm.slane %v3783, 0
    %v3803 = vunpack.c.l.b16 %v3767
    %v3804 = vunpack.c.l.b16 %v3768
    %v3805 = vunpack.c.l.b16 %v3769
    %v3806 = vunpack.c.l.b16 %v3770
    %v3807 = vunpack.c.l.b16 %v3771
    %v3808 = vunpack.c.l.b16 %v3772
    %v3809 = vunpack.c.l.b16 %v3773
    %v3810 = vunpack.c.l.b16 %v3774
    %v3811 = vunpack.c.l.b16 %v3775
    %v3812 = vunpack.c.l.b16 %v3776
    %v3813 = vunpack.c.l.b16 %v3777
    %v3814 = vunpack.c.l.b16 %v3778
    %v3815 = vunpack.c.l.b16 %v3779
    %v3816 = vunpack.c.l.b16 %v3780
    %v3817 = vunpack.c.l.b16 %v3781
    %v3818 = vunpack.c.l.b16 %v3782
    %v3819 = vpack.c.b16 %v3804, %v3803
    %v3820 = vpack.c.b16 %v3806, %v3805
    %v3821 = vpack.c.b16 %v3808, %v3807
    %v3822 = vpack.c.b16 %v3810, %v3809
    %v3823 = vpack.c.b16 %v3812, %v3811
    %v3824 = vpack.c.b16 %v3814, %v3813
    %v3825 = vpack.c.b16 %v3816, %v3815
    %v3826 = vpack.c.b16 %v3818, %v3817
    %3835 = vmatpush.bf16.msra.mxu0 %v3826
    %3836 = vmatpush.bf16.msra.mxu0 %v3825
    %3837 = vmatpush.bf16.msra.mxu0 %v3824
    %3838 = vmatpush.bf16.msra.mxu0 %v3823
    %3839 = vmatpush.bf16.msra.mxu0 %v3822
    %3840 = vmatpush.bf16.msra.mxu0 %v3821
    %3841 = vmatpush.bf16.msra.mxu0 %v3820
    %3842 = vmatpush.bf16.msra.mxu0 %v3819
    %3843 = vmatmul.bf16.gmra.mxu0 %v3766
    %v3844 = vpop.f32.mrf.mxu0
    %v3845 = vadd.f32 %v3785, %v3844
    %v3846 = vpop.f32.mrf.mxu0
    %3847 = vdwg.mxu0
    %v3848 = vpack.c.bf16 %v3845, %v3845
    %3849 = vst [vmem:[#allocation14] sm:$0xf] %v3848
    // Predicated region
    $region74: #{tpu_custom_call.1} parent=1 // pred_check
      _
    $region75: #{tpu_custom_call.1} parent=1 // pred_check_branch
      %3851 = sbr.rel (0) target = $region77
    $region76: #{tpu_custom_call.1} parent=1 // pred_region
      %3853 = vsyncadd [#allocation4], 0
      %s3855 = sshll.u32 [#allocation14], 4
      %s3856 = int_to_ptr.vmem [resolvable:$true] %s3855
      %s3857 = sshll.u32 %s11, 4
      %s3858 = int_to_ptr.hbm [resolvable:$true] %s3857
      %3860 = dma.vmem_to_hbm [thread:$0]  %s3856, 64, %s3858, [#allocation4]
    $region77: #{tpu_custom_call.1} parent=1 // pred_fallthru
      _
    // Predicated region
    $region78: #{tpu_custom_call.1} parent=1 // pred_check
      _
    $region79: #{tpu_custom_call.1} parent=1 // pred_check_branch
      %3862 = sbr.rel (0) target = $region81
    $region80: #{tpu_custom_call.1} parent=1 // pred_region
      %3864 = dma.done [#allocation4], 64
    $region81: #{tpu_custom_call.1} parent=1 // pred_fallthru
      _
    %3865 = vsyncpa [#allocation3], 1
    %3866 = vsyncpa [#allocation6], 1
    %3867 = vsyncpa [#allocation9], 1
    %3868 = vsyncpa [#allocation12], 1
    %3869 = vsyncpa [#allocation4], 1

</llo_original>
